<compile_context>
chip_gen: v6e
topology: v6e:2x2x1
jax: 0.10.0
libtpu: 0.0.40
codegen_flags: <defaults>
</compile_context>

<pallas_src>
import math
import numpy as np
import jax
import jax.numpy as jnp
from jax import lax
from jax.experimental import pallas as pl
from jax.experimental.pallas import tpu as pltpu

EPS = 1e-10

# ----------------------------- small config -----------------------------
B = 2
SR = 16000
N_FFT = 64
HOP = 32
N_MELS = 16                      # backbone.F
N_FREQ = N_FFT // 2 + 1          # 33
WAV_LEN = 288
N_FRAMES = 1 + WAV_LEN // HOP    # 10 (center=True reflect padding)
C_BACKBONE = 4                   # backbone.num_channels
D_MODEL = 32                     # model_args.args.d_model
N_HEAD = 2
D_FF = 64
NUM_CLASSES = 5                  # model_args.args.num_classes
T_TGT = 4
L_SRC = N_FRAMES                 # encoder sequence length
L_TGT = T_TGT + 1                # SOS + targets
BT = B * L_SRC                   # 20  (batch folded onto sublanes)
BQ = B * L_TGT                   # 10
CF = C_BACKBONE * N_MELS         # 64  (flattened c*F+f channel dim)
DH = D_MODEL // N_HEAD
NEG = -1e9

# ----------------------------- slab layouts -----------------------------
LANE = 128


def _layout(entries):
    offs, cur = {}, 0
    for name, cols in entries:
        offs[name] = cur
        cur += ((cols + LANE - 1) // LANE) * LANE
    return offs, cur


# matrices with 32 rows (D_MODEL) -> one (32, W32_COLS) slab
W32_ENTRIES = [
    ("enc_wqkv", 3 * D_MODEL), ("enc_wo", D_MODEL), ("enc_w1", D_FF),
    ("dec_wqkv", 3 * D_MODEL), ("dec_wo", D_MODEL),
    ("c_wq", D_MODEL), ("c_wkv", 2 * D_MODEL), ("c_wo", D_MODEL),
    ("dec_w1", D_FF), ("cls_w", NUM_CLASSES),
]
W32_OFF, W32_COLS = _layout(W32_ENTRIES)

# matrices with 64 rows (N_FFT / C*F / D_FF) -> one (64, W64_COLS) slab
W64_ENTRIES = [
    ("dft", 2 * N_FREQ), ("w1d", D_MODEL), ("enc_w2", D_MODEL), ("dec_w2", D_MODEL),
]
W64_OFF, W64_COLS = _layout(W64_ENTRIES)

# all (1, N) biases / LayerNorm params -> one (1, B_COLS) slab
B_ENTRIES = [
    ("enc_bqkv", 3 * D_MODEL), ("enc_bo", D_MODEL), ("enc_b1", D_FF), ("enc_b2", D_MODEL),
    ("enc_ln1_g", D_MODEL), ("enc_ln1_b", D_MODEL), ("enc_ln2_g", D_MODEL), ("enc_ln2_b", D_MODEL),
    ("encn_g", D_MODEL), ("encn_b", D_MODEL),
    ("dec_bqkv", 3 * D_MODEL), ("dec_bo", D_MODEL),
    ("c_bq", D_MODEL), ("c_bkv", 2 * D_MODEL), ("c_bo", D_MODEL),
    ("dec_b1", D_FF), ("dec_b2", D_MODEL),
    ("dec_ln1_g", D_MODEL), ("dec_ln1_b", D_MODEL), ("dec_ln2_g", D_MODEL), ("dec_ln2_b", D_MODEL),
    ("dec_ln3_g", D_MODEL), ("dec_ln3_b", D_MODEL),
    ("decn_g", D_MODEL), ("decn_b", D_MODEL),
    ("cls_b", NUM_CLASSES), ("conv2d_b", CF),
]
B_OFF, B_COLS = _layout(B_ENTRIES)

# misc constants (various row counts, <= 66 rows) -> one (66, M_COLS) slab
M_ROWS = 2 * N_FREQ  # 66
M_ENTRIES = [
    ("mel_fb2", N_MELS),               # (66, 16)   [fb; fb] for |re|^2+|im|^2 fold
    ("m0", CF), ("m1", CF), ("m2", CF),  # (16, 64)   banded freq-conv matrices
    ("a0", BT), ("a2", BT),            # (20, 20)   time-shift matrices
    ("bias_pos", D_MODEL),             # (20, 32)   conv1d bias + sine pos, tiled over batch
    ("qembed", D_MODEL),               # (6, 32)    query embedding table
    ("enc_mask", BT),                  # (20, 20)   block-diagonal batch mask
    ("dec_mask", BQ),                  # (10, 10)   causal + block-diagonal
    ("cross_mask", BT),                # (10, 20)   block-diagonal batch mask
]
M_OFF, M_COLS = _layout(M_ENTRIES)


# ============================ the fused kernel ============================

def _fused_kernel(frames_ref, ids_ref, w32_ref, w64_ref, b_ref, m_ref,
                  spec_ref, bf_ref, logits_ref):
    f32 = jnp.float32

    def w32(name, n):
        o = W32_OFF[name]
        return w32_ref[:, o:o + n]

    def w64(name, n):
        o = W64_OFF[name]
        return w64_ref[:, o:o + n]

    def bias(name, n):
        o = B_OFF[name]
        return b_ref[:, o:o + n]

    def misc(name, rows, n):
        o = M_OFF[name]
        return m_ref[0:rows, o:o + n]

    # ---------------- audio front-end (both batch items stacked) ----------------
    frames = frames_ref[...]                                          # (BT, 64)
    spec_ri = jnp.dot(frames, w64("dft", 2 * N_FREQ),
                      preferred_element_type=f32)                     # (BT, 66) = [re|im]
    # power->mel folded into one matmul: (re^2+im^2)@fb == (spec_ri^2)@[fb;fb]
    mel = jnp.dot(spec_ri * spec_ri, misc("mel_fb2", 2 * N_FREQ, N_MELS),
                  preferred_element_type=f32)                         # (BT, 16)
    mel_log = jnp.log(mel + EPS)
    spec_ref[...] = mel_log                                           # single dense store

    # 3x3 conv (1->C) + ReLU as banded MXU matmuls.
    #   freq axis: P_ky = mel_log @ M'_ky        (zero-pad in freq folded into M')
    #   time axis: conv = P_1 + A_0 @ P_0 + A_2 @ P_2   (zero-pad + batch isolation in A)
    p0 = jnp.dot(mel_log, misc("m0", N_MELS, CF), preferred_element_type=f32)
    p1 = jnp.dot(mel_log, misc("m1", N_MELS, CF), preferred_element_type=f32)
    p2 = jnp.dot(mel_log, misc("m2", N_MELS, CF), preferred_element_type=f32)
    conv = p1 + jnp.dot(misc("a0", BT, BT), p0, preferred_element_type=f32)
    conv = conv + jnp.dot(misc("a2", BT, BT), p2, preferred_element_type=f32)
    conv_relu = jnp.maximum(conv + bias("conv2d_b", CF), 0.0)          # (BT, CF)
    bf_ref[...] = conv_relu                                            # single dense store

    # transpose(-1,-2).flatten(1,2) + 1x1 Conv1d + positional embedding
    src = jnp.dot(conv_relu, w64("w1d", D_MODEL), preferred_element_type=f32)
    src = src + misc("bias_pos", BT, D_MODEL)                          # (BT, D)

    # target embedding lookup as one-hot matmul (SOS token = NUM_CLASSES)
    ids = ids_ref[...]                                                 # (BQ, 1) int32
    cls_iota = lax.broadcasted_iota(jnp.int32, (BQ, NUM_CLASSES + 1), 1)
    onehot = (cls_iota == ids).astype(f32)                             # (BQ, 6)
    tgt = jnp.dot(onehot, misc("qembed", NUM_CLASSES + 1, D_MODEL),
                  preferred_element_type=f32)                          # (BQ, D)

    # ---------------- transformer (post-norm, 1 enc + 1 dec layer) ----------------
    scale = 1.0 / math.sqrt(DH)

    def layer_norm(x, gname, bname):
        mu = jnp.mean(x, axis=-1, keepdims=True)
        xc = x - mu
        var = jnp.mean(xc * xc, axis=-1, keepdims=True)
        return xc * lax.rsqrt(var + 1e-5) * bias(gname, D_MODEL) + bias(bname, D_MODEL)

    def attention(q, k, v, mask, wo, bo):
        # Both batch items in one score/context matmul per head; cross-batch
        # (and causal) interactions killed by the additive block-diagonal mask.
        outs = []
        for h in range(N_HEAD):
            qh = q[:, h * DH:(h + 1) * DH] * scale
            kh = k[:, h * DH:(h + 1) * DH]
            vh = v[:, h * DH:(h + 1) * DH]
            s = lax.dot_general(qh, kh, (((1,), (1,)), ((), ())),
                                preferred_element_type=f32) + mask
            s = s - jnp.max(s, axis=-1, keepdims=True)
            p = jnp.exp(s)
            p = p * pl.reciprocal(jnp.sum(p, axis=-1, keepdims=True), approx=True)
            outs.append(jnp.dot(p, vh, preferred_element_type=f32))
        o = jnp.concatenate(outs, axis=-1)                             # (Lq, D)
        return jnp.dot(o, wo, preferred_element_type=f32) + bo         # merged head proj

    def ffn(x, w1name, b1name, w2name, b2name):
        h = jnp.dot(x, w32(w1name, D_FF), preferred_element_type=f32) + bias(b1name, D_FF)
        h = jnp.maximum(h, 0.0)
        return jnp.dot(h, w64(w2name, D_MODEL), preferred_element_type=f32) + bias(b2name, D_MODEL)

    enc_mask = misc("enc_mask", BT, BT)
    dec_mask = misc("dec_mask", BQ, BQ)
    cross_mask = misc("cross_mask", BQ, BT)

    # ----- encoder layer + final encoder norm -----
    x = src
    qkv = jnp.dot(x, w32("enc_wqkv", 3 * D_MODEL),
                  preferred_element_type=f32) + bias("enc_bqkv", 3 * D_MODEL)
    sa = attention(qkv[:, 0:D_MODEL], qkv[:, D_MODEL:2 * D_MODEL], qkv[:, 2 * D_MODEL:3 * D_MODEL],
                   enc_mask, w32("enc_wo", D_MODEL), bias("enc_bo", D_MODEL))
    x = layer_norm(x + sa, "enc_ln1_g", "enc_ln1_b")
    x = layer_norm(x + ffn(x, "enc_w1", "enc_b1", "enc_w2", "enc_b2"), "enc_ln2_g", "enc_ln2_b")
    mem = layer_norm(x, "encn_g", "encn_b")                            # (BT, D)

    # ----- decoder layer + final decoder norm -----
    y = tgt
    qkv = jnp.dot(y, w32("dec_wqkv", 3 * D_MODEL),
                  preferred_element_type=f32) + bias("dec_bqkv", 3 * D_MODEL)
    sa = attention(qkv[:, 0:D_MODEL], qkv[:, D_MODEL:2 * D_MODEL], qkv[:, 2 * D_MODEL:3 * D_MODEL],
                   dec_mask, w32("dec_wo", D_MODEL), bias("dec_bo", D_MODEL))
    y = layer_norm(y + sa, "dec_ln1_g", "dec_ln1_b")
    q = jnp.dot(y, w32("c_wq", D_MODEL), preferred_element_type=f32) + bias("c_bq", D_MODEL)
    kv = jnp.dot(mem, w32("c_wkv", 2 * D_MODEL),
                 preferred_element_type=f32) + bias("c_bkv", 2 * D_MODEL)
    ca = attention(q, kv[:, 0:D_MODEL], kv[:, D_MODEL:2 * D_MODEL],
                   cross_mask, w32("c_wo", D_MODEL), bias("c_bo", D_MODEL))
    y = layer_norm(y + ca, "dec_ln2_g", "dec_ln2_b")
    y = layer_norm(y + ffn(y, "dec_w1", "dec_b1", "dec_w2", "dec_b2"), "dec_ln3_g", "dec_ln3_b")
    y = layer_norm(y, "decn_g", "decn_b")                              # (BQ, D)

    # ----- classifier (full L_TGT rows; wrapper drops the last position) -----
    logits_ref[...] = jnp.dot(y, w32("cls_w", NUM_CLASSES),
                              preferred_element_type=f32) + bias("cls_b", NUM_CLASSES)


def fused_forward(frames, tgt_ids, params):
    vmem = pl.BlockSpec(memory_space=pltpu.MemorySpace.VMEM)
    return pl.pallas_call(
        _fused_kernel,
        out_shape=(
            jax.ShapeDtypeStruct((BT, N_MELS), jnp.float32),           # spec (batch-folded)
            jax.ShapeDtypeStruct((BT, CF), jnp.float32),               # backbone feat (c*F+f)
            jax.ShapeDtypeStruct((BQ, NUM_CLASSES), jnp.float32),      # logits (all L_TGT rows)
        ),
        in_specs=[vmem] * 6,
        out_specs=(vmem, vmem, vmem),
    )(frames, tgt_ids, params["w32"], params["w64"], params["bias"], params["misc"])


# ----------------------------- forward pass -----------------------------

def combined_model_forward(waveform, target, params, logit_scaler=None):
    # MelSpectrogram framing (center=True): reflect pad + overlapping frames built
    # with two slices + reshape (no advanced-index gather).
    wpad = jnp.pad(waveform, ((0, 0), (N_FFT // 2, N_FFT // 2)), mode="reflect")
    f0 = wpad[:, :N_FRAMES * HOP].reshape(B, N_FRAMES, HOP)
    f1 = wpad[:, HOP:HOP + N_FRAMES * HOP].reshape(B, N_FRAMES, HOP)
    frames = jnp.concatenate([f0, f1], axis=-1).reshape(BT, N_FFT)

    # SOS token + teacher-forced targets; embedding lookup happens in-kernel.
    # TODO(synk): nn.Dropout2d(target_dropout) on the target embedding is stochastic; identity here.
    sos = jnp.full((B, 1), NUM_CLASSES, dtype=jnp.int32)
    tgt_ids = jnp.concatenate([sos, target.astype(jnp.int32)], axis=-1).reshape(BQ, 1)

    spec_f, bf_f, logits_f = fused_forward(frames, tgt_ids, params)

    spec = spec_f.reshape(B, 1, N_FRAMES, N_MELS)
    backbone_feat = bf_f.reshape(B, N_FRAMES, C_BACKBONE, N_MELS).transpose(0, 2, 1, 3)
    logits = logits_f.reshape(B, L_TGT, NUM_CLASSES)[:, :T_TGT, :]     # output[:, :-1]
    if logit_scaler is not None:
        logits = logits * logit_scaler
    return {"logits": logits, "spec": spec, "backbone_feat": backbone_feat}


# ----------------------------- param building / packing -----------------------------

def sine_pos_embedding(T, d, temperature=10000.0):
    pos = np.arange(T, dtype=np.float32)[:, None]
    i = np.arange(0, d, 2, dtype=np.float32)
    div = np.exp(-np.log(temperature) * i / d)
    pe = np.zeros((T, d), np.float32)
    pe[:, 0::2] = np.sin(pos * div)
    pe[:, 1::2] = np.cos(pos * div)
    return pe


def _pack(entries, offs, total, rows, vals):
    slab = np.zeros((rows, total), np.float32)
    for name, cols in entries:
        v = np.asarray(vals[name], np.float32).reshape(-1, cols)
        slab[:v.shape[0], offs[name]:offs[name] + cols] = v
    return jnp.asarray(slab)


def build_params(key):
    keys = list(jax.random.split(key, 40))
    kit = iter(keys)

    def rnd(shape, scale=0.05):
        return np.asarray(jax.random.normal(next(kit), shape, dtype=jnp.float32)) * scale

    # ---- fixed audio buffers: Hann-folded real-DFT basis, HTK mel filterbank ----
    n = np.arange(N_FFT, dtype=np.float64)
    hann = 0.5 * (1.0 - np.cos(2.0 * np.pi * n / N_FFT))
    k = np.arange(N_FREQ, dtype=np.float64)
    ang = 2.0 * np.pi * np.outer(n, k) / N_FFT
    dft = np.concatenate([hann[:, None] * np.cos(ang),
                          hann[:, None] * (-np.sin(ang))], axis=1)     # (64, 66)

    def hz2mel(f): return 2595.0 * np.log10(1.0 + f / 700.0)

    def mel2hz(m): return 700.0 * (10.0 ** (m / 2595.0) - 1.0)

    all_freqs = np.linspace(0.0, SR / 2.0, N_FREQ)
    f_pts = mel2hz(np.linspace(hz2mel(0.0), hz2mel(SR / 2.0), N_MELS + 2))
    fb = np.zeros((N_FREQ, N_MELS))
    for m in range(N_MELS):
        lo, ce, hi = f_pts[m], f_pts[m + 1], f_pts[m + 2]
        up = (all_freqs - lo) / max(ce - lo, 1e-8)
        dn = (hi - all_freqs) / max(hi - ce, 1e-8)
        fb[:, m] = np.clip(np.minimum(up, dn), 0.0, None)
    fb2 = np.concatenate([fb, fb], axis=0)                             # (66, 16)

    # ---- backbone 3x3 conv -> banded matrices ----
    w2d = rnd((C_BACKBONE, 3, 3), 0.2)
    b2d = rnd((C_BACKBONE,), 0.2)
    Mk = np.zeros((3, N_MELS, CF), np.float32)
    for ky in range(3):
        for c in range(C_BACKBONE):
            for f in range(N_MELS):
                for kx in range(3):
                    fp = f + kx - 1
                    if 0 <= fp < N_MELS:
                        Mk[ky, fp, c * N_MELS + f] = w2d[c, ky, kx]
    A0 = np.zeros((BT, BT), np.float32)
    A2 = np.zeros((BT, BT), np.float32)
    for i in range(BT):
        t = i % L_SRC
        if t >= 1:
            A0[i, i - 1] = 1.0
        if t + 1 < L_SRC:
            A2[i, i + 1] = 1.0
    conv2d_b_flat = np.repeat(np.asarray(b2d, np.float32), N_MELS)[None, :]   # (1, CF)

    # ---- 1x1 Conv1d + positional embedding ----
    conv1d_w = rnd((CF, D_MODEL))
    conv1d_b = rnd((1, D_MODEL))
    pos = sine_pos_embedding(N_FRAMES, D_MODEL)
    bias_pos = np.tile(pos, (B, 1)) + conv1d_b                         # (BT, D)

    query_embed = rnd((NUM_CLASSES + 1, D_MODEL), 0.5)

    # ---- attention masks (block-diagonal batch isolation; causal for decoder self-attn) ----
    batch_src = np.repeat(np.arange(B), L_SRC)
    batch_tgt = np.repeat(np.arange(B), L_TGT)
    enc_mask = np.where(batch_src[:, None] == batch_src[None, :], 0.0, NEG).astype(np.float32)
    causal = np.triu(np.full((L_TGT, L_TGT), NEG, np.float32), k=1)
    dec_mask = np.full((BQ, BQ), NEG, np.float32)
    for b in range(B):
        dec_mask[b * L_TGT:(b + 1) * L_TGT, b * L_TGT:(b + 1) * L_TGT] = causal
    cross_mask = np.where(batch_tgt[:, None] == batch_src[None, :], 0.0, NEG).astype(np.float32)

    ones = np.ones((1, D_MODEL), np.float32)
    zeros = np.zeros((1, D_MODEL), np.float32)

    w32_vals = {
        "enc_wqkv": rnd((D_MODEL, 3 * D_MODEL)), "enc_wo": rnd((D_MODEL, D_MODEL)),
        "enc_w1": rnd((D_MODEL, D_FF)),
        "dec_wqkv": rnd((D_MODEL, 3 * D_MODEL)), "dec_wo": rnd((D_MODEL, D_MODEL)),
        "c_wq": rnd((D_MODEL, D_MODEL)), "c_wkv": rnd((D_MODEL, 2 * D_MODEL)),
        "c_wo": rnd((D_MODEL, D_MODEL)),
        "dec_w1": rnd((D_MODEL, D_FF)),
        "cls_w": rnd((D_MODEL, NUM_CLASSES)),
    }
    w64_vals = {
        "dft": dft, "w1d": conv1d_w,
        "enc_w2": rnd((D_FF, D_MODEL)), "dec_w2": rnd((D_FF, D_MODEL)),
    }
    b_vals = {
        "enc_bqkv": rnd((1, 3 * D_MODEL)), "enc_bo": rnd((1, D_MODEL)),
        "enc_b1": rnd((1, D_FF)), "enc_b2": rnd((1, D_MODEL)),
        "enc_ln1_g": ones, "enc_ln1_b": zeros, "enc_ln2_g": ones, "enc_ln2_b": zeros,
        "encn_g": ones, "encn_b": zeros,
        "dec_bqkv": rnd((1, 3 * D_MODEL)), "dec_bo": rnd((1, D_MODEL)),
        "c_bq": rnd((1, D_MODEL)), "c_bkv": rnd((1, 2 * D_MODEL)), "c_bo": rnd((1, D_MODEL)),
        "dec_b1": rnd((1, D_FF)), "dec_b2": rnd((1, D_MODEL)),
        "dec_ln1_g": ones, "dec_ln1_b": zeros, "dec_ln2_g": ones, "dec_ln2_b": zeros,
        "dec_ln3_g": ones, "dec_ln3_b": zeros,
        "decn_g": ones, "decn_b": zeros,
        "cls_b": rnd((1, NUM_CLASSES)),
        "conv2d_b": conv2d_b_flat,
    }
    m_vals = {
        "mel_fb2": fb2,
        "m0": Mk[0], "m1": Mk[1], "m2": Mk[2],
        "a0": A0, "a2": A2,
        "bias_pos": bias_pos,
        "qembed": query_embed,
        "enc_mask": enc_mask, "dec_mask": dec_mask, "cross_mask": cross_mask,
    }

    return {
        "w32": _pack(W32_ENTRIES, W32_OFF, W32_COLS, D_MODEL, w32_vals),
        "w64": _pack(W64_ENTRIES, W64_OFF, W64_COLS, N_FFT, w64_vals),
        "bias": _pack(B_ENTRIES, B_OFF, B_COLS, 1, b_vals),
        "misc": _pack(M_ENTRIES, M_OFF, M_COLS, M_ROWS, m_vals),
    }


if __name__ == "__main__":
    key = jax.random.PRNGKey(0)
    k_wav, k_tgt, k_par = jax.random.split(key, 3)
    waveform = jax.random.normal(k_wav, (B, WAV_LEN), dtype=jnp.float32)
    target = jax.random.randint(k_tgt, (B, T_TGT), 0, NUM_CLASSES, dtype=jnp.int32)
    params = build_params(k_par)

    fwd = jax.jit(combined_model_forward)
    out = fwd(waveform, target, params)
    jax.block_until_ready(out)

    assert out["logits"].shape == (B, T_TGT, NUM_CLASSES)
    assert out["spec"].shape == (B, 1, N_FRAMES, N_MELS)
    assert out["backbone_feat"].shape == (B, C_BACKBONE, N_FRAMES, N_MELS)
    assert bool(jnp.all(jnp.isfinite(out["logits"])))
    assert bool(jnp.all(jnp.isfinite(out["spec"])))
    assert bool(jnp.all(jnp.isfinite(out["backbone_feat"])))
    print("KERNEL_OK")
</pallas_src>

<mosaic_0001>
module attributes {stable_mosaic.version = 11 : i64} {
  func.func @_fused_kernel(%arg0: memref<20x64xf32, #tpu.memory_space<vmem>>, %arg1: memref<10x1xi32, #tpu.memory_space<vmem>>, %arg2: memref<32x1280xf32, #tpu.memory_space<vmem>>, %arg3: memref<64x512xf32, #tpu.memory_space<vmem>>, %arg4: memref<1x3456xf32, #tpu.memory_space<vmem>>, %arg5: memref<66x1408xf32, #tpu.memory_space<vmem>>, %arg6: memref<20x16xf32, #tpu.memory_space<vmem>>, %arg7: memref<20x64xf32, #tpu.memory_space<vmem>>, %arg8: memref<10x5xf32, #tpu.memory_space<vmem>>) attributes {dimension_semantics = [], scalar_prefetch = 0 : i64, scratch_operands = 0 : i64, tpu.core_type = #tpu.core_type<tc>} {
    %c0 = arith.constant 0 : index
    %c0_0 = arith.constant 0 : index
    %0 = vector.load %arg0[%c0, %c0_0] : memref<20x64xf32, #tpu.memory_space<vmem>>, vector<20x64xf32>
    %c0_1 = arith.constant 0 : index
    %c0_2 = arith.constant 0 : index
    %1 = vector.load %arg3[%c0_1, %c0_2] : memref<64x512xf32, #tpu.memory_space<vmem>>, vector<64x66xf32>
    %cst = arith.constant dense<0.000000e+00> : vector<20x66xf32>
    %2 = tpu.matmul %0, %1, %cst {dimension_numbers = #tpu.dot_dimension_numbers<[1], [0], [0], [1], [0, 0, 1, 1], [], []>} : vector<20x64xf32>, vector<64x66xf32>, vector<20x66xf32> -> vector<20x66xf32>
    %3 = arith.mulf %2, %2 : vector<20x66xf32>
    %c0_3 = arith.constant 0 : index
    %c0_4 = arith.constant 0 : index
    %4 = vector.load %arg5[%c0_3, %c0_4] : memref<66x1408xf32, #tpu.memory_space<vmem>>, vector<66x16xf32>
    %cst_5 = arith.constant dense<0.000000e+00> : vector<20x16xf32>
    %5 = tpu.matmul %3, %4, %cst_5 {dimension_numbers = #tpu.dot_dimension_numbers<[1], [0], [0], [1], [0, 0, 1, 1], [], []>} : vector<20x66xf32>, vector<66x16xf32>, vector<20x16xf32> -> vector<20x16xf32>
    %cst_6 = arith.constant 1.000000e-10 : f32
    %6 = vector.broadcast %cst_6 : f32 to vector<20x16xf32>
    %7 = arith.addf %5, %6 : vector<20x16xf32>
    %8 = math.log %7 : vector<20x16xf32>
    %c0_7 = arith.constant 0 : index
    %c0_8 = arith.constant 0 : index
    %9 = vector.load %arg6[%c0_7, %c0_8] : memref<20x16xf32, #tpu.memory_space<vmem>>, vector<20x16xf32>
    tpu.vector_store %arg6[%c0_7, %c0_8], %8 {strides = array<i32>} : memref<20x16xf32, #tpu.memory_space<vmem>>, vector<20x16xf32>,
    %c0_9 = arith.constant 0 : index
    %c128 = arith.constant 128 : index
    %10 = vector.load %arg5[%c0_9, %c128] : memref<66x1408xf32, #tpu.memory_space<vmem>>, vector<16x64xf32>
    %cst_10 = arith.constant dense<0.000000e+00> : vector<20x64xf32>
    %11 = tpu.matmul %8, %10, %cst_10 {dimension_numbers = #tpu.dot_dimension_numbers<[1], [0], [0], [1], [0, 0, 1, 1], [], []>} : vector<20x16xf32>, vector<16x64xf32>, vector<20x64xf32> -> vector<20x64xf32>
    %c0_11 = arith.constant 0 : index
    %c256 = arith.constant 256 : index
    %12 = vector.load %arg5[%c0_11, %c256] : memref<66x1408xf32, #tpu.memory_space<vmem>>, vector<16x64xf32>
    %cst_12 = arith.constant dense<0.000000e+00> : vector<20x64xf32>
    %13 = tpu.matmul %8, %12, %cst_12 {dimension_numbers = #tpu.dot_dimension_numbers<[1], [0], [0], [1], [0, 0, 1, 1], [], []>} : vector<20x16xf32>, vector<16x64xf32>, vector<20x64xf32> -> vector<20x64xf32>
    %c0_13 = arith.constant 0 : index
    %c384 = arith.constant 384 : index
    %14 = vector.load %arg5[%c0_13, %c384] : memref<66x1408xf32, #tpu.memory_space<vmem>>, vector<16x64xf32>
    %cst_14 = arith.constant dense<0.000000e+00> : vector<20x64xf32>
    %15 = tpu.matmul %8, %14, %cst_14 {dimension_numbers = #tpu.dot_dimension_numbers<[1], [0], [0], [1], [0, 0, 1, 1], [], []>} : vector<20x16xf32>, vector<16x64xf32>, vector<20x64xf32> -> vector<20x64xf32>
    %c0_15 = arith.constant 0 : index
    %c512 = arith.constant 512 : index
    %16 = vector.load %arg5[%c0_15, %c512] : memref<66x1408xf32, #tpu.memory_space<vmem>>, vector<20x20xf32>
    %cst_16 = arith.constant dense<0.000000e+00> : vector<20x64xf32>
    %17 = tpu.matmul %16, %11, %cst_16 {dimension_numbers = #tpu.dot_dimension_numbers<[1], [0], [0], [1], [0, 0, 1, 1], [], []>} : vector<20x20xf32>, vector<20x64xf32>, vector<20x64xf32> -> vector<20x64xf32>
    %18 = arith.addf %13, %17 : vector<20x64xf32>
    %c0_17 = arith.constant 0 : index
    %c640 = arith.constant 640 : index
    %19 = vector.load %arg5[%c0_17, %c640] : memref<66x1408xf32, #tpu.memory_space<vmem>>, vector<20x20xf32>
    %cst_18 = arith.constant dense<0.000000e+00> : vector<20x64xf32>
    %20 = tpu.matmul %19, %15, %cst_18 {dimension_numbers = #tpu.dot_dimension_numbers<[1], [0], [0], [1], [0, 0, 1, 1], [], []>} : vector<20x20xf32>, vector<20x64xf32>, vector<20x64xf32> -> vector<20x64xf32>
    %21 = arith.addf %18, %20 : vector<20x64xf32>
    %c0_19 = arith.constant 0 : index
    %c3328 = arith.constant 3328 : index
    %22 = vector.load %arg4[%c0_19, %c3328] : memref<1x3456xf32, #tpu.memory_space<vmem>>, vector<1x64xf32>
    %23 = vector.broadcast %22 : vector<1x64xf32> to vector<20x64xf32>
    %24 = arith.addf %21, %23 : vector<20x64xf32>
    %cst_20 = arith.constant 0.000000e+00 : f32
    %25 = vector.broadcast %cst_20 : f32 to vector<20x64xf32>
    %26 = arith.maximumf %24, %25 : vector<20x64xf32>
    %c0_21 = arith.constant 0 : index
    %c0_22 = arith.constant 0 : index
    %27 = vector.load %arg7[%c0_21, %c0_22] : memref<20x64xf32, #tpu.memory_space<vmem>>, vector<20x64xf32>
    tpu.vector_store %arg7[%c0_21, %c0_22], %26 {strides = array<i32>} : memref<20x64xf32, #tpu.memory_space<vmem>>, vector<20x64xf32>,
    %c0_23 = arith.constant 0 : index
    %c128_24 = arith.constant 128 : index
    %28 = vector.load %arg3[%c0_23, %c128_24] : memref<64x512xf32, #tpu.memory_space<vmem>>, vector<64x32xf32>
    %cst_25 = arith.constant dense<0.000000e+00> : vector<20x32xf32>
    %29 = tpu.matmul %26, %28, %cst_25 {dimension_numbers = #tpu.dot_dimension_numbers<[1], [0], [0], [1], [0, 0, 1, 1], [], []>} : vector<20x64xf32>, vector<64x32xf32>, vector<20x32xf32> -> vector<20x32xf32>
    %c0_26 = arith.constant 0 : index
    %c768 = arith.constant 768 : index
    %30 = vector.load %arg5[%c0_26, %c768] : memref<66x1408xf32, #tpu.memory_space<vmem>>, vector<20x32xf32>
    %31 = arith.addf %29, %30 : vector<20x32xf32>
    %c0_27 = arith.constant 0 : index
    %c0_28 = arith.constant 0 : index
    %32 = vector.load %arg1[%c0_27, %c0_28] : memref<10x1xi32, #tpu.memory_space<vmem>>, vector<10x1xi32>
    %33 = tpu.iota {dimensions = array<i32: 1>} : vector<10x6xi32>
    %34 = vector.broadcast %32 : vector<10x1xi32> to vector<10x6xi32>
    %35 = arith.cmpi eq, %33, %34 : vector<10x6xi32>
    %36 = arith.extui %35 : vector<10x6xi1> to vector<10x6xi32>
    %37 = arith.sitofp %36 : vector<10x6xi32> to vector<10x6xf32>
    %c0_29 = arith.constant 0 : index
    %c896 = arith.constant 896 : index
    %38 = vector.load %arg5[%c0_29, %c896] : memref<66x1408xf32, #tpu.memory_space<vmem>>, vector<6x32xf32>
    %cst_30 = arith.constant dense<0.000000e+00> : vector<10x32xf32>
    %39 = tpu.matmul %37, %38, %cst_30 {dimension_numbers = #tpu.dot_dimension_numbers<[1], [0], [0], [1], [0, 0, 1, 1], [], []>} : vector<10x6xf32>, vector<6x32xf32>, vector<10x32xf32> -> vector<10x32xf32>
    %c0_31 = arith.constant 0 : index
    %c1024 = arith.constant 1024 : index
    %40 = vector.load %arg5[%c0_31, %c1024] : memref<66x1408xf32, #tpu.memory_space<vmem>>, vector<20x20xf32>
    %c0_32 = arith.constant 0 : index
    %c1152 = arith.constant 1152 : index
    %41 = vector.load %arg5[%c0_32, %c1152] : memref<66x1408xf32, #tpu.memory_space<vmem>>, vector<10x10xf32>
    %c0_33 = arith.constant 0 : index
    %c1280 = arith.constant 1280 : index
    %42 = vector.load %arg5[%c0_33, %c1280] : memref<66x1408xf32, #tpu.memory_space<vmem>>, vector<10x20xf32>
    %c0_34 = arith.constant 0 : index
    %c0_35 = arith.constant 0 : index
    %43 = vector.load %arg2[%c0_34, %c0_35] : memref<32x1280xf32, #tpu.memory_space<vmem>>, vector<32x96xf32>
    %cst_36 = arith.constant dense<0.000000e+00> : vector<20x96xf32>
    %44 = tpu.matmul %31, %43, %cst_36 {dimension_numbers = #tpu.dot_dimension_numbers<[1], [0], [0], [1], [0, 0, 1, 1], [], []>} : vector<20x32xf32>, vector<32x96xf32>, vector<20x96xf32> -> vector<20x96xf32>
    %c0_37 = arith.constant 0 : index
    %c0_38 = arith.constant 0 : index
    %45 = vector.load %arg4[%c0_37, %c0_38] : memref<1x3456xf32, #tpu.memory_space<vmem>>, vector<1x96xf32>
    %46 = vector.broadcast %45 : vector<1x96xf32> to vector<20x96xf32>
    %47 = arith.addf %44, %46 : vector<20x96xf32>
    %48 = vector.extract_strided_slice %47 {offsets = [0, 0], sizes = [20, 32], strides = [1, 1]} : vector<20x96xf32> to vector<20x32xf32>
    %49 = vector.extract_strided_slice %47 {offsets = [0, 32], sizes = [20, 32], strides = [1, 1]} : vector<20x96xf32> to vector<20x32xf32>
    %50 = vector.extract_strided_slice %47 {offsets = [0, 64], sizes = [20, 32], strides = [1, 1]} : vector<20x96xf32> to vector<20x32xf32>
    %c0_39 = arith.constant 0 : index
    %c128_40 = arith.constant 128 : index
    %51 = vector.load %arg2[%c0_39, %c128_40] : memref<32x1280xf32, #tpu.memory_space<vmem>>, vector<32x32xf32>
    %c0_41 = arith.constant 0 : index
    %c128_42 = arith.constant 128 : index
    %52 = vector.load %arg4[%c0_41, %c128_42] : memref<1x3456xf32, #tpu.memory_space<vmem>>, vector<1x32xf32>
    %53 = vector.extract_strided_slice %48 {offsets = [0, 0], sizes = [20, 16], strides = [1, 1]} : vector<20x32xf32> to vector<20x16xf32>
    %cst_43 = arith.constant 2.500000e-01 : f32
    %54 = vector.broadcast %cst_43 : f32 to vector<20x16xf32>
    %55 = arith.mulf %53, %54 : vector<20x16xf32>
    %56 = vector.extract_strided_slice %49 {offsets = [0, 0], sizes = [20, 16], strides = [1, 1]} : vector<20x32xf32> to vector<20x16xf32>
    %57 = vector.extract_strided_slice %50 {offsets = [0, 0], sizes = [20, 16], strides = [1, 1]} : vector<20x32xf32> to vector<20x16xf32>
    %cst_44 = arith.constant dense<0.000000e+00> : vector<20x20xf32>
    %58 = tpu.matmul %55, %56, %cst_44 {dimension_numbers = #tpu.dot_dimension_numbers<[1], [1], [0], [0], [0, 0, 1, 0], [], []>} : vector<20x16xf32>, vector<20x16xf32>, vector<20x20xf32> -> vector<20x20xf32>
    %59 = arith.addf %58, %40 : vector<20x20xf32>
    %cst_45 = arith.constant dense<0xFF800000> : vector<20xf32>
    %60 = vector.multi_reduction <maximumf>, %59, %cst_45 [1] : vector<20x20xf32> to vector<20xf32>
    %61 = vector.shape_cast %60 : vector<20xf32> to vector<20x1xf32>
    %62 = vector.broadcast %61 : vector<20x1xf32> to vector<20x20xf32>
    %63 = arith.subf %59, %62 : vector<20x20xf32>
    %64 = math.exp %63 : vector<20x20xf32>
    %cst_46 = arith.constant dense<0.000000e+00> : vector<20xf32>
    %65 = vector.multi_reduction <add>, %64, %cst_46 [1] : vector<20x20xf32> to vector<20xf32>
    %66 = vector.shape_cast %65 : vector<20xf32> to vector<20x1xf32>
    %67 = tpu.reciprocal %66 {approx = true} : vector<20x1xf32> -> vector<20x1xf32>
    %68 = vector.broadcast %67 : vector<20x1xf32> to vector<20x20xf32>
    %69 = arith.mulf %64, %68 : vector<20x20xf32>
    %cst_47 = arith.constant dense<0.000000e+00> : vector<20x16xf32>
    %70 = tpu.matmul %69, %57, %cst_47 {dimension_numbers = #tpu.dot_dimension_numbers<[1], [0], [0], [1], [0, 0, 1, 1], [], []>} : vector<20x20xf32>, vector<20x16xf32>, vector<20x16xf32> -> vector<20x16xf32>
    %71 = vector.extract_strided_slice %48 {offsets = [0, 16], sizes = [20, 16], strides = [1, 1]} : vector<20x32xf32> to vector<20x16xf32>
    %cst_48 = arith.constant 2.500000e-01 : f32
    %72 = vector.broadcast %cst_48 : f32 to vector<20x16xf32>
    %73 = arith.mulf %71, %72 : vector<20x16xf32>
    %74 = vector.extract_strided_slice %49 {offsets = [0, 16], sizes = [20, 16], strides = [1, 1]} : vector<20x32xf32> to vector<20x16xf32>
    %75 = vector.extract_strided_slice %50 {offsets = [0, 16], sizes = [20, 16], strides = [1, 1]} : vector<20x32xf32> to vector<20x16xf32>
    %cst_49 = arith.constant dense<0.000000e+00> : vector<20x20xf32>
    %76 = tpu.matmul %73, %74, %cst_49 {dimension_numbers = #tpu.dot_dimension_numbers<[1], [1], [0], [0], [0, 0, 1, 0], [], []>} : vector<20x16xf32>, vector<20x16xf32>, vector<20x20xf32> -> vector<20x20xf32>
    %77 = arith.addf %76, %40 : vector<20x20xf32>
    %cst_50 = arith.constant dense<0xFF800000> : vector<20xf32>
    %78 = vector.multi_reduction <maximumf>, %77, %cst_50 [1] : vector<20x20xf32> to vector<20xf32>
    %79 = vector.shape_cast %78 : vector<20xf32> to vector<20x1xf32>
    %80 = vector.broadcast %79 : vector<20x1xf32> to vector<20x20xf32>
    %81 = arith.subf %77, %80 : vector<20x20xf32>
    %82 = math.exp %81 : vector<20x20xf32>
    %cst_51 = arith.constant dense<0.000000e+00> : vector<20xf32>
    %83 = vector.multi_reduction <add>, %82, %cst_51 [1] : vector<20x20xf32> to vector<20xf32>
    %84 = vector.shape_cast %83 : vector<20xf32> to vector<20x1xf32>
    %85 = tpu.reciprocal %84 {approx = true} : vector<20x1xf32> -> vector<20x1xf32>
    %86 = vector.broadcast %85 : vector<20x1xf32> to vector<20x20xf32>
    %87 = arith.mulf %82, %86 : vector<20x20xf32>
    %cst_52 = arith.constant dense<0.000000e+00> : vector<20x16xf32>
    %88 = tpu.matmul %87, %75, %cst_52 {dimension_numbers = #tpu.dot_dimension_numbers<[1], [0], [0], [1], [0, 0, 1, 1], [], []>} : vector<20x20xf32>, vector<20x16xf32>, vector<20x16xf32> -> vector<20x16xf32>
    %89 = tpu.concatenate %70, %88 in 1 : vector<20x16xf32>, vector<20x16xf32> -> vector<20x32xf32>
    %cst_53 = arith.constant dense<0.000000e+00> : vector<20x32xf32>
    %90 = tpu.matmul %89, %51, %cst_53 {dimension_numbers = #tpu.dot_dimension_numbers<[1], [0], [0], [1], [0, 0, 1, 1], [], []>} : vector<20x32xf32>, vector<32x32xf32>, vector<20x32xf32> -> vector<20x32xf32>
    %91 = vector.broadcast %52 : vector<1x32xf32> to vector<20x32xf32>
    %92 = arith.addf %90, %91 : vector<20x32xf32>
    %93 = arith.addf %31, %92 : vector<20x32xf32>
    %cst_54 = arith.constant dense<0.000000e+00> : vector<20xf32>
    %94 = vector.multi_reduction <add>, %93, %cst_54 [1] : vector<20x32xf32> to vector<20xf32>
    %95 = vector.shape_cast %94 : vector<20xf32> to vector<20x1xf32>
    %cst_55 = arith.constant 3.200000e+01 : f32
    %96 = vector.broadcast %cst_55 : f32 to vector<20x1xf32>
    %97 = arith.divf %95, %96 : vector<20x1xf32>
    %98 = vector.broadcast %97 : vector<20x1xf32> to vector<20x32xf32>
    %99 = arith.subf %93, %98 : vector<20x32xf32>
    %100 = arith.mulf %99, %99 : vector<20x32xf32>
    %cst_56 = arith.constant dense<0.000000e+00> : vector<20xf32>
    %101 = vector.multi_reduction <add>, %100, %cst_56 [1] : vector<20x32xf32> to vector<20xf32>
    %102 = vector.shape_cast %101 : vector<20xf32> to vector<20x1xf32>
    %cst_57 = arith.constant 3.200000e+01 : f32
    %103 = vector.broadcast %cst_57 : f32 to vector<20x1xf32>
    %104 = arith.divf %102, %103 : vector<20x1xf32>
    %cst_58 = arith.constant 9.99999974E-6 : f32
    %105 = vector.broadcast %cst_58 : f32 to vector<20x1xf32>
    %106 = arith.addf %104, %105 : vector<20x1xf32>
    %107 = math.rsqrt %106 : vector<20x1xf32>
    %108 = vector.broadcast %107 : vector<20x1xf32> to vector<20x32xf32>
    %109 = arith.mulf %99, %108 : vector<20x32xf32>
    %c0_59 = arith.constant 0 : index
    %c512_60 = arith.constant 512 : index
    %110 = vector.load %arg4[%c0_59, %c512_60] : memref<1x3456xf32, #tpu.memory_space<vmem>>, vector<1x32xf32>
    %111 = vector.broadcast %110 : vector<1x32xf32> to vector<20x32xf32>
    %112 = arith.mulf %109, %111 : vector<20x32xf32>
    %c0_61 = arith.constant 0 : index
    %c640_62 = arith.constant 640 : index
    %113 = vector.load %arg4[%c0_61, %c640_62] : memref<1x3456xf32, #tpu.memory_space<vmem>>, vector<1x32xf32>
    %114 = vector.broadcast %113 : vector<1x32xf32> to vector<20x32xf32>
    %115 = arith.addf %112, %114 : vector<20x32xf32>
    %c0_63 = arith.constant 0 : index
    %c256_64 = arith.constant 256 : index
    %116 = vector.load %arg2[%c0_63, %c256_64] : memref<32x1280xf32, #tpu.memory_space<vmem>>, vector<32x64xf32>
    %cst_65 = arith.constant dense<0.000000e+00> : vector<20x64xf32>
    %117 = tpu.matmul %115, %116, %cst_65 {dimension_numbers = #tpu.dot_dimension_numbers<[1], [0], [0], [1], [0, 0, 1, 1], [], []>} : vector<20x32xf32>, vector<32x64xf32>, vector<20x64xf32> -> vector<20x64xf32>
    %c0_66 = arith.constant 0 : index
    %c256_67 = arith.constant 256 : index
    %118 = vector.load %arg4[%c0_66, %c256_67] : memref<1x3456xf32, #tpu.memory_space<vmem>>, vector<1x64xf32>
    %119 = vector.broadcast %118 : vector<1x64xf32> to vector<20x64xf32>
    %120 = arith.addf %117, %119 : vector<20x64xf32>
    %cst_68 = arith.constant 0.000000e+00 : f32
    %121 = vector.broadcast %cst_68 : f32 to vector<20x64xf32>
    %122 = arith.maximumf %120, %121 : vector<20x64xf32>
    %c0_69 = arith.constant 0 : index
    %c256_70 = arith.constant 256 : index
    %123 = vector.load %arg3[%c0_69, %c256_70] : memref<64x512xf32, #tpu.memory_space<vmem>>, vector<64x32xf32>
    %cst_71 = arith.constant dense<0.000000e+00> : vector<20x32xf32>
    %124 = tpu.matmul %122, %123, %cst_71 {dimension_numbers = #tpu.dot_dimension_numbers<[1], [0], [0], [1], [0, 0, 1, 1], [], []>} : vector<20x64xf32>, vector<64x32xf32>, vector<20x32xf32> -> vector<20x32xf32>
    %c0_72 = arith.constant 0 : index
    %c384_73 = arith.constant 384 : index
    %125 = vector.load %arg4[%c0_72, %c384_73] : memref<1x3456xf32, #tpu.memory_space<vmem>>, vector<1x32xf32>
    %126 = vector.broadcast %125 : vector<1x32xf32> to vector<20x32xf32>
    %127 = arith.addf %124, %126 : vector<20x32xf32>
    %128 = arith.addf %115, %127 : vector<20x32xf32>
    %cst_74 = arith.constant dense<0.000000e+00> : vector<20xf32>
    %129 = vector.multi_reduction <add>, %128, %cst_74 [1] : vector<20x32xf32> to vector<20xf32>
    %130 = vector.shape_cast %129 : vector<20xf32> to vector<20x1xf32>
    %cst_75 = arith.constant 3.200000e+01 : f32
    %131 = vector.broadcast %cst_75 : f32 to vector<20x1xf32>
    %132 = arith.divf %130, %131 : vector<20x1xf32>
    %133 = vector.broadcast %132 : vector<20x1xf32> to vector<20x32xf32>
    %134 = arith.subf %128, %133 : vector<20x32xf32>
    %135 = arith.mulf %134, %134 : vector<20x32xf32>
    %cst_76 = arith.constant dense<0.000000e+00> : vector<20xf32>
    %136 = vector.multi_reduction <add>, %135, %cst_76 [1] : vector<20x32xf32> to vector<20xf32>
    %137 = vector.shape_cast %136 : vector<20xf32> to vector<20x1xf32>
    %cst_77 = arith.constant 3.200000e+01 : f32
    %138 = vector.broadcast %cst_77 : f32 to vector<20x1xf32>
    %139 = arith.divf %137, %138 : vector<20x1xf32>
    %cst_78 = arith.constant 9.99999974E-6 : f32
    %140 = vector.broadcast %cst_78 : f32 to vector<20x1xf32>
    %141 = arith.addf %139, %140 : vector<20x1xf32>
    %142 = math.rsqrt %141 : vector<20x1xf32>
    %143 = vector.broadcast %142 : vector<20x1xf32> to vector<20x32xf32>
    %144 = arith.mulf %134, %143 : vector<20x32xf32>
    %c0_79 = arith.constant 0 : index
    %c768_80 = arith.constant 768 : index
    %145 = vector.load %arg4[%c0_79, %c768_80] : memref<1x3456xf32, #tpu.memory_space<vmem>>, vector<1x32xf32>
    %146 = vector.broadcast %145 : vector<1x32xf32> to vector<20x32xf32>
    %147 = arith.mulf %144, %146 : vector<20x32xf32>
    %c0_81 = arith.constant 0 : index
    %c896_82 = arith.constant 896 : index
    %148 = vector.load %arg4[%c0_81, %c896_82] : memref<1x3456xf32, #tpu.memory_space<vmem>>, vector<1x32xf32>
    %149 = vector.broadcast %148 : vector<1x32xf32> to vector<20x32xf32>
    %150 = arith.addf %147, %149 : vector<20x32xf32>
    %cst_83 = arith.constant dense<0.000000e+00> : vector<20xf32>
    %151 = vector.multi_reduction <add>, %150, %cst_83 [1] : vector<20x32xf32> to vector<20xf32>
    %152 = vector.shape_cast %151 : vector<20xf32> to vector<20x1xf32>
    %cst_84 = arith.constant 3.200000e+01 : f32
    %153 = vector.broadcast %cst_84 : f32 to vector<20x1xf32>
    %154 = arith.divf %152, %153 : vector<20x1xf32>
    %155 = vector.broadcast %154 : vector<20x1xf32> to vector<20x32xf32>
    %156 = arith.subf %150, %155 : vector<20x32xf32>
    %157 = arith.mulf %156, %156 : vector<20x32xf32>
    %cst_85 = arith.constant dense<0.000000e+00> : vector<20xf32>
    %158 = vector.multi_reduction <add>, %157, %cst_85 [1] : vector<20x32xf32> to vector<20xf32>
    %159 = vector.shape_cast %158 : vector<20xf32> to vector<20x1xf32>
    %cst_86 = arith.constant 3.200000e+01 : f32
    %160 = vector.broadcast %cst_86 : f32 to vector<20x1xf32>
    %161 = arith.divf %159, %160 : vector<20x1xf32>
    %cst_87 = arith.constant 9.99999974E-6 : f32
    %162 = vector.broadcast %cst_87 : f32 to vector<20x1xf32>
    %163 = arith.addf %161, %162 : vector<20x1xf32>
    %164 = math.rsqrt %163 : vector<20x1xf32>
    %165 = vector.broadcast %164 : vector<20x1xf32> to vector<20x32xf32>
    %166 = arith.mulf %156, %165 : vector<20x32xf32>
    %c0_88 = arith.constant 0 : index
    %c1024_89 = arith.constant 1024 : index
    %167 = vector.load %arg4[%c0_88, %c1024_89] : memref<1x3456xf32, #tpu.memory_space<vmem>>, vector<1x32xf32>
    %168 = vector.broadcast %167 : vector<1x32xf32> to vector<20x32xf32>
    %169 = arith.mulf %166, %168 : vector<20x32xf32>
    %c0_90 = arith.constant 0 : index
    %c1152_91 = arith.constant 1152 : index
    %170 = vector.load %arg4[%c0_90, %c1152_91] : memref<1x3456xf32, #tpu.memory_space<vmem>>, vector<1x32xf32>
    %171 = vector.broadcast %170 : vector<1x32xf32> to vector<20x32xf32>
    %172 = arith.addf %169, %171 : vector<20x32xf32>
    %c0_92 = arith.constant 0 : index
    %c384_93 = arith.constant 384 : index
    %173 = vector.load %arg2[%c0_92, %c384_93] : memref<32x1280xf32, #tpu.memory_space<vmem>>, vector<32x96xf32>
    %cst_94 = arith.constant dense<0.000000e+00> : vector<10x96xf32>
    %174 = tpu.matmul %39, %173, %cst_94 {dimension_numbers = #tpu.dot_dimension_numbers<[1], [0], [0], [1], [0, 0, 1, 1], [], []>} : vector<10x32xf32>, vector<32x96xf32>, vector<10x96xf32> -> vector<10x96xf32>
    %c0_95 = arith.constant 0 : index
    %c1280_96 = arith.constant 1280 : index
    %175 = vector.load %arg4[%c0_95, %c1280_96] : memref<1x3456xf32, #tpu.memory_space<vmem>>, vector<1x96xf32>
    %176 = vector.broadcast %175 : vector<1x96xf32> to vector<10x96xf32>
    %177 = arith.addf %174, %176 : vector<10x96xf32>
    %178 = vector.extract_strided_slice %177 {offsets = [0, 0], sizes = [10, 32], strides = [1, 1]} : vector<10x96xf32> to vector<10x32xf32>
    %179 = vector.extract_strided_slice %177 {offsets = [0, 32], sizes = [10, 32], strides = [1, 1]} : vector<10x96xf32> to vector<10x32xf32>
    %180 = vector.extract_strided_slice %177 {offsets = [0, 64], sizes = [10, 32], strides = [1, 1]} : vector<10x96xf32> to vector<10x32xf32>
    %c0_97 = arith.constant 0 : index
    %c512_98 = arith.constant 512 : index
    %181 = vector.load %arg2[%c0_97, %c512_98] : memref<32x1280xf32, #tpu.memory_space<vmem>>, vector<32x32xf32>
    %c0_99 = arith.constant 0 : index
    %c1408 = arith.constant 1408 : index
    %182 = vector.load %arg4[%c0_99, %c1408] : memref<1x3456xf32, #tpu.memory_space<vmem>>, vector<1x32xf32>
    %183 = vector.extract_strided_slice %178 {offsets = [0, 0], sizes = [10, 16], strides = [1, 1]} : vector<10x32xf32> to vector<10x16xf32>
    %cst_100 = arith.constant 2.500000e-01 : f32
    %184 = vector.broadcast %cst_100 : f32 to vector<10x16xf32>
    %185 = arith.mulf %183, %184 : vector<10x16xf32>
    %186 = vector.extract_strided_slice %179 {offsets = [0, 0], sizes = [10, 16], strides = [1, 1]} : vector<10x32xf32> to vector<10x16xf32>
    %187 = vector.extract_strided_slice %180 {offsets = [0, 0], sizes = [10, 16], strides = [1, 1]} : vector<10x32xf32> to vector<10x16xf32>
    %cst_101 = arith.constant dense<0.000000e+00> : vector<10x10xf32>
    %188 = tpu.matmul %185, %186, %cst_101 {dimension_numbers = #tpu.dot_dimension_numbers<[1], [1], [0], [0], [0, 0, 1, 0], [], []>} : vector<10x16xf32>, vector<10x16xf32>, vector<10x10xf32> -> vector<10x10xf32>
    %189 = arith.addf %188, %41 : vector<10x10xf32>
    %cst_102 = arith.constant dense<0xFF800000> : vector<10xf32>
    %190 = vector.multi_reduction <maximumf>, %189, %cst_102 [1] : vector<10x10xf32> to vector<10xf32>
    %191 = vector.shape_cast %190 : vector<10xf32> to vector<10x1xf32>
    %192 = vector.broadcast %191 : vector<10x1xf32> to vector<10x10xf32>
    %193 = arith.subf %189, %192 : vector<10x10xf32>
    %194 = math.exp %193 : vector<10x10xf32>
    %cst_103 = arith.constant dense<0.000000e+00> : vector<10xf32>
    %195 = vector.multi_reduction <add>, %194, %cst_103 [1] : vector<10x10xf32> to vector<10xf32>
    %196 = vector.shape_cast %195 : vector<10xf32> to vector<10x1xf32>
    %197 = tpu.reciprocal %196 {approx = true} : vector<10x1xf32> -> vector<10x1xf32>
    %198 = vector.broadcast %197 : vector<10x1xf32> to vector<10x10xf32>
    %199 = arith.mulf %194, %198 : vector<10x10xf32>
    %cst_104 = arith.constant dense<0.000000e+00> : vector<10x16xf32>
    %200 = tpu.matmul %199, %187, %cst_104 {dimension_numbers = #tpu.dot_dimension_numbers<[1], [0], [0], [1], [0, 0, 1, 1], [], []>} : vector<10x10xf32>, vector<10x16xf32>, vector<10x16xf32> -> vector<10x16xf32>
    %201 = vector.extract_strided_slice %178 {offsets = [0, 16], sizes = [10, 16], strides = [1, 1]} : vector<10x32xf32> to vector<10x16xf32>
    %cst_105 = arith.constant 2.500000e-01 : f32
    %202 = vector.broadcast %cst_105 : f32 to vector<10x16xf32>
    %203 = arith.mulf %201, %202 : vector<10x16xf32>
    %204 = vector.extract_strided_slice %179 {offsets = [0, 16], sizes = [10, 16], strides = [1, 1]} : vector<10x32xf32> to vector<10x16xf32>
    %205 = vector.extract_strided_slice %180 {offsets = [0, 16], sizes = [10, 16], strides = [1, 1]} : vector<10x32xf32> to vector<10x16xf32>
    %cst_106 = arith.constant dense<0.000000e+00> : vector<10x10xf32>
    %206 = tpu.matmul %203, %204, %cst_106 {dimension_numbers = #tpu.dot_dimension_numbers<[1], [1], [0], [0], [0, 0, 1, 0], [], []>} : vector<10x16xf32>, vector<10x16xf32>, vector<10x10xf32> -> vector<10x10xf32>
    %207 = arith.addf %206, %41 : vector<10x10xf32>
    %cst_107 = arith.constant dense<0xFF800000> : vector<10xf32>
    %208 = vector.multi_reduction <maximumf>, %207, %cst_107 [1] : vector<10x10xf32> to vector<10xf32>
    %209 = vector.shape_cast %208 : vector<10xf32> to vector<10x1xf32>
    %210 = vector.broadcast %209 : vector<10x1xf32> to vector<10x10xf32>
    %211 = arith.subf %207, %210 : vector<10x10xf32>
    %212 = math.exp %211 : vector<10x10xf32>
    %cst_108 = arith.constant dense<0.000000e+00> : vector<10xf32>
    %213 = vector.multi_reduction <add>, %212, %cst_108 [1] : vector<10x10xf32> to vector<10xf32>
    %214 = vector.shape_cast %213 : vector<10xf32> to vector<10x1xf32>
    %215 = tpu.reciprocal %214 {approx = true} : vector<10x1xf32> -> vector<10x1xf32>
    %216 = vector.broadcast %215 : vector<10x1xf32> to vector<10x10xf32>
    %217 = arith.mulf %212, %216 : vector<10x10xf32>
    %cst_109 = arith.constant dense<0.000000e+00> : vector<10x16xf32>
    %218 = tpu.matmul %217, %205, %cst_109 {dimension_numbers = #tpu.dot_dimension_numbers<[1], [0], [0], [1], [0, 0, 1, 1], [], []>} : vector<10x10xf32>, vector<10x16xf32>, vector<10x16xf32> -> vector<10x16xf32>
    %219 = tpu.concatenate %200, %218 in 1 : vector<10x16xf32>, vector<10x16xf32> -> vector<10x32xf32>
    %cst_110 = arith.constant dense<0.000000e+00> : vector<10x32xf32>
    %220 = tpu.matmul %219, %181, %cst_110 {dimension_numbers = #tpu.dot_dimension_numbers<[1], [0], [0], [1], [0, 0, 1, 1], [], []>} : vector<10x32xf32>, vector<32x32xf32>, vector<10x32xf32> -> vector<10x32xf32>
    %221 = vector.broadcast %182 : vector<1x32xf32> to vector<10x32xf32>
    %222 = arith.addf %220, %221 : vector<10x32xf32>
    %223 = arith.addf %39, %222 : vector<10x32xf32>
    %cst_111 = arith.constant dense<0.000000e+00> : vector<10xf32>
    %224 = vector.multi_reduction <add>, %223, %cst_111 [1] : vector<10x32xf32> to vector<10xf32>
    %225 = vector.shape_cast %224 : vector<10xf32> to vector<10x1xf32>
    %cst_112 = arith.constant 3.200000e+01 : f32
    %226 = vector.broadcast %cst_112 : f32 to vector<10x1xf32>
    %227 = arith.divf %225, %226 : vector<10x1xf32>
    %228 = vector.broadcast %227 : vector<10x1xf32> to vector<10x32xf32>
    %229 = arith.subf %223, %228 : vector<10x32xf32>
    %230 = arith.mulf %229, %229 : vector<10x32xf32>
    %cst_113 = arith.constant dense<0.000000e+00> : vector<10xf32>
    %231 = vector.multi_reduction <add>, %230, %cst_113 [1] : vector<10x32xf32> to vector<10xf32>
    %232 = vector.shape_cast %231 : vector<10xf32> to vector<10x1xf32>
    %cst_114 = arith.constant 3.200000e+01 : f32
    %233 = vector.broadcast %cst_114 : f32 to vector<10x1xf32>
    %234 = arith.divf %232, %233 : vector<10x1xf32>
    %cst_115 = arith.constant 9.99999974E-6 : f32
    %235 = vector.broadcast %cst_115 : f32 to vector<10x1xf32>
    %236 = arith.addf %234, %235 : vector<10x1xf32>
    %237 = math.rsqrt %236 : vector<10x1xf32>
    %238 = vector.broadcast %237 : vector<10x1xf32> to vector<10x32xf32>
    %239 = arith.mulf %229, %238 : vector<10x32xf32>
    %c0_116 = arith.constant 0 : index
    %c2176 = arith.constant 2176 : index
    %240 = vector.load %arg4[%c0_116, %c2176] : memref<1x3456xf32, #tpu.memory_space<vmem>>, vector<1x32xf32>
    %241 = vector.broadcast %240 : vector<1x32xf32> to vector<10x32xf32>
    %242 = arith.mulf %239, %241 : vector<10x32xf32>
    %c0_117 = arith.constant 0 : index
    %c2304 = arith.constant 2304 : index
    %243 = vector.load %arg4[%c0_117, %c2304] : memref<1x3456xf32, #tpu.memory_space<vmem>>, vector<1x32xf32>
    %244 = vector.broadcast %243 : vector<1x32xf32> to vector<10x32xf32>
    %245 = arith.addf %242, %244 : vector<10x32xf32>
    %c0_118 = arith.constant 0 : index
    %c640_119 = arith.constant 640 : index
    %246 = vector.load %arg2[%c0_118, %c640_119] : memref<32x1280xf32, #tpu.memory_space<vmem>>, vector<32x32xf32>
    %cst_120 = arith.constant dense<0.000000e+00> : vector<10x32xf32>
    %247 = tpu.matmul %245, %246, %cst_120 {dimension_numbers = #tpu.dot_dimension_numbers<[1], [0], [0], [1], [0, 0, 1, 1], [], []>} : vector<10x32xf32>, vector<32x32xf32>, vector<10x32xf32> -> vector<10x32xf32>
    %c0_121 = arith.constant 0 : index
    %c1536 = arith.constant 1536 : index
    %248 = vector.load %arg4[%c0_121, %c1536] : memref<1x3456xf32, #tpu.memory_space<vmem>>, vector<1x32xf32>
    %249 = vector.broadcast %248 : vector<1x32xf32> to vector<10x32xf32>
    %250 = arith.addf %247, %249 : vector<10x32xf32>
    %c0_122 = arith.constant 0 : index
    %c768_123 = arith.constant 768 : index
    %251 = vector.load %arg2[%c0_122, %c768_123] : memref<32x1280xf32, #tpu.memory_space<vmem>>, vector<32x64xf32>
    %cst_124 = arith.constant dense<0.000000e+00> : vector<20x64xf32>
    %252 = tpu.matmul %172, %251, %cst_124 {dimension_numbers = #tpu.dot_dimension_numbers<[1], [0], [0], [1], [0, 0, 1, 1], [], []>} : vector<20x32xf32>, vector<32x64xf32>, vector<20x64xf32> -> vector<20x64xf32>
    %c0_125 = arith.constant 0 : index
    %c1664 = arith.constant 1664 : index
    %253 = vector.load %arg4[%c0_125, %c1664] : memref<1x3456xf32, #tpu.memory_space<vmem>>, vector<1x64xf32>
    %254 = vector.broadcast %253 : vector<1x64xf32> to vector<20x64xf32>
    %255 = arith.addf %252, %254 : vector<20x64xf32>
    %256 = vector.extract_strided_slice %255 {offsets = [0, 0], sizes = [20, 32], strides = [1, 1]} : vector<20x64xf32> to vector<20x32xf32>
    %257 = vector.extract_strided_slice %255 {offsets = [0, 32], sizes = [20, 32], strides = [1, 1]} : vector<20x64xf32> to vector<20x32xf32>
    %c0_126 = arith.constant 0 : index
    %c896_127 = arith.constant 896 : index
    %258 = vector.load %arg2[%c0_126, %c896_127] : memref<32x1280xf32, #tpu.memory_space<vmem>>, vector<32x32xf32>
    %c0_128 = arith.constant 0 : index
    %c1792 = arith.constant 1792 : index
    %259 = vector.load %arg4[%c0_128, %c1792] : memref<1x3456xf32, #tpu.memory_space<vmem>>, vector<1x32xf32>
    %260 = vector.extract_strided_slice %250 {offsets = [0, 0], sizes = [10, 16], strides = [1, 1]} : vector<10x32xf32> to vector<10x16xf32>
    %cst_129 = arith.constant 2.500000e-01 : f32
    %261 = vector.broadcast %cst_129 : f32 to vector<10x16xf32>
    %262 = arith.mulf %260, %261 : vector<10x16xf32>
    %263 = vector.extract_strided_slice %256 {offsets = [0, 0], sizes = [20, 16], strides = [1, 1]} : vector<20x32xf32> to vector<20x16xf32>
    %264 = vector.extract_strided_slice %257 {offsets = [0, 0], sizes = [20, 16], strides = [1, 1]} : vector<20x32xf32> to vector<20x16xf32>
    %cst_130 = arith.constant dense<0.000000e+00> : vector<10x20xf32>
    %265 = tpu.matmul %262, %263, %cst_130 {dimension_numbers = #tpu.dot_dimension_numbers<[1], [1], [0], [0], [0, 0, 1, 0], [], []>} : vector<10x16xf32>, vector<20x16xf32>, vector<10x20xf32> -> vector<10x20xf32>
    %266 = arith.addf %265, %42 : vector<10x20xf32>
    %cst_131 = arith.constant dense<0xFF800000> : vector<10xf32>
    %267 = vector.multi_reduction <maximumf>, %266, %cst_131 [1] : vector<10x20xf32> to vector<10xf32>
    %268 = vector.shape_cast %267 : vector<10xf32> to vector<10x1xf32>
    %269 = vector.broadcast %268 : vector<10x1xf32> to vector<10x20xf32>
    %270 = arith.subf %266, %269 : vector<10x20xf32>
    %271 = math.exp %270 : vector<10x20xf32>
    %cst_132 = arith.constant dense<0.000000e+00> : vector<10xf32>
    %272 = vector.multi_reduction <add>, %271, %cst_132 [1] : vector<10x20xf32> to vector<10xf32>
    %273 = vector.shape_cast %272 : vector<10xf32> to vector<10x1xf32>
    %274 = tpu.reciprocal %273 {approx = true} : vector<10x1xf32> -> vector<10x1xf32>
    %275 = vector.broadcast %274 : vector<10x1xf32> to vector<10x20xf32>
    %276 = arith.mulf %271, %275 : vector<10x20xf32>
    %cst_133 = arith.constant dense<0.000000e+00> : vector<10x16xf32>
    %277 = tpu.matmul %276, %264, %cst_133 {dimension_numbers = #tpu.dot_dimension_numbers<[1], [0], [0], [1], [0, 0, 1, 1], [], []>} : vector<10x20xf32>, vector<20x16xf32>, vector<10x16xf32> -> vector<10x16xf32>
    %278 = vector.extract_strided_slice %250 {offsets = [0, 16], sizes = [10, 16], strides = [1, 1]} : vector<10x32xf32> to vector<10x16xf32>
    %cst_134 = arith.constant 2.500000e-01 : f32
    %279 = vector.broadcast %cst_134 : f32 to vector<10x16xf32>
    %280 = arith.mulf %278, %279 : vector<10x16xf32>
    %281 = vector.extract_strided_slice %256 {offsets = [0, 16], sizes = [20, 16], strides = [1, 1]} : vector<20x32xf32> to vector<20x16xf32>
    %282 = vector.extract_strided_slice %257 {offsets = [0, 16], sizes = [20, 16], strides = [1, 1]} : vector<20x32xf32> to vector<20x16xf32>
    %cst_135 = arith.constant dense<0.000000e+00> : vector<10x20xf32>
    %283 = tpu.matmul %280, %281, %cst_135 {dimension_numbers = #tpu.dot_dimension_numbers<[1], [1], [0], [0], [0, 0, 1, 0], [], []>} : vector<10x16xf32>, vector<20x16xf32>, vector<10x20xf32> -> vector<10x20xf32>
    %284 = arith.addf %283, %42 : vector<10x20xf32>
    %cst_136 = arith.constant dense<0xFF800000> : vector<10xf32>
    %285 = vector.multi_reduction <maximumf>, %284, %cst_136 [1] : vector<10x20xf32> to vector<10xf32>
    %286 = vector.shape_cast %285 : vector<10xf32> to vector<10x1xf32>
    %287 = vector.broadcast %286 : vector<10x1xf32> to vector<10x20xf32>
    %288 = arith.subf %284, %287 : vector<10x20xf32>
    %289 = math.exp %288 : vector<10x20xf32>
    %cst_137 = arith.constant dense<0.000000e+00> : vector<10xf32>
    %290 = vector.multi_reduction <add>, %289, %cst_137 [1] : vector<10x20xf32> to vector<10xf32>
    %291 = vector.shape_cast %290 : vector<10xf32> to vector<10x1xf32>
    %292 = tpu.reciprocal %291 {approx = true} : vector<10x1xf32> -> vector<10x1xf32>
    %293 = vector.broadcast %292 : vector<10x1xf32> to vector<10x20xf32>
    %294 = arith.mulf %289, %293 : vector<10x20xf32>
    %cst_138 = arith.constant dense<0.000000e+00> : vector<10x16xf32>
    %295 = tpu.matmul %294, %282, %cst_138 {dimension_numbers = #tpu.dot_dimension_numbers<[1], [0], [0], [1], [0, 0, 1, 1], [], []>} : vector<10x20xf32>, vector<20x16xf32>, vector<10x16xf32> -> vector<10x16xf32>
    %296 = tpu.concatenate %277, %295 in 1 : vector<10x16xf32>, vector<10x16xf32> -> vector<10x32xf32>
    %cst_139 = arith.constant dense<0.000000e+00> : vector<10x32xf32>
    %297 = tpu.matmul %296, %258, %cst_139 {dimension_numbers = #tpu.dot_dimension_numbers<[1], [0], [0], [1], [0, 0, 1, 1], [], []>} : vector<10x32xf32>, vector<32x32xf32>, vector<10x32xf32> -> vector<10x32xf32>
    %298 = vector.broadcast %259 : vector<1x32xf32> to vector<10x32xf32>
    %299 = arith.addf %297, %298 : vector<10x32xf32>
    %300 = arith.addf %245, %299 : vector<10x32xf32>
    %cst_140 = arith.constant dense<0.000000e+00> : vector<10xf32>
    %301 = vector.multi_reduction <add>, %300, %cst_140 [1] : vector<10x32xf32> to vector<10xf32>
    %302 = vector.shape_cast %301 : vector<10xf32> to vector<10x1xf32>
    %cst_141 = arith.constant 3.200000e+01 : f32
    %303 = vector.broadcast %cst_141 : f32 to vector<10x1xf32>
    %304 = arith.divf %302, %303 : vector<10x1xf32>
    %305 = vector.broadcast %304 : vector<10x1xf32> to vector<10x32xf32>
    %306 = arith.subf %300, %305 : vector<10x32xf32>
    %307 = arith.mulf %306, %306 : vector<10x32xf32>
    %cst_142 = arith.constant dense<0.000000e+00> : vector<10xf32>
    %308 = vector.multi_reduction <add>, %307, %cst_142 [1] : vector<10x32xf32> to vector<10xf32>
    %309 = vector.shape_cast %308 : vector<10xf32> to vector<10x1xf32>
    %cst_143 = arith.constant 3.200000e+01 : f32
    %310 = vector.broadcast %cst_143 : f32 to vector<10x1xf32>
    %311 = arith.divf %309, %310 : vector<10x1xf32>
    %cst_144 = arith.constant 9.99999974E-6 : f32
    %312 = vector.broadcast %cst_144 : f32 to vector<10x1xf32>
    %313 = arith.addf %311, %312 : vector<10x1xf32>
    %314 = math.rsqrt %313 : vector<10x1xf32>
    %315 = vector.broadcast %314 : vector<10x1xf32> to vector<10x32xf32>
    %316 = arith.mulf %306, %315 : vector<10x32xf32>
    %c0_145 = arith.constant 0 : index
    %c2432 = arith.constant 2432 : index
    %317 = vector.load %arg4[%c0_145, %c2432] : memref<1x3456xf32, #tpu.memory_space<vmem>>, vector<1x32xf32>
    %318 = vector.broadcast %317 : vector<1x32xf32> to vector<10x32xf32>
    %319 = arith.mulf %316, %318 : vector<10x32xf32>
    %c0_146 = arith.constant 0 : index
    %c2560 = arith.constant 2560 : index
    %320 = vector.load %arg4[%c0_146, %c2560] : memref<1x3456xf32, #tpu.memory_space<vmem>>, vector<1x32xf32>
    %321 = vector.broadcast %320 : vector<1x32xf32> to vector<10x32xf32>
    %322 = arith.addf %319, %321 : vector<10x32xf32>
    %c0_147 = arith.constant 0 : index
    %c1024_148 = arith.constant 1024 : index
    %323 = vector.load %arg2[%c0_147, %c1024_148] : memref<32x1280xf32, #tpu.memory_space<vmem>>, vector<32x64xf32>
    %cst_149 = arith.constant dense<0.000000e+00> : vector<10x64xf32>
    %324 = tpu.matmul %322, %323, %cst_149 {dimension_numbers = #tpu.dot_dimension_numbers<[1], [0], [0], [1], [0, 0, 1, 1], [], []>} : vector<10x32xf32>, vector<32x64xf32>, vector<10x64xf32> -> vector<10x64xf32>
    %c0_150 = arith.constant 0 : index
    %c1920 = arith.constant 1920 : index
    %325 = vector.load %arg4[%c0_150, %c1920] : memref<1x3456xf32, #tpu.memory_space<vmem>>, vector<1x64xf32>
    %326 = vector.broadcast %325 : vector<1x64xf32> to vector<10x64xf32>
    %327 = arith.addf %324, %326 : vector<10x64xf32>
    %cst_151 = arith.constant 0.000000e+00 : f32
    %328 = vector.broadcast %cst_151 : f32 to vector<10x64xf32>
    %329 = arith.maximumf %327, %328 : vector<10x64xf32>
    %c0_152 = arith.constant 0 : index
    %c384_153 = arith.constant 384 : index
    %330 = vector.load %arg3[%c0_152, %c384_153] : memref<64x512xf32, #tpu.memory_space<vmem>>, vector<64x32xf32>
    %cst_154 = arith.constant dense<0.000000e+00> : vector<10x32xf32>
    %331 = tpu.matmul %329, %330, %cst_154 {dimension_numbers = #tpu.dot_dimension_numbers<[1], [0], [0], [1], [0, 0, 1, 1], [], []>} : vector<10x64xf32>, vector<64x32xf32>, vector<10x32xf32> -> vector<10x32xf32>
    %c0_155 = arith.constant 0 : index
    %c2048 = arith.constant 2048 : index
    %332 = vector.load %arg4[%c0_155, %c2048] : memref<1x3456xf32, #tpu.memory_space<vmem>>, vector<1x32xf32>
    %333 = vector.broadcast %332 : vector<1x32xf32> to vector<10x32xf32>
    %334 = arith.addf %331, %333 : vector<10x32xf32>
    %335 = arith.addf %322, %334 : vector<10x32xf32>
    %cst_156 = arith.constant dense<0.000000e+00> : vector<10xf32>
    %336 = vector.multi_reduction <add>, %335, %cst_156 [1] : vector<10x32xf32> to vector<10xf32>
    %337 = vector.shape_cast %336 : vector<10xf32> to vector<10x1xf32>
    %cst_157 = arith.constant 3.200000e+01 : f32
    %338 = vector.broadcast %cst_157 : f32 to vector<10x1xf32>
    %339 = arith.divf %337, %338 : vector<10x1xf32>
    %340 = vector.broadcast %339 : vector<10x1xf32> to vector<10x32xf32>
    %341 = arith.subf %335, %340 : vector<10x32xf32>
    %342 = arith.mulf %341, %341 : vector<10x32xf32>
    %cst_158 = arith.constant dense<0.000000e+00> : vector<10xf32>
    %343 = vector.multi_reduction <add>, %342, %cst_158 [1] : vector<10x32xf32> to vector<10xf32>
    %344 = vector.shape_cast %343 : vector<10xf32> to vector<10x1xf32>
    %cst_159 = arith.constant 3.200000e+01 : f32
    %345 = vector.broadcast %cst_159 : f32 to vector<10x1xf32>
    %346 = arith.divf %344, %345 : vector<10x1xf32>
    %cst_160 = arith.constant 9.99999974E-6 : f32
    %347 = vector.broadcast %cst_160 : f32 to vector<10x1xf32>
    %348 = arith.addf %346, %347 : vector<10x1xf32>
    %349 = math.rsqrt %348 : vector<10x1xf32>
    %350 = vector.broadcast %349 : vector<10x1xf32> to vector<10x32xf32>
    %351 = arith.mulf %341, %350 : vector<10x32xf32>
    %c0_161 = arith.constant 0 : index
    %c2688 = arith.constant 2688 : index
    %352 = vector.load %arg4[%c0_161, %c2688] : memref<1x3456xf32, #tpu.memory_space<vmem>>, vector<1x32xf32>
    %353 = vector.broadcast %352 : vector<1x32xf32> to vector<10x32xf32>
    %354 = arith.mulf %351, %353 : vector<10x32xf32>
    %c0_162 = arith.constant 0 : index
    %c2816 = arith.constant 2816 : index
    %355 = vector.load %arg4[%c0_162, %c2816] : memref<1x3456xf32, #tpu.memory_space<vmem>>, vector<1x32xf32>
    %356 = vector.broadcast %355 : vector<1x32xf32> to vector<10x32xf32>
    %357 = arith.addf %354, %356 : vector<10x32xf32>
    %cst_163 = arith.constant dense<0.000000e+00> : vector<10xf32>
    %358 = vector.multi_reduction <add>, %357, %cst_163 [1] : vector<10x32xf32> to vector<10xf32>
    %359 = vector.shape_cast %358 : vector<10xf32> to vector<10x1xf32>
    %cst_164 = arith.constant 3.200000e+01 : f32
    %360 = vector.broadcast %cst_164 : f32 to vector<10x1xf32>
    %361 = arith.divf %359, %360 : vector<10x1xf32>
    %362 = vector.broadcast %361 : vector<10x1xf32> to vector<10x32xf32>
    %363 = arith.subf %357, %362 : vector<10x32xf32>
    %364 = arith.mulf %363, %363 : vector<10x32xf32>
    %cst_165 = arith.constant dense<0.000000e+00> : vector<10xf32>
    %365 = vector.multi_reduction <add>, %364, %cst_165 [1] : vector<10x32xf32> to vector<10xf32>
    %366 = vector.shape_cast %365 : vector<10xf32> to vector<10x1xf32>
    %cst_166 = arith.constant 3.200000e+01 : f32
    %367 = vector.broadcast %cst_166 : f32 to vector<10x1xf32>
    %368 = arith.divf %366, %367 : vector<10x1xf32>
    %cst_167 = arith.constant 9.99999974E-6 : f32
    %369 = vector.broadcast %cst_167 : f32 to vector<10x1xf32>
    %370 = arith.addf %368, %369 : vector<10x1xf32>
    %371 = math.rsqrt %370 : vector<10x1xf32>
    %372 = vector.broadcast %371 : vector<10x1xf32> to vector<10x32xf32>
    %373 = arith.mulf %363, %372 : vector<10x32xf32>
    %c0_168 = arith.constant 0 : index
    %c2944 = arith.constant 2944 : index
    %374 = vector.load %arg4[%c0_168, %c2944] : memref<1x3456xf32, #tpu.memory_space<vmem>>, vector<1x32xf32>
    %375 = vector.broadcast %374 : vector<1x32xf32> to vector<10x32xf32>
    %376 = arith.mulf %373, %375 : vector<10x32xf32>
    %c0_169 = arith.constant 0 : index
    %c3072 = arith.constant 3072 : index
    %377 = vector.load %arg4[%c0_169, %c3072] : memref<1x3456xf32, #tpu.memory_space<vmem>>, vector<1x32xf32>
    %378 = vector.broadcast %377 : vector<1x32xf32> to vector<10x32xf32>
    %379 = arith.addf %376, %378 : vector<10x32xf32>
    %c0_170 = arith.constant 0 : index
    %c1152_171 = arith.constant 1152 : index
    %380 = vector.load %arg2[%c0_170, %c1152_171] : memref<32x1280xf32, #tpu.memory_space<vmem>>, vector<32x5xf32>
    %cst_172 = arith.constant dense<0.000000e+00> : vector<10x5xf32>
    %381 = tpu.matmul %379, %380, %cst_172 {dimension_numbers = #tpu.dot_dimension_numbers<[1], [0], [0], [1], [0, 0, 1, 1], [], []>} : vector<10x32xf32>, vector<32x5xf32>, vector<10x5xf32> -> vector<10x5xf32>
    %c0_173 = arith.constant 0 : index
    %c3200 = arith.constant 3200 : index
    %382 = vector.load %arg4[%c0_173, %c3200] : memref<1x3456xf32, #tpu.memory_space<vmem>>, vector<1x5xf32>
    %383 = vector.broadcast %382 : vector<1x5xf32> to vector<10x5xf32>
    %384 = arith.addf %381, %383 : vector<10x5xf32>
    %c0_174 = arith.constant 0 : index
    %c0_175 = arith.constant 0 : index
    %385 = vector.load %arg8[%c0_174, %c0_175] : memref<10x5xf32, #tpu.memory_space<vmem>>, vector<10x5xf32>
    tpu.vector_store %arg8[%c0_174, %c0_175], %384 {strides = array<i32>} : memref<10x5xf32, #tpu.memory_space<vmem>>, vector<10x5xf32>,
    return
  }
}

</mosaic_0001>

<llo_original>
// kernel: combined_model_forward.1
$region0: #{combined_model_forward.1}
  #allocation0 [shape = 'u32[]', space=smem, size = 0x4, offset = 0x4, fixed_abs, tag = 'smem constant byte address 0x4 - core index']
  #allocation1 [shape = 'u32[144,128]{1,0:T(1,128)}', space=vmem, size = 0x12000, scoped, tag = 'internal scratch']
  %s0 = inlined_call_operand.vmem [shape: f32[20,64], index: 0, kind: input, shape index: {}]
  %s1 = inlined_call_operand.vmem [shape: s32[10,1], index: 1, kind: input, shape index: {}]
  %s2 = inlined_call_operand.hbm [shape: f32[32,1280], index: 2, kind: input, shape index: {}]
  %s3 = inlined_call_operand.hbm [shape: f32[64,512], index: 3, kind: input, shape index: {}]
  %s4 = inlined_call_operand.vmem [shape: f32[1,3456], index: 4, kind: input, shape index: {}]
  %s5 = inlined_call_operand.hbm [shape: f32[66,1408], index: 5, kind: input, shape index: {}]
  %s6 = inlined_call_operand.vmem [shape: f32[20,16], index: 6, kind: output, shape index: {0}]
  %s7 = inlined_call_operand.vmem [shape: f32[20,64], index: 7, kind: output, shape index: {1}]
  %s8 = inlined_call_operand.vmem [shape: f32[10,5], index: 8, kind: output, shape index: {2}]
  %9 = xla_tuple %s6, %s7, %s8
  %s10 = sld [smem:[#allocation0]]
  $region62: #{combined_model_forward.1} parent=0
    _
  %s12 = ssub.s32 1, %s10
  %s13 = scalar_select 0, %s12, %s10
  $region1: #{combined_model_forward.1} parent=0
    #allocation2 [shape = 'u8[163840]{0}', space=vmem, size = 0x28000, scoped, tag = 'input window, operand 2, single buffered']
    #allocation3 [shape = 's32[1]{0}', space=sflag, size = 0x4, scoped, tag = 'scoped memory for combined_model_forward.1']
    #allocation4 [shape = 'u8[131072]{0}', space=vmem, size = 0x20000, scoped, tag = 'input window, operand 3, single buffered']
    #allocation5 [shape = 's32[1]{0}', space=sflag, size = 0x4, scoped, tag = 'scoped memory for combined_model_forward.1']
    #allocation6 [shape = 'u8[405504]{0}', space=vmem, size = 0x63000, scoped, tag = 'input window, operand 5, single buffered']
    %14 = vsyncpa [#allocation3], 0
    %15 = vsyncpa [#allocation5], 0
    // Predicated region
    $region2: #{combined_model_forward.1} parent=1 // pred_check
      _
    $region3: #{combined_model_forward.1} parent=1 // pred_check_branch
      %17 = sbr.rel (0) target = $region5
    $region4: #{combined_model_forward.1} parent=1 // pred_region
      _
    $region5: #{combined_model_forward.1} parent=1 // pred_fallthru
      _
    // Predicated region
    $region6: #{combined_model_forward.1} parent=1 // pred_check
      _
    $region7: #{combined_model_forward.1} parent=1 // pred_check_branch
      %19 = sbr.rel (0) target = $region9
    $region8: #{combined_model_forward.1} parent=1 // pred_region
      _
    $region9: #{combined_model_forward.1} parent=1 // pred_fallthru
      _
    // Predicated region
    $region10: #{combined_model_forward.1} parent=1 // pred_check
      _
    $region11: #{combined_model_forward.1} parent=1 // pred_check_branch
      %21 = sbr.rel (0) target = $region13
    $region12: #{combined_model_forward.1} parent=1 // pred_region
      %s23 = ssub.s32 5120, 5120
      %24 = vsyncadd [#allocation3], %s23
      %s25 = sshll.u32 [#allocation2], 4
      %s26 = int_to_ptr.vmem [resolvable:$true] %s25
      %31 = dma.hbm_to_vmem [thread:$0]  %s2, 5120, %s26, [#allocation3], 1280, 1280, 80
    $region13: #{combined_model_forward.1} parent=1 // pred_fallthru
      _
    // Predicated region
    $region14: #{combined_model_forward.1} parent=1 // pred_check
      _
    $region15: #{combined_model_forward.1} parent=1 // pred_check_branch
      %33 = sbr.rel (0) target = $region17
    $region16: #{combined_model_forward.1} parent=1 // pred_region
      %s35 = ssub.s32 4096, 4096
      %36 = vsyncadd [#allocation5], %s35
      %s37 = sshll.u32 [#allocation4], 4
      %s38 = int_to_ptr.vmem [resolvable:$true] %s37
      %43 = dma.hbm_to_vmem [thread:$0]  %s3, 4096, %s38, [#allocation5], 512, 512, 32
    $region17: #{combined_model_forward.1} parent=1 // pred_fallthru
      _
    // Predicated region
    $region18: #{combined_model_forward.1} parent=1 // pred_check
      _
    $region19: #{combined_model_forward.1} parent=1 // pred_check_branch
      %45 = sbr.rel (0) target = $region21
    $region20: #{combined_model_forward.1} parent=1 // pred_region
      _
    $region21: #{combined_model_forward.1} parent=1 // pred_fallthru
      _
    // Predicated region
    $region22: #{combined_model_forward.1} parent=1 // pred_check
      _
    $region23: #{combined_model_forward.1} parent=1 // pred_check_branch
      %47 = sbr.rel (0) target = $region25
    $region24: #{combined_model_forward.1} parent=1 // pred_region
      %s49 = ssub.s32 12672, 12672
      %50 = vsyncadd [#allocation5], %s49
      %s51 = sshll.u32 [#allocation6], 4
      %s52 = int_to_ptr.vmem [resolvable:$true] %s51
      %57 = dma.hbm_to_vmem [thread:$0]  %s5, 12672, %s52, [#allocation5], 1408, 1408, 88
    $region25: #{combined_model_forward.1} parent=1 // pred_fallthru
      _
    // Predicated region
    $region26: #{combined_model_forward.1} parent=1 // pred_check
      _
    $region27: #{combined_model_forward.1} parent=1 // pred_check_branch
      %59 = sbr.rel (0) target = $region29
    $region28: #{combined_model_forward.1} parent=1 // pred_region
      %60 = dma.done [#allocation3], 5120
    $region29: #{combined_model_forward.1} parent=1 // pred_fallthru
      _
    // Predicated region
    $region30: #{combined_model_forward.1} parent=1 // pred_check
      _
    $region31: #{combined_model_forward.1} parent=1 // pred_check_branch
      %62 = sbr.rel (0) target = $region33
    $region32: #{combined_model_forward.1} parent=1 // pred_region
      %63 = dma.done [#allocation5], 4096
    $region33: #{combined_model_forward.1} parent=1 // pred_fallthru
      _
    // Predicated region
    $region34: #{combined_model_forward.1} parent=1 // pred_check
      _
    $region35: #{combined_model_forward.1} parent=1 // pred_check_branch
      %65 = sbr.rel (0) target = $region37
    $region36: #{combined_model_forward.1} parent=1 // pred_region
      %66 = dma.done [#allocation5], 12672
    $region37: #{combined_model_forward.1} parent=1 // pred_fallthru
      _
    %v67 = vld [vmem:[%s0] sm:$0xff]
    %v68 = vld [vmem:[%s0 + $0x8] sm:$0xff]
    %v69 = vld [vmem:[%s0 + $0x10] sm:$0xf]
    %v70 = vld [vmem:[#allocation4] sm:$0xff]
    %v71 = vld [vmem:[#allocation4 + $0x20] sm:$0xff]
    %v72 = vld [vmem:[#allocation4 + $0x40] sm:$0xff]
    %v73 = vld [vmem:[#allocation4 + $0x60] sm:$0xff]
    %v74 = vld [vmem:[#allocation4 + $0x80] sm:$0xff]
    %v75 = vld [vmem:[#allocation4 + $0xa0] sm:$0xff]
    %v76 = vld [vmem:[#allocation4 + $0xc0] sm:$0xff]
    %v77 = vld [vmem:[#allocation4 + $0xe0] sm:$0xff]
    %vm78 = vcmask 523264
    %v80 = vsel %vm78, %v67, 0
    %v83 = vsel %vm78, %v68, 0
    %v86 = vsel %vm78, %v69, 0
    %88 = vmatprep.subr.mxu0 0.0
    %89 = vmatpush1.msra.mxu0 0.0
    %90 = vmatprep.subr.mxu0 0.0
    %91 = vmatpush1.msra.mxu0 0.0
    %92 = vmatprep.subr.mxu0 0.0
    %93 = vmatpush1.msra.mxu0 0.0
    %94 = vmatprep.subr.mxu0 0.0
    %95 = vmatpush1.msra.mxu0 0.0
    %96 = vmatprep.subr.mxu0 0.0
    %97 = vmatpush1.msra.mxu0 0.0
    %98 = vmatprep.subr.mxu0 0.0
    %99 = vmatpush1.msra.mxu0 0.0
    %100 = vmatprep.subr.mxu0 0.0
    %101 = vmatpush1.msra.mxu0 0.0
    %102 = vmatprep.subr.mxu0 0.0
    %103 = vmatpush1.msra.mxu0 0.0
    %104 = vmatprep.subr.mxu0 0.0
    %105 = vmatpush1.msra.mxu0 %v77
    %106 = vmatprep.subr.mxu0 0.0
    %107 = vmatpush1.msra.mxu0 %v76
    %108 = vmatprep.subr.mxu0 0.0
    %109 = vmatpush1.msra.mxu0 %v75
    %110 = vmatprep.subr.mxu0 0.0
    %111 = vmatpush1.msra.mxu0 %v74
    %112 = vmatprep.subr.mxu0 0.0
    %113 = vmatpush1.msra.mxu0 %v73
    %114 = vmatprep.subr.mxu0 0.0
    %115 = vmatpush1.msra.mxu0 %v72
    %116 = vmatprep.subr.mxu0 0.0
    %117 = vmatpush1.msra.mxu0 %v71
    %118 = vmatprep.subr.mxu0 0.0
    %119 = vmatpush1.msra.mxu0 %v70
    %120 = vmatprep.subr.mxu0 0.0
    %121 = vmatpush2.msra.mxu0 0.0
    %122 = vmatprep.subr.mxu0 0.0
    %123 = vmatpush2.msra.mxu0 0.0
    %124 = vmatprep.subr.mxu0 0.0
    %125 = vmatpush2.msra.mxu0 0.0
    %126 = vmatprep.subr.mxu0 0.0
    %127 = vmatpush2.msra.mxu0 0.0
    %128 = vmatprep.subr.mxu0 0.0
    %129 = vmatpush2.msra.mxu0 0.0
    %130 = vmatprep.subr.mxu0 0.0
    %131 = vmatpush2.msra.mxu0 0.0
    %132 = vmatprep.subr.mxu0 0.0
    %133 = vmatpush2.msra.mxu0 0.0
    %134 = vmatprep.subr.mxu0 0.0
    %135 = vmatpush2.msra.mxu0 0.0
    %136 = vmatprep.subr.mxu0 0.0
    %137 = vmatpush2.msra.mxu0 0.0
    %138 = vmatprep.subr.mxu0 0.0
    %139 = vmatpush2.msra.mxu0 0.0
    %140 = vmatprep.subr.mxu0 0.0
    %141 = vmatpush2.msra.mxu0 0.0
    %142 = vmatprep.subr.mxu0 0.0
    %143 = vmatpush2.msra.mxu0 0.0
    %144 = vmatprep.subr.mxu0 0.0
    %145 = vmatpush2.msra.mxu0 0.0
    %146 = vmatprep.subr.mxu0 0.0
    %147 = vmatpush2.msra.mxu0 0.0
    %148 = vmatprep.subr.mxu0 0.0
    %149 = vmatpush2.msra.mxu0 0.0
    %150 = vmatprep.subr.mxu0 0.0
    %151 = vmatpush2.msra.mxu0 0.0
    %152 = vmatprep.mubr.f32.mxu0 0.0
    %153 = vmatmul.mubr.f32.gmra.mxu0 %v80
    %v154 = vpop.f32.mrf.mxu0
    %v155 = vadd.f32 0.0, %v154
    %v156 = vpop.f32.mrf.mxu0
    %157 = vmatprep.mubr.f32.mxu0 0.0
    %158 = vmatmul.mubr.f32.gmra.mxu0 %v83
    %v159 = vpop.f32.mrf.mxu0
    %v160 = vadd.f32 0.0, %v159
    %v161 = vpop.f32.mrf.mxu0
    %162 = vmatprep.mubr.f32.mxu0 0.0
    %163 = vmatmul.mubr.f32.gmra.mxu0 %v86
    %v164 = vpop.f32.mrf.mxu0
    %v165 = vadd.f32 0.0, %v164
    %v166 = vpop.f32.mrf.mxu0
    %167 = vdwg.mxu0
    %v168 = vmul.f32 %v155, %v155
    %v169 = vmul.f32 %v160, %v160
    %v170 = vmul.f32 %v165, %v165
    %v171 = vld [vmem:[#allocation6] sm:$0xff]
    %v172 = vld [vmem:[#allocation6 + $0x58] sm:$0xff]
    %v173 = vld [vmem:[#allocation6 + $0xb0] sm:$0xff]
    %v174 = vld [vmem:[#allocation6 + $0x108] sm:$0xff]
    %v175 = vld [vmem:[#allocation6 + $0x160] sm:$0xff]
    %v176 = vld [vmem:[#allocation6 + $0x1b8] sm:$0xff]
    %v177 = vld [vmem:[#allocation6 + $0x210] sm:$0xff]
    %v178 = vld [vmem:[#allocation6 + $0x268] sm:$0xff]
    %v179 = vld [vmem:[#allocation6 + $0x2c0] sm:$0x3]
    %vm180 = vcmask 539648
    %v182 = vsel %vm180, %v168, 0
    %v185 = vsel %vm180, %v169, 0
    %v188 = vsel %vm180, %v170, 0
    %vm190 = vcmask 1041408
    %v192 = vsel %vm190, %v179, 0
    %194 = vmatprep.subr.mxu0 0.0
    %195 = vmatpush1.msra.mxu0 0.0
    %196 = vmatprep.subr.mxu0 0.0
    %197 = vmatpush1.msra.mxu0 0.0
    %198 = vmatprep.subr.mxu0 0.0
    %199 = vmatpush1.msra.mxu0 0.0
    %200 = vmatprep.subr.mxu0 0.0
    %201 = vmatpush1.msra.mxu0 0.0
    %202 = vmatprep.subr.mxu0 0.0
    %203 = vmatpush1.msra.mxu0 0.0
    %204 = vmatprep.subr.mxu0 0.0
    %205 = vmatpush1.msra.mxu0 0.0
    %206 = vmatprep.subr.mxu0 0.0
    %207 = vmatpush1.msra.mxu0 0.0
    %208 = vmatprep.subr.mxu0 0.0
    %209 = vmatpush1.msra.mxu0 %v192
    %210 = vmatprep.subr.mxu0 0.0
    %211 = vmatpush1.msra.mxu0 %v178
    %212 = vmatprep.subr.mxu0 0.0
    %213 = vmatpush1.msra.mxu0 %v177
    %214 = vmatprep.subr.mxu0 0.0
    %215 = vmatpush1.msra.mxu0 %v176
    %216 = vmatprep.subr.mxu0 0.0
    %217 = vmatpush1.msra.mxu0 %v175
    %218 = vmatprep.subr.mxu0 0.0
    %219 = vmatpush1.msra.mxu0 %v174
    %220 = vmatprep.subr.mxu0 0.0
    %221 = vmatpush1.msra.mxu0 %v173
    %222 = vmatprep.subr.mxu0 0.0
    %223 = vmatpush1.msra.mxu0 %v172
    %224 = vmatprep.subr.mxu0 0.0
    %225 = vmatpush1.msra.mxu0 %v171
    %226 = vmatprep.subr.mxu0 0.0
    %227 = vmatpush2.msra.mxu0 0.0
    %228 = vmatprep.subr.mxu0 0.0
    %229 = vmatpush2.msra.mxu0 0.0
    %230 = vmatprep.subr.mxu0 0.0
    %231 = vmatpush2.msra.mxu0 0.0
    %232 = vmatprep.subr.mxu0 0.0
    %233 = vmatpush2.msra.mxu0 0.0
    %234 = vmatprep.subr.mxu0 0.0
    %235 = vmatpush2.msra.mxu0 0.0
    %236 = vmatprep.subr.mxu0 0.0
    %237 = vmatpush2.msra.mxu0 0.0
    %238 = vmatprep.subr.mxu0 0.0
    %239 = vmatpush2.msra.mxu0 0.0
    %240 = vmatprep.subr.mxu0 0.0
    %241 = vmatpush2.msra.mxu0 0.0
    %242 = vmatprep.subr.mxu0 0.0
    %243 = vmatpush2.msra.mxu0 0.0
    %244 = vmatprep.subr.mxu0 0.0
    %245 = vmatpush2.msra.mxu0 0.0
    %246 = vmatprep.subr.mxu0 0.0
    %247 = vmatpush2.msra.mxu0 0.0
    %248 = vmatprep.subr.mxu0 0.0
    %249 = vmatpush2.msra.mxu0 0.0
    %250 = vmatprep.subr.mxu0 0.0
    %251 = vmatpush2.msra.mxu0 0.0
    %252 = vmatprep.subr.mxu0 0.0
    %253 = vmatpush2.msra.mxu0 0.0
    %254 = vmatprep.subr.mxu0 0.0
    %255 = vmatpush2.msra.mxu0 0.0
    %256 = vmatprep.subr.mxu0 0.0
    %257 = vmatpush2.msra.mxu0 0.0
    %258 = vmatprep.mubr.f32.mxu0 0.0
    %259 = vmatmul.mubr.f32.gmra.mxu0 %v182
    %v260 = vpop.f32.mrf.mxu0
    %v261 = vadd.f32 1e-10, %v260
    %v262 = vpop.f32.mrf.mxu0
    %263 = vmatprep.mubr.f32.mxu0 0.0
    %264 = vmatmul.mubr.f32.gmra.mxu0 %v185
    %v265 = vpop.f32.mrf.mxu0
    %v266 = vadd.f32 1e-10, %v265
    %v267 = vpop.f32.mrf.mxu0
    %268 = vmatprep.mubr.f32.mxu0 0.0
    %269 = vmatmul.mubr.f32.gmra.mxu0 %v188
    %v270 = vpop.f32.mrf.mxu0
    %v271 = vadd.f32 1e-10, %v270
    %v272 = vpop.f32.mrf.mxu0
    %273 = vdwg.mxu0
    %v274 = vlog2.pop %v261
    %v275 = vmul.f32 %v274, 0.6931472
    %v276 = vlog2.pop %v266
    %v277 = vmul.f32 %v276, 0.6931472
    %v278 = vlog2.pop %v271
    %v279 = vmul.f32 %v278, 0.6931472
    %vm280 = vcmask 130048
    %281 = vst.msk [vmem:[%s6] sm:$0xff] %vm280, %v275
    %282 = vst.msk [vmem:[%s6 + $0x8] sm:$0xff] %vm280, %v277
    %vm283 = vcmask 125952
    %284 = vst.msk [vmem:[%s6 + $0x10] sm:$0xf] %vm283, %v279
    %v285 = vld [vmem:[#allocation6 + $0x8] sm:$0xff]
    %v286 = vld [vmem:[#allocation6 + $0x60] sm:$0xff]
    %v288 = vsel %vm280, %v275, 0
    %v291 = vsel %vm280, %v277, 0
    %v294 = vsel %vm280, %v279, 0
    %296 = vmatprep.subr.mxu0 0.0
    %297 = vmatpush1.msra.mxu0 0.0
    %298 = vmatprep.subr.mxu0 0.0
    %299 = vmatpush1.msra.mxu0 0.0
    %300 = vmatprep.subr.mxu0 0.0
    %301 = vmatpush1.msra.mxu0 0.0
    %302 = vmatprep.subr.mxu0 0.0
    %303 = vmatpush1.msra.mxu0 0.0
    %304 = vmatprep.subr.mxu0 0.0
    %305 = vmatpush1.msra.mxu0 0.0
    %306 = vmatprep.subr.mxu0 0.0
    %307 = vmatpush1.msra.mxu0 0.0
    %308 = vmatprep.subr.mxu0 0.0
    %309 = vmatpush1.msra.mxu0 0.0
    %310 = vmatprep.subr.mxu0 0.0
    %311 = vmatpush1.msra.mxu0 0.0
    %312 = vmatprep.subr.mxu0 0.0
    %313 = vmatpush1.msra.mxu0 0.0
    %314 = vmatprep.subr.mxu0 0.0
    %315 = vmatpush1.msra.mxu0 0.0
    %316 = vmatprep.subr.mxu0 0.0
    %317 = vmatpush1.msra.mxu0 0.0
    %318 = vmatprep.subr.mxu0 0.0
    %319 = vmatpush1.msra.mxu0 0.0
    %320 = vmatprep.subr.mxu0 0.0
    %321 = vmatpush1.msra.mxu0 0.0
    %322 = vmatprep.subr.mxu0 0.0
    %323 = vmatpush1.msra.mxu0 0.0
    %324 = vmatprep.subr.mxu0 0.0
    %325 = vmatpush1.msra.mxu0 %v286
    %326 = vmatprep.subr.mxu0 0.0
    %327 = vmatpush1.msra.mxu0 %v285
    %328 = vmatprep.subr.mxu0 0.0
    %329 = vmatpush2.msra.mxu0 0.0
    %330 = vmatprep.subr.mxu0 0.0
    %331 = vmatpush2.msra.mxu0 0.0
    %332 = vmatprep.subr.mxu0 0.0
    %333 = vmatpush2.msra.mxu0 0.0
    %334 = vmatprep.subr.mxu0 0.0
    %335 = vmatpush2.msra.mxu0 0.0
    %336 = vmatprep.subr.mxu0 0.0
    %337 = vmatpush2.msra.mxu0 0.0
    %338 = vmatprep.subr.mxu0 0.0
    %339 = vmatpush2.msra.mxu0 0.0
    %340 = vmatprep.subr.mxu0 0.0
    %341 = vmatpush2.msra.mxu0 0.0
    %342 = vmatprep.subr.mxu0 0.0
    %343 = vmatpush2.msra.mxu0 0.0
    %344 = vmatprep.subr.mxu0 0.0
    %345 = vmatpush2.msra.mxu0 0.0
    %346 = vmatprep.subr.mxu0 0.0
    %347 = vmatpush2.msra.mxu0 0.0
    %348 = vmatprep.subr.mxu0 0.0
    %349 = vmatpush2.msra.mxu0 0.0
    %350 = vmatprep.subr.mxu0 0.0
    %351 = vmatpush2.msra.mxu0 0.0
    %352 = vmatprep.subr.mxu0 0.0
    %353 = vmatpush2.msra.mxu0 0.0
    %354 = vmatprep.subr.mxu0 0.0
    %355 = vmatpush2.msra.mxu0 0.0
    %356 = vmatprep.subr.mxu0 0.0
    %357 = vmatpush2.msra.mxu0 0.0
    %358 = vmatprep.subr.mxu0 0.0
    %359 = vmatpush2.msra.mxu0 0.0
    %360 = vmatprep.mubr.f32.mxu0 0.0
    %361 = vmatmul.mubr.f32.gmra.mxu0 %v288
    %v362 = vpop.f32.mrf.mxu0
    %v363 = vadd.f32 0.0, %v362
    %v364 = vpop.f32.mrf.mxu0
    %365 = vmatprep.mubr.f32.mxu0 0.0
    %366 = vmatmul.mubr.f32.gmra.mxu0 %v291
    %v367 = vpop.f32.mrf.mxu0
    %v368 = vadd.f32 0.0, %v367
    %v369 = vpop.f32.mrf.mxu0
    %370 = vmatprep.mubr.f32.mxu0 0.0
    %371 = vmatmul.mubr.f32.gmra.mxu0 %v294
    %v372 = vpop.f32.mrf.mxu0
    %v373 = vadd.f32 0.0, %v372
    %v374 = vpop.f32.mrf.mxu0
    %375 = vdwg.mxu0
    %v376 = vld [vmem:[#allocation6 + $0x10] sm:$0xff]
    %v377 = vld [vmem:[#allocation6 + $0x68] sm:$0xff]
    %v378 = vld [vmem:[#allocation6 + $0x18] sm:$0xff]
    %v379 = vld [vmem:[#allocation6 + $0x70] sm:$0xff]
    %380 = vmatprep.subr.mxu0 0.0
    %381 = vmatpush1.msra.mxu0 0.0
    %382 = vmatprep.subr.mxu0 0.0
    %383 = vmatpush1.msra.mxu0 0.0
    %384 = vmatprep.subr.mxu0 0.0
    %385 = vmatpush1.msra.mxu0 0.0
    %386 = vmatprep.subr.mxu0 0.0
    %387 = vmatpush1.msra.mxu0 0.0
    %388 = vmatprep.subr.mxu0 0.0
    %389 = vmatpush1.msra.mxu0 0.0
    %390 = vmatprep.subr.mxu0 0.0
    %391 = vmatpush1.msra.mxu0 0.0
    %392 = vmatprep.subr.mxu0 0.0
    %393 = vmatpush1.msra.mxu0 0.0
    %394 = vmatprep.subr.mxu0 0.0
    %395 = vmatpush1.msra.mxu0 0.0
    %396 = vmatprep.subr.mxu0 0.0
    %397 = vmatpush1.msra.mxu0 0.0
    %398 = vmatprep.subr.mxu0 0.0
    %399 = vmatpush1.msra.mxu0 0.0
    %400 = vmatprep.subr.mxu0 0.0
    %401 = vmatpush1.msra.mxu0 0.0
    %402 = vmatprep.subr.mxu0 0.0
    %403 = vmatpush1.msra.mxu0 0.0
    %404 = vmatprep.subr.mxu0 0.0
    %405 = vmatpush1.msra.mxu0 0.0
    %406 = vmatprep.subr.mxu0 0.0
    %407 = vmatpush1.msra.mxu0 0.0
    %408 = vmatprep.subr.mxu0 0.0
    %409 = vmatpush1.msra.mxu0 %v379
    %410 = vmatprep.subr.mxu0 0.0
    %411 = vmatpush1.msra.mxu0 %v378
    %412 = vmatprep.subr.mxu0 0.0
    %413 = vmatpush2.msra.mxu0 0.0
    %414 = vmatprep.subr.mxu0 0.0
    %415 = vmatpush2.msra.mxu0 0.0
    %416 = vmatprep.subr.mxu0 0.0
    %417 = vmatpush2.msra.mxu0 0.0
    %418 = vmatprep.subr.mxu0 0.0
    %419 = vmatpush2.msra.mxu0 0.0
    %420 = vmatprep.subr.mxu0 0.0
    %421 = vmatpush2.msra.mxu0 0.0
    %422 = vmatprep.subr.mxu0 0.0
    %423 = vmatpush2.msra.mxu0 0.0
    %424 = vmatprep.subr.mxu0 0.0
    %425 = vmatpush2.msra.mxu0 0.0
    %426 = vmatprep.subr.mxu0 0.0
    %427 = vmatpush2.msra.mxu0 0.0
    %428 = vmatprep.subr.mxu0 0.0
    %429 = vmatpush2.msra.mxu0 0.0
    %430 = vmatprep.subr.mxu0 0.0
    %431 = vmatpush2.msra.mxu0 0.0
    %432 = vmatprep.subr.mxu0 0.0
    %433 = vmatpush2.msra.mxu0 0.0
    %434 = vmatprep.subr.mxu0 0.0
    %435 = vmatpush2.msra.mxu0 0.0
    %436 = vmatprep.subr.mxu0 0.0
    %437 = vmatpush2.msra.mxu0 0.0
    %438 = vmatprep.subr.mxu0 0.0
    %439 = vmatpush2.msra.mxu0 0.0
    %440 = vmatprep.subr.mxu0 0.0
    %441 = vmatpush2.msra.mxu0 0.0
    %442 = vmatprep.subr.mxu0 0.0
    %443 = vmatpush2.msra.mxu0 0.0
    %444 = vmatprep.mubr.f32.mxu0 0.0
    %445 = vmatmul.mubr.f32.gmra.mxu0 %v288
    %v446 = vpop.f32.mrf.mxu0
    %v447 = vadd.f32 0.0, %v446
    %v448 = vpop.f32.mrf.mxu0
    %449 = vmatprep.mubr.f32.mxu0 0.0
    %450 = vmatmul.mubr.f32.gmra.mxu0 %v291
    %v451 = vpop.f32.mrf.mxu0
    %v452 = vadd.f32 0.0, %v451
    %v453 = vpop.f32.mrf.mxu0
    %454 = vmatprep.mubr.f32.mxu0 0.0
    %455 = vmatmul.mubr.f32.gmra.mxu0 %v294
    %v456 = vpop.f32.mrf.mxu0
    %v457 = vadd.f32 0.0, %v456
    %v458 = vpop.f32.mrf.mxu0
    %459 = vdwg.mxu0
    %v460 = vld [vmem:[#allocation6 + $0x20] sm:$0xff]
    %v461 = vld [vmem:[#allocation6 + $0x78] sm:$0xff]
    %v462 = vld [vmem:[#allocation6 + $0xd0] sm:$0xf]
    %vm463 = vcmask 162816
    %v465 = vsel %vm463, %v460, 0
    %v468 = vsel %vm463, %v461, 0
    %v471 = vsel %vm463, %v462, 0
    %vm473 = vcmask 1043456
    %v475 = vsel %vm473, %v373, 0
    %477 = vmatprep.subr.mxu0 0.0
    %478 = vmatpush1.msra.mxu0 0.0
    %479 = vmatprep.subr.mxu0 0.0
    %480 = vmatpush1.msra.mxu0 0.0
    %481 = vmatprep.subr.mxu0 0.0
    %482 = vmatpush1.msra.mxu0 0.0
    %483 = vmatprep.subr.mxu0 0.0
    %484 = vmatpush1.msra.mxu0 0.0
    %485 = vmatprep.subr.mxu0 0.0
    %486 = vmatpush1.msra.mxu0 0.0
    %487 = vmatprep.subr.mxu0 0.0
    %488 = vmatpush1.msra.mxu0 0.0
    %489 = vmatprep.subr.mxu0 0.0
    %490 = vmatpush1.msra.mxu0 0.0
    %491 = vmatprep.subr.mxu0 0.0
    %492 = vmatpush1.msra.mxu0 0.0
    %493 = vmatprep.subr.mxu0 0.0
    %494 = vmatpush1.msra.mxu0 0.0
    %495 = vmatprep.subr.mxu0 0.0
    %496 = vmatpush1.msra.mxu0 0.0
    %497 = vmatprep.subr.mxu0 0.0
    %498 = vmatpush1.msra.mxu0 0.0
    %499 = vmatprep.subr.mxu0 0.0
    %500 = vmatpush1.msra.mxu0 0.0
    %501 = vmatprep.subr.mxu0 0.0
    %502 = vmatpush1.msra.mxu0 0.0
    %503 = vmatprep.subr.mxu0 0.0
    %504 = vmatpush1.msra.mxu0 %v475
    %505 = vmatprep.subr.mxu0 0.0
    %506 = vmatpush1.msra.mxu0 %v368
    %507 = vmatprep.subr.mxu0 0.0
    %508 = vmatpush1.msra.mxu0 %v363
    %509 = vmatprep.subr.mxu0 0.0
    %510 = vmatpush2.msra.mxu0 0.0
    %511 = vmatprep.subr.mxu0 0.0
    %512 = vmatpush2.msra.mxu0 0.0
    %513 = vmatprep.subr.mxu0 0.0
    %514 = vmatpush2.msra.mxu0 0.0
    %515 = vmatprep.subr.mxu0 0.0
    %516 = vmatpush2.msra.mxu0 0.0
    %517 = vmatprep.subr.mxu0 0.0
    %518 = vmatpush2.msra.mxu0 0.0
    %519 = vmatprep.subr.mxu0 0.0
    %520 = vmatpush2.msra.mxu0 0.0
    %521 = vmatprep.subr.mxu0 0.0
    %522 = vmatpush2.msra.mxu0 0.0
    %523 = vmatprep.subr.mxu0 0.0
    %524 = vmatpush2.msra.mxu0 0.0
    %525 = vmatprep.subr.mxu0 0.0
    %526 = vmatpush2.msra.mxu0 0.0
    %527 = vmatprep.subr.mxu0 0.0
    %528 = vmatpush2.msra.mxu0 0.0
    %529 = vmatprep.subr.mxu0 0.0
    %530 = vmatpush2.msra.mxu0 0.0
    %531 = vmatprep.subr.mxu0 0.0
    %532 = vmatpush2.msra.mxu0 0.0
    %533 = vmatprep.subr.mxu0 0.0
    %534 = vmatpush2.msra.mxu0 0.0
    %535 = vmatprep.subr.mxu0 0.0
    %536 = vmatpush2.msra.mxu0 0.0
    %537 = vmatprep.subr.mxu0 0.0
    %538 = vmatpush2.msra.mxu0 0.0
    %539 = vmatprep.subr.mxu0 0.0
    %540 = vmatpush2.msra.mxu0 0.0
    %541 = vmatprep.mubr.f32.mxu0 0.0
    %542 = vmatmul.mubr.f32.gmra.mxu0 %v465
    %v543 = vpop.f32.mrf.mxu0
    %v544 = vadd.f32 0.0, %v543
    %v545 = vpop.f32.mrf.mxu0
    %546 = vmatprep.mubr.f32.mxu0 0.0
    %547 = vmatmul.mubr.f32.gmra.mxu0 %v468
    %v548 = vpop.f32.mrf.mxu0
    %v549 = vadd.f32 0.0, %v548
    %v550 = vpop.f32.mrf.mxu0
    %551 = vmatprep.mubr.f32.mxu0 0.0
    %552 = vmatmul.mubr.f32.gmra.mxu0 %v471
    %v553 = vpop.f32.mrf.mxu0
    %v554 = vadd.f32 0.0, %v553
    %v555 = vpop.f32.mrf.mxu0
    %556 = vdwg.mxu0
    %557 = vmatprep.subr.mxu0 0.0
    %558 = vmatpush1.msra.mxu0 0.0
    %559 = vmatprep.subr.mxu0 0.0
    %560 = vmatpush1.msra.mxu0 0.0
    %561 = vmatprep.subr.mxu0 0.0
    %562 = vmatpush1.msra.mxu0 0.0
    %563 = vmatprep.subr.mxu0 0.0
    %564 = vmatpush1.msra.mxu0 0.0
    %565 = vmatprep.subr.mxu0 0.0
    %566 = vmatpush1.msra.mxu0 0.0
    %567 = vmatprep.subr.mxu0 0.0
    %568 = vmatpush1.msra.mxu0 0.0
    %569 = vmatprep.subr.mxu0 0.0
    %570 = vmatpush1.msra.mxu0 0.0
    %571 = vmatprep.subr.mxu0 0.0
    %572 = vmatpush1.msra.mxu0 0.0
    %573 = vmatprep.subr.mxu0 0.0
    %574 = vmatpush1.msra.mxu0 0.0
    %575 = vmatprep.subr.mxu0 0.0
    %576 = vmatpush1.msra.mxu0 0.0
    %577 = vmatprep.subr.mxu0 0.0
    %578 = vmatpush1.msra.mxu0 0.0
    %579 = vmatprep.subr.mxu0 0.0
    %580 = vmatpush1.msra.mxu0 0.0
    %581 = vmatprep.subr.mxu0 0.0
    %582 = vmatpush1.msra.mxu0 0.0
    %583 = vmatprep.subr.mxu0 0.0
    %584 = vmatpush1.msra.mxu0 0.0
    %585 = vmatprep.subr.mxu0 0.0
    %586 = vmatpush1.msra.mxu0 %v377
    %587 = vmatprep.subr.mxu0 0.0
    %588 = vmatpush1.msra.mxu0 %v376
    %589 = vmatprep.subr.mxu0 0.0
    %590 = vmatpush2.msra.mxu0 0.0
    %591 = vmatprep.subr.mxu0 0.0
    %592 = vmatpush2.msra.mxu0 0.0
    %593 = vmatprep.subr.mxu0 0.0
    %594 = vmatpush2.msra.mxu0 0.0
    %595 = vmatprep.subr.mxu0 0.0
    %596 = vmatpush2.msra.mxu0 0.0
    %597 = vmatprep.subr.mxu0 0.0
    %598 = vmatpush2.msra.mxu0 0.0
    %599 = vmatprep.subr.mxu0 0.0
    %600 = vmatpush2.msra.mxu0 0.0
    %601 = vmatprep.subr.mxu0 0.0
    %602 = vmatpush2.msra.mxu0 0.0
    %603 = vmatprep.subr.mxu0 0.0
    %604 = vmatpush2.msra.mxu0 0.0
    %605 = vmatprep.subr.mxu0 0.0
    %606 = vmatpush2.msra.mxu0 0.0
    %607 = vmatprep.subr.mxu0 0.0
    %608 = vmatpush2.msra.mxu0 0.0
    %609 = vmatprep.subr.mxu0 0.0
    %610 = vmatpush2.msra.mxu0 0.0
    %611 = vmatprep.subr.mxu0 0.0
    %612 = vmatpush2.msra.mxu0 0.0
    %613 = vmatprep.subr.mxu0 0.0
    %614 = vmatpush2.msra.mxu0 0.0
    %615 = vmatprep.subr.mxu0 0.0
    %616 = vmatpush2.msra.mxu0 0.0
    %617 = vmatprep.subr.mxu0 0.0
    %618 = vmatpush2.msra.mxu0 0.0
    %619 = vmatprep.subr.mxu0 0.0
    %620 = vmatpush2.msra.mxu0 0.0
    %621 = vmatprep.mubr.f32.mxu0 0.0
    %622 = vmatmul.mubr.f32.gmra.mxu0 %v288
    %v623 = vpop.f32.mrf.mxu0
    %v624 = vadd.f32 %v544, %v623
    %v625 = vpop.f32.mrf.mxu0
    %626 = vmatprep.mubr.f32.mxu0 0.0
    %627 = vmatmul.mubr.f32.gmra.mxu0 %v291
    %v628 = vpop.f32.mrf.mxu0
    %v629 = vadd.f32 %v549, %v628
    %v630 = vpop.f32.mrf.mxu0
    %631 = vmatprep.mubr.f32.mxu0 0.0
    %632 = vmatmul.mubr.f32.gmra.mxu0 %v294
    %v633 = vpop.f32.mrf.mxu0
    %v634 = vadd.f32 %v554, %v633
    %v635 = vpop.f32.mrf.mxu0
    %636 = vdwg.mxu0
    %v637 = vld [vmem:[#allocation6 + $0x28] sm:$0xff]
    %v638 = vld [vmem:[#allocation6 + $0x80] sm:$0xff]
    %v639 = vld [vmem:[#allocation6 + $0xd8] sm:$0xf]
    %v641 = vsel %vm463, %v637, 0
    %v644 = vsel %vm463, %v638, 0
    %v647 = vsel %vm463, %v639, 0
    %v650 = vsel %vm473, %v457, 0
    %652 = vmatprep.subr.mxu0 0.0
    %653 = vmatpush1.msra.mxu0 0.0
    %654 = vmatprep.subr.mxu0 0.0
    %655 = vmatpush1.msra.mxu0 0.0
    %656 = vmatprep.subr.mxu0 0.0
    %657 = vmatpush1.msra.mxu0 0.0
    %658 = vmatprep.subr.mxu0 0.0
    %659 = vmatpush1.msra.mxu0 0.0
    %660 = vmatprep.subr.mxu0 0.0
    %661 = vmatpush1.msra.mxu0 0.0
    %662 = vmatprep.subr.mxu0 0.0
    %663 = vmatpush1.msra.mxu0 0.0
    %664 = vmatprep.subr.mxu0 0.0
    %665 = vmatpush1.msra.mxu0 0.0
    %666 = vmatprep.subr.mxu0 0.0
    %667 = vmatpush1.msra.mxu0 0.0
    %668 = vmatprep.subr.mxu0 0.0
    %669 = vmatpush1.msra.mxu0 0.0
    %670 = vmatprep.subr.mxu0 0.0
    %671 = vmatpush1.msra.mxu0 0.0
    %672 = vmatprep.subr.mxu0 0.0
    %673 = vmatpush1.msra.mxu0 0.0
    %674 = vmatprep.subr.mxu0 0.0
    %675 = vmatpush1.msra.mxu0 0.0
    %676 = vmatprep.subr.mxu0 0.0
    %677 = vmatpush1.msra.mxu0 0.0
    %678 = vmatprep.subr.mxu0 0.0
    %679 = vmatpush1.msra.mxu0 %v650
    %680 = vmatprep.subr.mxu0 0.0
    %681 = vmatpush1.msra.mxu0 %v452
    %682 = vmatprep.subr.mxu0 0.0
    %683 = vmatpush1.msra.mxu0 %v447
    %684 = vmatprep.subr.mxu0 0.0
    %685 = vmatpush2.msra.mxu0 0.0
    %686 = vmatprep.subr.mxu0 0.0
    %687 = vmatpush2.msra.mxu0 0.0
    %688 = vmatprep.subr.mxu0 0.0
    %689 = vmatpush2.msra.mxu0 0.0
    %690 = vmatprep.subr.mxu0 0.0
    %691 = vmatpush2.msra.mxu0 0.0
    %692 = vmatprep.subr.mxu0 0.0
    %693 = vmatpush2.msra.mxu0 0.0
    %694 = vmatprep.subr.mxu0 0.0
    %695 = vmatpush2.msra.mxu0 0.0
    %696 = vmatprep.subr.mxu0 0.0
    %697 = vmatpush2.msra.mxu0 0.0
    %698 = vmatprep.subr.mxu0 0.0
    %699 = vmatpush2.msra.mxu0 0.0
    %700 = vmatprep.subr.mxu0 0.0
    %701 = vmatpush2.msra.mxu0 0.0
    %702 = vmatprep.subr.mxu0 0.0
    %703 = vmatpush2.msra.mxu0 0.0
    %704 = vmatprep.subr.mxu0 0.0
    %705 = vmatpush2.msra.mxu0 0.0
    %706 = vmatprep.subr.mxu0 0.0
    %707 = vmatpush2.msra.mxu0 0.0
    %708 = vmatprep.subr.mxu0 0.0
    %709 = vmatpush2.msra.mxu0 0.0
    %710 = vmatprep.subr.mxu0 0.0
    %711 = vmatpush2.msra.mxu0 0.0
    %712 = vmatprep.subr.mxu0 0.0
    %713 = vmatpush2.msra.mxu0 0.0
    %714 = vmatprep.subr.mxu0 0.0
    %715 = vmatpush2.msra.mxu0 0.0
    %716 = vmatprep.mubr.f32.mxu0 0.0
    %717 = vmatmul.mubr.f32.gmra.mxu0 %v641
    %v718 = vpop.f32.mrf.mxu0
    %v719 = vadd.f32 0.0, %v718
    %v720 = vpop.f32.mrf.mxu0
    %721 = vmatprep.mubr.f32.mxu0 0.0
    %722 = vmatmul.mubr.f32.gmra.mxu0 %v644
    %v723 = vpop.f32.mrf.mxu0
    %v724 = vadd.f32 0.0, %v723
    %v725 = vpop.f32.mrf.mxu0
    %726 = vmatprep.mubr.f32.mxu0 0.0
    %727 = vmatmul.mubr.f32.gmra.mxu0 %v647
    %v728 = vpop.f32.mrf.mxu0
    %v729 = vadd.f32 0.0, %v728
    %v730 = vpop.f32.mrf.mxu0
    %731 = vdwg.mxu0
    %v732 = vadd.f32 %v624, %v719
    %v733 = vadd.f32 %v629, %v724
    %v734 = vadd.f32 %v634, %v729
    %v735 = vld [vmem:[%s4 + $0x1a] sm:$0x1]
    %v737 = vlaneseq
    %v738 = vshrl.u32 %v737, 7
    %v739 = vsub.s32 0, %v738
    %v740 = vrot.slane %v735, %v739
    %v742 = vadd.f32 %v732, %v740
    %v743 = vadd.f32 %v733, %v740
    %v744 = vadd.f32 %v734, %v740
    %v745 = vmax.f32 %v742, 0.0
    %v746 = vmax.f32 %v743, 0.0
    %v747 = vmax.f32 %v744, 0.0
    %748 = vst.msk [vmem:[%s7] sm:$0xff] %vm78, %v745
    %749 = vst.msk [vmem:[%s7 + $0x8] sm:$0xff] %vm78, %v746
    %vm750 = vcmask 519168
    %751 = vst.msk [vmem:[%s7 + $0x10] sm:$0xf] %vm750, %v747
    %v752 = vld [vmem:[#allocation4 + $0x8] sm:$0xff]
    %v753 = vld [vmem:[#allocation4 + $0x28] sm:$0xff]
    %v754 = vld [vmem:[#allocation4 + $0x48] sm:$0xff]
    %v755 = vld [vmem:[#allocation4 + $0x68] sm:$0xff]
    %v756 = vld [vmem:[#allocation4 + $0x88] sm:$0xff]
    %v757 = vld [vmem:[#allocation4 + $0xa8] sm:$0xff]
    %v758 = vld [vmem:[#allocation4 + $0xc8] sm:$0xff]
    %v759 = vld [vmem:[#allocation4 + $0xe8] sm:$0xff]
    %v760 = vld [vmem:[#allocation6 + $0x30] sm:$0xff]
    %v761 = vld [vmem:[#allocation6 + $0x88] sm:$0xff]
    %v762 = vld [vmem:[#allocation6 + $0xe0] sm:$0xf]
    %v764 = vsel %vm78, %v745, 0
    %v767 = vsel %vm78, %v746, 0
    %v770 = vsel %vm78, %v747, 0
    %772 = vmatprep.subr.mxu0 0.0
    %773 = vmatpush1.msra.mxu0 0.0
    %774 = vmatprep.subr.mxu0 0.0
    %775 = vmatpush1.msra.mxu0 0.0
    %776 = vmatprep.subr.mxu0 0.0
    %777 = vmatpush1.msra.mxu0 0.0
    %778 = vmatprep.subr.mxu0 0.0
    %779 = vmatpush1.msra.mxu0 0.0
    %780 = vmatprep.subr.mxu0 0.0
    %781 = vmatpush1.msra.mxu0 0.0
    %782 = vmatprep.subr.mxu0 0.0
    %783 = vmatpush1.msra.mxu0 0.0
    %784 = vmatprep.subr.mxu0 0.0
    %785 = vmatpush1.msra.mxu0 0.0
    %786 = vmatprep.subr.mxu0 0.0
    %787 = vmatpush1.msra.mxu0 0.0
    %788 = vmatprep.subr.mxu0 0.0
    %789 = vmatpush1.msra.mxu0 %v759
    %790 = vmatprep.subr.mxu0 0.0
    %791 = vmatpush1.msra.mxu0 %v758
    %792 = vmatprep.subr.mxu0 0.0
    %793 = vmatpush1.msra.mxu0 %v757
    %794 = vmatprep.subr.mxu0 0.0
    %795 = vmatpush1.msra.mxu0 %v756
    %796 = vmatprep.subr.mxu0 0.0
    %797 = vmatpush1.msra.mxu0 %v755
    %798 = vmatprep.subr.mxu0 0.0
    %799 = vmatpush1.msra.mxu0 %v754
    %800 = vmatprep.subr.mxu0 0.0
    %801 = vmatpush1.msra.mxu0 %v753
    %802 = vmatprep.subr.mxu0 0.0
    %803 = vmatpush1.msra.mxu0 %v752
    %804 = vmatprep.subr.mxu0 0.0
    %805 = vmatpush2.msra.mxu0 0.0
    %806 = vmatprep.subr.mxu0 0.0
    %807 = vmatpush2.msra.mxu0 0.0
    %808 = vmatprep.subr.mxu0 0.0
    %809 = vmatpush2.msra.mxu0 0.0
    %810 = vmatprep.subr.mxu0 0.0
    %811 = vmatpush2.msra.mxu0 0.0
    %812 = vmatprep.subr.mxu0 0.0
    %813 = vmatpush2.msra.mxu0 0.0
    %814 = vmatprep.subr.mxu0 0.0
    %815 = vmatpush2.msra.mxu0 0.0
    %816 = vmatprep.subr.mxu0 0.0
    %817 = vmatpush2.msra.mxu0 0.0
    %818 = vmatprep.subr.mxu0 0.0
    %819 = vmatpush2.msra.mxu0 0.0
    %820 = vmatprep.subr.mxu0 0.0
    %821 = vmatpush2.msra.mxu0 0.0
    %822 = vmatprep.subr.mxu0 0.0
    %823 = vmatpush2.msra.mxu0 0.0
    %824 = vmatprep.subr.mxu0 0.0
    %825 = vmatpush2.msra.mxu0 0.0
    %826 = vmatprep.subr.mxu0 0.0
    %827 = vmatpush2.msra.mxu0 0.0
    %828 = vmatprep.subr.mxu0 0.0
    %829 = vmatpush2.msra.mxu0 0.0
    %830 = vmatprep.subr.mxu0 0.0
    %831 = vmatpush2.msra.mxu0 0.0
    %832 = vmatprep.subr.mxu0 0.0
    %833 = vmatpush2.msra.mxu0 0.0
    %834 = vmatprep.subr.mxu0 0.0
    %835 = vmatpush2.msra.mxu0 0.0
    %836 = vmatprep.mubr.f32.mxu0 0.0
    %837 = vmatmul.mubr.f32.gmra.mxu0 %v764
    %v838 = vpop.f32.mrf.mxu0
    %v839 = vadd.f32 %v760, %v838
    %v840 = vpop.f32.mrf.mxu0
    %841 = vmatprep.mubr.f32.mxu0 0.0
    %842 = vmatmul.mubr.f32.gmra.mxu0 %v767
    %v843 = vpop.f32.mrf.mxu0
    %v844 = vadd.f32 %v761, %v843
    %v845 = vpop.f32.mrf.mxu0
    %846 = vmatprep.mubr.f32.mxu0 0.0
    %847 = vmatmul.mubr.f32.gmra.mxu0 %v770
    %v848 = vpop.f32.mrf.mxu0
    %v849 = vadd.f32 %v762, %v848
    %v850 = vpop.f32.mrf.mxu0
    %851 = vdwg.mxu0
    %v852 = vld [vmem:[%s1] sm:$0xff]
    %v853 = vld [vmem:[%s1 + $0x8] sm:$0x3]
    %v854 = vlaneseq
    %v855 = vand.u32 %v854, 127
    %856 = vset.pattern.permute.xlu0 0
    %857 = vperm.xlu0 %856, %v852
    %v858 = vpop.permute.xlu0 %857
    %859 = vset.pattern.permute.xlu0 0
    %860 = vperm.xlu0 %859, %v853
    %v861 = vpop.permute.xlu0 %860
    %vm862 = vcmp.eq.s32.totalorder %v855, %v858
    %vm863 = vcmp.eq.s32.totalorder %v855, %v861
    %v864 = vsel %vm862, 1, 0
    %v865 = vsel %vm863, 1, 0
    %v866 = vcvt.s32.f32 %v864
    %v867 = vcvt.s32.f32 %v865
    %v868 = vld [vmem:[#allocation6 + $0x38] sm:$0x3f]
    %vm869 = vcmask 48128
    %v871 = vsel %vm869, %v866, 0
    %v874 = vsel %vm869, %v867, 0
    %vm876 = vcmask 1045504
    %v878 = vsel %vm876, %v868, 0
    %880 = vmatprep.subr.mxu0 0.0
    %881 = vmatpush1.msra.mxu0 0.0
    %882 = vmatprep.subr.mxu0 0.0
    %883 = vmatpush1.msra.mxu0 0.0
    %884 = vmatprep.subr.mxu0 0.0
    %885 = vmatpush1.msra.mxu0 0.0
    %886 = vmatprep.subr.mxu0 0.0
    %887 = vmatpush1.msra.mxu0 0.0
    %888 = vmatprep.subr.mxu0 0.0
    %889 = vmatpush1.msra.mxu0 0.0
    %890 = vmatprep.subr.mxu0 0.0
    %891 = vmatpush1.msra.mxu0 0.0
    %892 = vmatprep.subr.mxu0 0.0
    %893 = vmatpush1.msra.mxu0 0.0
    %894 = vmatprep.subr.mxu0 0.0
    %895 = vmatpush1.msra.mxu0 0.0
    %896 = vmatprep.subr.mxu0 0.0
    %897 = vmatpush1.msra.mxu0 0.0
    %898 = vmatprep.subr.mxu0 0.0
    %899 = vmatpush1.msra.mxu0 0.0
    %900 = vmatprep.subr.mxu0 0.0
    %901 = vmatpush1.msra.mxu0 0.0
    %902 = vmatprep.subr.mxu0 0.0
    %903 = vmatpush1.msra.mxu0 0.0
    %904 = vmatprep.subr.mxu0 0.0
    %905 = vmatpush1.msra.mxu0 0.0
    %906 = vmatprep.subr.mxu0 0.0
    %907 = vmatpush1.msra.mxu0 0.0
    %908 = vmatprep.subr.mxu0 0.0
    %909 = vmatpush1.msra.mxu0 0.0
    %910 = vmatprep.subr.mxu0 0.0
    %911 = vmatpush1.msra.mxu0 %v878
    %912 = vmatprep.subr.mxu0 0.0
    %913 = vmatpush2.msra.mxu0 0.0
    %914 = vmatprep.subr.mxu0 0.0
    %915 = vmatpush2.msra.mxu0 0.0
    %916 = vmatprep.subr.mxu0 0.0
    %917 = vmatpush2.msra.mxu0 0.0
    %918 = vmatprep.subr.mxu0 0.0
    %919 = vmatpush2.msra.mxu0 0.0
    %920 = vmatprep.subr.mxu0 0.0
    %921 = vmatpush2.msra.mxu0 0.0
    %922 = vmatprep.subr.mxu0 0.0
    %923 = vmatpush2.msra.mxu0 0.0
    %924 = vmatprep.subr.mxu0 0.0
    %925 = vmatpush2.msra.mxu0 0.0
    %926 = vmatprep.subr.mxu0 0.0
    %927 = vmatpush2.msra.mxu0 0.0
    %928 = vmatprep.subr.mxu0 0.0
    %929 = vmatpush2.msra.mxu0 0.0
    %930 = vmatprep.subr.mxu0 0.0
    %931 = vmatpush2.msra.mxu0 0.0
    %932 = vmatprep.subr.mxu0 0.0
    %933 = vmatpush2.msra.mxu0 0.0
    %934 = vmatprep.subr.mxu0 0.0
    %935 = vmatpush2.msra.mxu0 0.0
    %936 = vmatprep.subr.mxu0 0.0
    %937 = vmatpush2.msra.mxu0 0.0
    %938 = vmatprep.subr.mxu0 0.0
    %939 = vmatpush2.msra.mxu0 0.0
    %940 = vmatprep.subr.mxu0 0.0
    %941 = vmatpush2.msra.mxu0 0.0
    %942 = vmatprep.subr.mxu0 0.0
    %943 = vmatpush2.msra.mxu0 0.0
    %944 = vmatprep.mubr.f32.mxu0 0.0
    %945 = vmatmul.mubr.f32.gmra.mxu0 %v871
    %v946 = vpop.f32.mrf.mxu0
    %v947 = vadd.f32 0.0, %v946
    %v948 = vpop.f32.mrf.mxu0
    %949 = vmatprep.mubr.f32.mxu0 0.0
    %950 = vmatmul.mubr.f32.gmra.mxu0 %v874
    %v951 = vpop.f32.mrf.mxu0
    %v952 = vadd.f32 0.0, %v951
    %v953 = vpop.f32.mrf.mxu0
    %954 = vdwg.mxu0
    %v955 = vld [vmem:[#allocation6 + $0x40] sm:$0xff]
    %v956 = vld [vmem:[#allocation6 + $0x98] sm:$0xff]
    %v957 = vld [vmem:[#allocation6 + $0xf0] sm:$0xf]
    %v958 = vld [vmem:[#allocation6 + $0x48] sm:$0xff]
    %v959 = vld [vmem:[#allocation6 + $0xa0] sm:$0x3]
    %v960 = vld [vmem:[#allocation6 + $0x50] sm:$0xff]
    %v961 = vld [vmem:[#allocation6 + $0xa8] sm:$0x3]
    %v962 = vld [vmem:[#allocation2] sm:$0xff]
    %v963 = vld [vmem:[#allocation2 + $0x50] sm:$0xff]
    %v964 = vld [vmem:[#allocation2 + $0xa0] sm:$0xff]
    %v965 = vld [vmem:[#allocation2 + $0xf0] sm:$0xff]
    %v966 = vld [vmem:[%s4] sm:$0x1]
    %v968 = vlaneseq
    %v969 = vshrl.u32 %v968, 7
    %v970 = vsub.s32 0, %v969
    %v971 = vrot.slane %v966, %v970
    %vm973 = vcmask 261120
    %v975 = vsel %vm973, %v839, 0
    %v978 = vsel %vm973, %v844, 0
    %v981 = vsel %vm973, %v849, 0
    %983 = vmatprep.subr.mxu0 0.0
    %984 = vmatpush1.msra.mxu0 0.0
    %985 = vmatprep.subr.mxu0 0.0
    %986 = vmatpush1.msra.mxu0 0.0
    %987 = vmatprep.subr.mxu0 0.0
    %988 = vmatpush1.msra.mxu0 0.0
    %989 = vmatprep.subr.mxu0 0.0
    %990 = vmatpush1.msra.mxu0 0.0
    %991 = vmatprep.subr.mxu0 0.0
    %992 = vmatpush1.msra.mxu0 0.0
    %993 = vmatprep.subr.mxu0 0.0
    %994 = vmatpush1.msra.mxu0 0.0
    %995 = vmatprep.subr.mxu0 0.0
    %996 = vmatpush1.msra.mxu0 0.0
    %997 = vmatprep.subr.mxu0 0.0
    %998 = vmatpush1.msra.mxu0 0.0
    %999 = vmatprep.subr.mxu0 0.0
    %1000 = vmatpush1.msra.mxu0 0.0
    %1001 = vmatprep.subr.mxu0 0.0
    %1002 = vmatpush1.msra.mxu0 0.0
    %1003 = vmatprep.subr.mxu0 0.0
    %1004 = vmatpush1.msra.mxu0 0.0
    %1005 = vmatprep.subr.mxu0 0.0
    %1006 = vmatpush1.msra.mxu0 0.0
    %1007 = vmatprep.subr.mxu0 0.0
    %1008 = vmatpush1.msra.mxu0 %v965
    %1009 = vmatprep.subr.mxu0 0.0
    %1010 = vmatpush1.msra.mxu0 %v964
    %1011 = vmatprep.subr.mxu0 0.0
    %1012 = vmatpush1.msra.mxu0 %v963
    %1013 = vmatprep.subr.mxu0 0.0
    %1014 = vmatpush1.msra.mxu0 %v962
    %1015 = vmatprep.subr.mxu0 0.0
    %1016 = vmatpush2.msra.mxu0 0.0
    %1017 = vmatprep.subr.mxu0 0.0
    %1018 = vmatpush2.msra.mxu0 0.0
    %1019 = vmatprep.subr.mxu0 0.0
    %1020 = vmatpush2.msra.mxu0 0.0
    %1021 = vmatprep.subr.mxu0 0.0
    %1022 = vmatpush2.msra.mxu0 0.0
    %1023 = vmatprep.subr.mxu0 0.0
    %1024 = vmatpush2.msra.mxu0 0.0
    %1025 = vmatprep.subr.mxu0 0.0
    %1026 = vmatpush2.msra.mxu0 0.0
    %1027 = vmatprep.subr.mxu0 0.0
    %1028 = vmatpush2.msra.mxu0 0.0
    %1029 = vmatprep.subr.mxu0 0.0
    %1030 = vmatpush2.msra.mxu0 0.0
    %1031 = vmatprep.subr.mxu0 0.0
    %1032 = vmatpush2.msra.mxu0 0.0
    %1033 = vmatprep.subr.mxu0 0.0
    %1034 = vmatpush2.msra.mxu0 0.0
    %1035 = vmatprep.subr.mxu0 0.0
    %1036 = vmatpush2.msra.mxu0 0.0
    %1037 = vmatprep.subr.mxu0 0.0
    %1038 = vmatpush2.msra.mxu0 0.0
    %1039 = vmatprep.subr.mxu0 0.0
    %1040 = vmatpush2.msra.mxu0 0.0
    %1041 = vmatprep.subr.mxu0 0.0
    %1042 = vmatpush2.msra.mxu0 0.0
    %1043 = vmatprep.subr.mxu0 0.0
    %1044 = vmatpush2.msra.mxu0 0.0
    %1045 = vmatprep.subr.mxu0 0.0
    %1046 = vmatpush2.msra.mxu0 0.0
    %1047 = vmatprep.mubr.f32.mxu0 0.0
    %1048 = vmatmul.mubr.f32.gmra.mxu0 %v975
    %v1049 = vpop.f32.mrf.mxu0
    %v1050 = vadd.f32 %v971, %v1049
    %v1051 = vpop.f32.mrf.mxu0
    %1052 = vmatprep.mubr.f32.mxu0 0.0
    %1053 = vmatmul.mubr.f32.gmra.mxu0 %v978
    %v1054 = vpop.f32.mrf.mxu0
    %v1055 = vadd.f32 %v971, %v1054
    %v1056 = vpop.f32.mrf.mxu0
    %1057 = vmatprep.mubr.f32.mxu0 0.0
    %1058 = vmatmul.mubr.f32.gmra.mxu0 %v981
    %v1059 = vpop.f32.mrf.mxu0
    %v1060 = vadd.f32 %v971, %v1059
    %v1061 = vpop.f32.mrf.mxu0
    %1062 = vdwg.mxu0
    %v1063 = vld [vmem:[#allocation2 + $0x8] sm:$0xff]
    %v1064 = vld [vmem:[#allocation2 + $0x58] sm:$0xff]
    %v1065 = vld [vmem:[#allocation2 + $0xa8] sm:$0xff]
    %v1066 = vld [vmem:[#allocation2 + $0xf8] sm:$0xff]
    %v1067 = vld [vmem:[%s4 + $0x1] sm:$0x1]
    %v1068 = vmul.f32 %v1050, 0.25
    %v1069 = vmul.f32 %v1055, 0.25
    %v1070 = vmul.f32 %v1060, 0.25
    %1074 = vrot.lane.b32.xlu0 %v1050, 96
    %v1075 = vpop.permute.xlu0 %1074
    %1076 = vrot.lane.b32.xlu0 %v1055, 96
    %v1077 = vpop.permute.xlu0 %1076
    %1078 = vrot.lane.b32.xlu0 %v1060, 96
    %v1079 = vpop.permute.xlu0 %1078
    %v1081 = vsel %vm280, %v1068, 0
    %v1084 = vsel %vm280, %v1069, 0
    %v1087 = vsel %vm280, %v1070, 0
    %v1089 = vsel %vm280, %v1075, 0
    %v1091 = vsel %vm280, %v1077, 0
    %v1093 = vsel %vm280, %v1079, 0
    %1095 = vmatprep.subr.mxu0 0.0
    %1096 = vmatpush1.xpose.msra.mxu0 0.0
    %1097 = vmatprep.subr.mxu0 0.0
    %1098 = vmatpush1.xpose.msra.mxu0 0.0
    %1099 = vmatprep.subr.mxu0 0.0
    %1100 = vmatpush1.xpose.msra.mxu0 0.0
    %1101 = vmatprep.subr.mxu0 0.0
    %1102 = vmatpush1.xpose.msra.mxu0 0.0
    %1103 = vmatprep.subr.mxu0 0.0
    %1104 = vmatpush1.xpose.msra.mxu0 0.0
    %1105 = vmatprep.subr.mxu0 0.0
    %1106 = vmatpush1.xpose.msra.mxu0 0.0
    %1107 = vmatprep.subr.mxu0 0.0
    %1108 = vmatpush1.xpose.msra.mxu0 0.0
    %1109 = vmatprep.subr.mxu0 0.0
    %1110 = vmatpush1.xpose.msra.mxu0 0.0
    %1111 = vmatprep.subr.mxu0 0.0
    %1112 = vmatpush1.xpose.msra.mxu0 0.0
    %1113 = vmatprep.subr.mxu0 0.0
    %1114 = vmatpush1.xpose.msra.mxu0 0.0
    %1115 = vmatprep.subr.mxu0 0.0
    %1116 = vmatpush1.xpose.msra.mxu0 0.0
    %1117 = vmatprep.subr.mxu0 0.0
    %1118 = vmatpush1.xpose.msra.mxu0 0.0
    %1119 = vmatprep.subr.mxu0 0.0
    %1120 = vmatpush1.xpose.msra.mxu0 0.0
    %1121 = vmatprep.subr.mxu0 0.0
    %1122 = vmatpush1.xpose.msra.mxu0 %v1093
    %1123 = vmatprep.subr.mxu0 0.0
    %1124 = vmatpush1.xpose.msra.mxu0 %v1091
    %1125 = vmatprep.subr.mxu0 0.0
    %1126 = vmatpush1.xpose.msra.mxu0 %v1089
    %1127 = vmatprep.subr.mxu0 0.0
    %1128 = vmatpush2.xpose.msra.mxu0 0.0
    %1129 = vmatprep.subr.mxu0 0.0
    %1130 = vmatpush2.xpose.msra.mxu0 0.0
    %1131 = vmatprep.subr.mxu0 0.0
    %1132 = vmatpush2.xpose.msra.mxu0 0.0
    %1133 = vmatprep.subr.mxu0 0.0
    %1134 = vmatpush2.xpose.msra.mxu0 0.0
    %1135 = vmatprep.subr.mxu0 0.0
    %1136 = vmatpush2.xpose.msra.mxu0 0.0
    %1137 = vmatprep.subr.mxu0 0.0
    %1138 = vmatpush2.xpose.msra.mxu0 0.0
    %1139 = vmatprep.subr.mxu0 0.0
    %1140 = vmatpush2.xpose.msra.mxu0 0.0
    %1141 = vmatprep.subr.mxu0 0.0
    %1142 = vmatpush2.xpose.msra.mxu0 0.0
    %1143 = vmatprep.subr.mxu0 0.0
    %1144 = vmatpush2.xpose.msra.mxu0 0.0
    %1145 = vmatprep.subr.mxu0 0.0
    %1146 = vmatpush2.xpose.msra.mxu0 0.0
    %1147 = vmatprep.subr.mxu0 0.0
    %1148 = vmatpush2.xpose.msra.mxu0 0.0
    %1149 = vmatprep.subr.mxu0 0.0
    %1150 = vmatpush2.xpose.msra.mxu0 0.0
    %1151 = vmatprep.subr.mxu0 0.0
    %1152 = vmatpush2.xpose.msra.mxu0 0.0
    %1153 = vmatprep.subr.mxu0 0.0
    %1154 = vmatpush2.xpose.msra.mxu0 0.0
    %1155 = vmatprep.subr.mxu0 0.0
    %1156 = vmatpush2.xpose.msra.mxu0 0.0
    %1157 = vmatprep.subr.mxu0 0.0
    %1158 = vmatpush2.xpose.msra.mxu0 0.0
    %1159 = vmatprep.mubr.f32.mxu0 0.0
    %1160 = vmatmul.mubr.f32.gmra.mxu0 %v1081
    %v1161 = vpop.f32.mrf.mxu0
    %v1162 = vadd.f32 %v955, %v1161
    %v1163 = vpop.f32.mrf.mxu0
    %1164 = vmatprep.mubr.f32.mxu0 0.0
    %1165 = vmatmul.mubr.f32.gmra.mxu0 %v1084
    %v1166 = vpop.f32.mrf.mxu0
    %v1167 = vadd.f32 %v956, %v1166
    %v1168 = vpop.f32.mrf.mxu0
    %1169 = vmatprep.mubr.f32.mxu0 0.0
    %1170 = vmatmul.mubr.f32.gmra.mxu0 %v1087
    %v1171 = vpop.f32.mrf.mxu0
    %v1172 = vadd.f32 %v957, %v1171
    %v1173 = vpop.f32.mrf.mxu0
    %1174 = vdwg.mxu0
    %v1175 = vsel %vm463, %v1162, -inf
    %1176 = vmax.xlane.f32.xlu0 %v1175
    %v1177 = vpop.xlane.xlu0 %1176
    %v1178 = vsel %vm463, %v1167, -inf
    %1179 = vmax.xlane.f32.xlu0 %v1178
    %v1180 = vpop.xlane.xlu0 %1179
    %vm1181 = vcmask 158720
    %v1182 = vsel %vm1181, %v1172, -inf
    %1183 = vmax.xlane.f32.xlu0 %v1182
    %v1184 = vpop.xlane.xlu0 %1183
    %v1185 = vsub.f32 %v1162, %v1177
    %v1186 = vsub.f32 %v1167, %v1180
    %v1187 = vsub.f32 %v1172, %v1184
    %v1188 = vmul.f32 %v1185, 1.442695
    %v1189 = vpow.pop %v1188
    %v1190 = vmul.f32 %v1186, 1.442695
    %v1191 = vpow.pop %v1190
    %v1192 = vmul.f32 %v1187, 1.442695
    %v1193 = vpow.pop %v1192
    %v1194 = vsel %vm463, %v1189, 0.0
    %1195 = vadd.xlane.f32.xlu0 %v1194
    %v1196 = vpop.xlane.xlu0 %1195
    %v1197 = vsel %vm463, %v1191, 0.0
    %1198 = vadd.xlane.f32.xlu0 %v1197
    %v1199 = vpop.xlane.xlu0 %1198
    %v1200 = vsel %vm1181, %v1193, 0.0
    %1201 = vadd.xlane.f32.xlu0 %v1200
    %v1202 = vpop.xlane.xlu0 %1201
    %v1203 = vrcp.pop %v1196
    %v1204 = vrcp.pop %v1199
    %v1205 = vrcp.pop %v1202
    %v1206 = vmul.f32 %v1189, %v1203
    %v1207 = vmul.f32 %v1191, %v1204
    %v1208 = vmul.f32 %v1193, %v1205
    %1209 = vrot.lane.b32.xlu0 %v1050, 64
    %v1210 = vpop.permute.xlu0 %1209
    %1211 = vrot.lane.b32.xlu0 %v1055, 64
    %v1212 = vpop.permute.xlu0 %1211
    %1213 = vrot.lane.b32.xlu0 %v1060, 64
    %v1214 = vpop.permute.xlu0 %1213
    %v1218 = vsel %vm463, %v1206, 0
    %v1221 = vsel %vm463, %v1207, 0
    %v1224 = vsel %vm463, %v1208, 0
    %v1226 = vsel %vm473, %v1214, 0
    %1228 = vmatprep.subr.mxu0 0.0
    %1229 = vmatpush1.msra.mxu0 0.0
    %1230 = vmatprep.subr.mxu0 0.0
    %1231 = vmatpush1.msra.mxu0 0.0
    %1232 = vmatprep.subr.mxu0 0.0
    %1233 = vmatpush1.msra.mxu0 0.0
    %1234 = vmatprep.subr.mxu0 0.0
    %1235 = vmatpush1.msra.mxu0 0.0
    %1236 = vmatprep.subr.mxu0 0.0
    %1237 = vmatpush1.msra.mxu0 0.0
    %1238 = vmatprep.subr.mxu0 0.0
    %1239 = vmatpush1.msra.mxu0 0.0
    %1240 = vmatprep.subr.mxu0 0.0
    %1241 = vmatpush1.msra.mxu0 0.0
    %1242 = vmatprep.subr.mxu0 0.0
    %1243 = vmatpush1.msra.mxu0 0.0
    %1244 = vmatprep.subr.mxu0 0.0
    %1245 = vmatpush1.msra.mxu0 0.0
    %1246 = vmatprep.subr.mxu0 0.0
    %1247 = vmatpush1.msra.mxu0 0.0
    %1248 = vmatprep.subr.mxu0 0.0
    %1249 = vmatpush1.msra.mxu0 0.0
    %1250 = vmatprep.subr.mxu0 0.0
    %1251 = vmatpush1.msra.mxu0 0.0
    %1252 = vmatprep.subr.mxu0 0.0
    %1253 = vmatpush1.msra.mxu0 0.0
    %1254 = vmatprep.subr.mxu0 0.0
    %1255 = vmatpush1.msra.mxu0 %v1226
    %1256 = vmatprep.subr.mxu0 0.0
    %1257 = vmatpush1.msra.mxu0 %v1212
    %1258 = vmatprep.subr.mxu0 0.0
    %1259 = vmatpush1.msra.mxu0 %v1210
    %1260 = vmatprep.subr.mxu0 0.0
    %1261 = vmatpush2.msra.mxu0 0.0
    %1262 = vmatprep.subr.mxu0 0.0
    %1263 = vmatpush2.msra.mxu0 0.0
    %1264 = vmatprep.subr.mxu0 0.0
    %1265 = vmatpush2.msra.mxu0 0.0
    %1266 = vmatprep.subr.mxu0 0.0
    %1267 = vmatpush2.msra.mxu0 0.0
    %1268 = vmatprep.subr.mxu0 0.0
    %1269 = vmatpush2.msra.mxu0 0.0
    %1270 = vmatprep.subr.mxu0 0.0
    %1271 = vmatpush2.msra.mxu0 0.0
    %1272 = vmatprep.subr.mxu0 0.0
    %1273 = vmatpush2.msra.mxu0 0.0
    %1274 = vmatprep.subr.mxu0 0.0
    %1275 = vmatpush2.msra.mxu0 0.0
    %1276 = vmatprep.subr.mxu0 0.0
    %1277 = vmatpush2.msra.mxu0 0.0
    %1278 = vmatprep.subr.mxu0 0.0
    %1279 = vmatpush2.msra.mxu0 0.0
    %1280 = vmatprep.subr.mxu0 0.0
    %1281 = vmatpush2.msra.mxu0 0.0
    %1282 = vmatprep.subr.mxu0 0.0
    %1283 = vmatpush2.msra.mxu0 0.0
    %1284 = vmatprep.subr.mxu0 0.0
    %1285 = vmatpush2.msra.mxu0 0.0
    %1286 = vmatprep.subr.mxu0 0.0
    %1287 = vmatpush2.msra.mxu0 0.0
    %1288 = vmatprep.subr.mxu0 0.0
    %1289 = vmatpush2.msra.mxu0 0.0
    %1290 = vmatprep.subr.mxu0 0.0
    %1291 = vmatpush2.msra.mxu0 0.0
    %1292 = vmatprep.mubr.f32.mxu0 0.0
    %1293 = vmatmul.mubr.f32.gmra.mxu0 %v1218
    %v1294 = vpop.f32.mrf.mxu0
    %v1295 = vadd.f32 0.0, %v1294
    %v1296 = vpop.f32.mrf.mxu0
    %1297 = vmatprep.mubr.f32.mxu0 0.0
    %1298 = vmatmul.mubr.f32.gmra.mxu0 %v1221
    %v1299 = vpop.f32.mrf.mxu0
    %v1300 = vadd.f32 0.0, %v1299
    %v1301 = vpop.f32.mrf.mxu0
    %1302 = vmatprep.mubr.f32.mxu0 0.0
    %1303 = vmatmul.mubr.f32.gmra.mxu0 %v1224
    %v1304 = vpop.f32.mrf.mxu0
    %v1305 = vadd.f32 0.0, %v1304
    %v1306 = vpop.f32.mrf.mxu0
    %1307 = vdwg.mxu0
    %1308 = vrot.lane.b32.xlu0 %v1068, 112
    %v1309 = vpop.permute.xlu0 %1308
    %1310 = vrot.lane.b32.xlu0 %v1069, 112
    %v1311 = vpop.permute.xlu0 %1310
    %1312 = vrot.lane.b32.xlu0 %v1070, 112
    %v1313 = vpop.permute.xlu0 %1312
    %1314 = vrot.lane.b32.xlu0 %v1050, 80
    %v1315 = vpop.permute.xlu0 %1314
    %1316 = vrot.lane.b32.xlu0 %v1055, 80
    %v1317 = vpop.permute.xlu0 %1316
    %1318 = vrot.lane.b32.xlu0 %v1060, 80
    %v1319 = vpop.permute.xlu0 %1318
    %v1320 = vsel %vm280, %v1309, 0
    %v1322 = vsel %vm280, %v1311, 0
    %v1324 = vsel %vm280, %v1313, 0
    %v1326 = vsel %vm280, %v1315, 0
    %v1328 = vsel %vm280, %v1317, 0
    %v1330 = vsel %vm280, %v1319, 0
    %1332 = vmatprep.subr.mxu0 0.0
    %1333 = vmatpush1.xpose.msra.mxu0 0.0
    %1334 = vmatprep.subr.mxu0 0.0
    %1335 = vmatpush1.xpose.msra.mxu0 0.0
    %1336 = vmatprep.subr.mxu0 0.0
    %1337 = vmatpush1.xpose.msra.mxu0 0.0
    %1338 = vmatprep.subr.mxu0 0.0
    %1339 = vmatpush1.xpose.msra.mxu0 0.0
    %1340 = vmatprep.subr.mxu0 0.0
    %1341 = vmatpush1.xpose.msra.mxu0 0.0
    %1342 = vmatprep.subr.mxu0 0.0
    %1343 = vmatpush1.xpose.msra.mxu0 0.0
    %1344 = vmatprep.subr.mxu0 0.0
    %1345 = vmatpush1.xpose.msra.mxu0 0.0
    %1346 = vmatprep.subr.mxu0 0.0
    %1347 = vmatpush1.xpose.msra.mxu0 0.0
    %1348 = vmatprep.subr.mxu0 0.0
    %1349 = vmatpush1.xpose.msra.mxu0 0.0
    %1350 = vmatprep.subr.mxu0 0.0
    %1351 = vmatpush1.xpose.msra.mxu0 0.0
    %1352 = vmatprep.subr.mxu0 0.0
    %1353 = vmatpush1.xpose.msra.mxu0 0.0
    %1354 = vmatprep.subr.mxu0 0.0
    %1355 = vmatpush1.xpose.msra.mxu0 0.0
    %1356 = vmatprep.subr.mxu0 0.0
    %1357 = vmatpush1.xpose.msra.mxu0 0.0
    %1358 = vmatprep.subr.mxu0 0.0
    %1359 = vmatpush1.xpose.msra.mxu0 %v1330
    %1360 = vmatprep.subr.mxu0 0.0
    %1361 = vmatpush1.xpose.msra.mxu0 %v1328
    %1362 = vmatprep.subr.mxu0 0.0
    %1363 = vmatpush1.xpose.msra.mxu0 %v1326
    %1364 = vmatprep.subr.mxu0 0.0
    %1365 = vmatpush2.xpose.msra.mxu0 0.0
    %1366 = vmatprep.subr.mxu0 0.0
    %1367 = vmatpush2.xpose.msra.mxu0 0.0
    %1368 = vmatprep.subr.mxu0 0.0
    %1369 = vmatpush2.xpose.msra.mxu0 0.0
    %1370 = vmatprep.subr.mxu0 0.0
    %1371 = vmatpush2.xpose.msra.mxu0 0.0
    %1372 = vmatprep.subr.mxu0 0.0
    %1373 = vmatpush2.xpose.msra.mxu0 0.0
    %1374 = vmatprep.subr.mxu0 0.0
    %1375 = vmatpush2.xpose.msra.mxu0 0.0
    %1376 = vmatprep.subr.mxu0 0.0
    %1377 = vmatpush2.xpose.msra.mxu0 0.0
    %1378 = vmatprep.subr.mxu0 0.0
    %1379 = vmatpush2.xpose.msra.mxu0 0.0
    %1380 = vmatprep.subr.mxu0 0.0
    %1381 = vmatpush2.xpose.msra.mxu0 0.0
    %1382 = vmatprep.subr.mxu0 0.0
    %1383 = vmatpush2.xpose.msra.mxu0 0.0
    %1384 = vmatprep.subr.mxu0 0.0
    %1385 = vmatpush2.xpose.msra.mxu0 0.0
    %1386 = vmatprep.subr.mxu0 0.0
    %1387 = vmatpush2.xpose.msra.mxu0 0.0
    %1388 = vmatprep.subr.mxu0 0.0
    %1389 = vmatpush2.xpose.msra.mxu0 0.0
    %1390 = vmatprep.subr.mxu0 0.0
    %1391 = vmatpush2.xpose.msra.mxu0 0.0
    %1392 = vmatprep.subr.mxu0 0.0
    %1393 = vmatpush2.xpose.msra.mxu0 0.0
    %1394 = vmatprep.subr.mxu0 0.0
    %1395 = vmatpush2.xpose.msra.mxu0 0.0
    %1396 = vmatprep.mubr.f32.mxu0 0.0
    %1397 = vmatmul.mubr.f32.gmra.mxu0 %v1320
    %v1398 = vpop.f32.mrf.mxu0
    %v1399 = vadd.f32 %v955, %v1398
    %v1400 = vpop.f32.mrf.mxu0
    %1401 = vmatprep.mubr.f32.mxu0 0.0
    %1402 = vmatmul.mubr.f32.gmra.mxu0 %v1322
    %v1403 = vpop.f32.mrf.mxu0
    %v1404 = vadd.f32 %v956, %v1403
    %v1405 = vpop.f32.mrf.mxu0
    %1406 = vmatprep.mubr.f32.mxu0 0.0
    %1407 = vmatmul.mubr.f32.gmra.mxu0 %v1324
    %v1408 = vpop.f32.mrf.mxu0
    %v1409 = vadd.f32 %v957, %v1408
    %v1410 = vpop.f32.mrf.mxu0
    %1411 = vdwg.mxu0
    %v1412 = vsel %vm463, %v1399, -inf
    %1413 = vmax.xlane.f32.xlu0 %v1412
    %v1414 = vpop.xlane.xlu0 %1413
    %v1415 = vsel %vm463, %v1404, -inf
    %1416 = vmax.xlane.f32.xlu0 %v1415
    %v1417 = vpop.xlane.xlu0 %1416
    %v1418 = vsel %vm1181, %v1409, -inf
    %1419 = vmax.xlane.f32.xlu0 %v1418
    %v1420 = vpop.xlane.xlu0 %1419
    %v1421 = vsub.f32 %v1399, %v1414
    %v1422 = vsub.f32 %v1404, %v1417
    %v1423 = vsub.f32 %v1409, %v1420
    %v1424 = vmul.f32 %v1421, 1.442695
    %v1425 = vpow.pop %v1424
    %v1426 = vmul.f32 %v1422, 1.442695
    %v1427 = vpow.pop %v1426
    %v1428 = vmul.f32 %v1423, 1.442695
    %v1429 = vpow.pop %v1428
    %v1430 = vsel %vm463, %v1425, 0.0
    %1431 = vadd.xlane.f32.xlu0 %v1430
    %v1432 = vpop.xlane.xlu0 %1431
    %v1433 = vsel %vm463, %v1427, 0.0
    %1434 = vadd.xlane.f32.xlu0 %v1433
    %v1435 = vpop.xlane.xlu0 %1434
    %v1436 = vsel %vm1181, %v1429, 0.0
    %1437 = vadd.xlane.f32.xlu0 %v1436
    %v1438 = vpop.xlane.xlu0 %1437
    %v1439 = vrcp.pop %v1432
    %v1440 = vrcp.pop %v1435
    %v1441 = vrcp.pop %v1438
    %v1442 = vmul.f32 %v1425, %v1439
    %v1443 = vmul.f32 %v1427, %v1440
    %v1444 = vmul.f32 %v1429, %v1441
    %1445 = vrot.lane.b32.xlu0 %v1050, 48
    %v1446 = vpop.permute.xlu0 %1445
    %1447 = vrot.lane.b32.xlu0 %v1055, 48
    %v1448 = vpop.permute.xlu0 %1447
    %1449 = vrot.lane.b32.xlu0 %v1060, 48
    %v1450 = vpop.permute.xlu0 %1449
    %v1454 = vsel %vm463, %v1442, 0
    %v1457 = vsel %vm463, %v1443, 0
    %v1460 = vsel %vm463, %v1444, 0
    %v1462 = vsel %vm473, %v1450, 0
    %1464 = vmatprep.subr.mxu0 0.0
    %1465 = vmatpush1.msra.mxu0 0.0
    %1466 = vmatprep.subr.mxu0 0.0
    %1467 = vmatpush1.msra.mxu0 0.0
    %1468 = vmatprep.subr.mxu0 0.0
    %1469 = vmatpush1.msra.mxu0 0.0
    %1470 = vmatprep.subr.mxu0 0.0
    %1471 = vmatpush1.msra.mxu0 0.0
    %1472 = vmatprep.subr.mxu0 0.0
    %1473 = vmatpush1.msra.mxu0 0.0
    %1474 = vmatprep.subr.mxu0 0.0
    %1475 = vmatpush1.msra.mxu0 0.0
    %1476 = vmatprep.subr.mxu0 0.0
    %1477 = vmatpush1.msra.mxu0 0.0
    %1478 = vmatprep.subr.mxu0 0.0
    %1479 = vmatpush1.msra.mxu0 0.0
    %1480 = vmatprep.subr.mxu0 0.0
    %1481 = vmatpush1.msra.mxu0 0.0
    %1482 = vmatprep.subr.mxu0 0.0
    %1483 = vmatpush1.msra.mxu0 0.0
    %1484 = vmatprep.subr.mxu0 0.0
    %1485 = vmatpush1.msra.mxu0 0.0
    %1486 = vmatprep.subr.mxu0 0.0
    %1487 = vmatpush1.msra.mxu0 0.0
    %1488 = vmatprep.subr.mxu0 0.0
    %1489 = vmatpush1.msra.mxu0 0.0
    %1490 = vmatprep.subr.mxu0 0.0
    %1491 = vmatpush1.msra.mxu0 %v1462
    %1492 = vmatprep.subr.mxu0 0.0
    %1493 = vmatpush1.msra.mxu0 %v1448
    %1494 = vmatprep.subr.mxu0 0.0
    %1495 = vmatpush1.msra.mxu0 %v1446
    %1496 = vmatprep.subr.mxu0 0.0
    %1497 = vmatpush2.msra.mxu0 0.0
    %1498 = vmatprep.subr.mxu0 0.0
    %1499 = vmatpush2.msra.mxu0 0.0
    %1500 = vmatprep.subr.mxu0 0.0
    %1501 = vmatpush2.msra.mxu0 0.0
    %1502 = vmatprep.subr.mxu0 0.0
    %1503 = vmatpush2.msra.mxu0 0.0
    %1504 = vmatprep.subr.mxu0 0.0
    %1505 = vmatpush2.msra.mxu0 0.0
    %1506 = vmatprep.subr.mxu0 0.0
    %1507 = vmatpush2.msra.mxu0 0.0
    %1508 = vmatprep.subr.mxu0 0.0
    %1509 = vmatpush2.msra.mxu0 0.0
    %1510 = vmatprep.subr.mxu0 0.0
    %1511 = vmatpush2.msra.mxu0 0.0
    %1512 = vmatprep.subr.mxu0 0.0
    %1513 = vmatpush2.msra.mxu0 0.0
    %1514 = vmatprep.subr.mxu0 0.0
    %1515 = vmatpush2.msra.mxu0 0.0
    %1516 = vmatprep.subr.mxu0 0.0
    %1517 = vmatpush2.msra.mxu0 0.0
    %1518 = vmatprep.subr.mxu0 0.0
    %1519 = vmatpush2.msra.mxu0 0.0
    %1520 = vmatprep.subr.mxu0 0.0
    %1521 = vmatpush2.msra.mxu0 0.0
    %1522 = vmatprep.subr.mxu0 0.0
    %1523 = vmatpush2.msra.mxu0 0.0
    %1524 = vmatprep.subr.mxu0 0.0
    %1525 = vmatpush2.msra.mxu0 0.0
    %1526 = vmatprep.subr.mxu0 0.0
    %1527 = vmatpush2.msra.mxu0 0.0
    %1528 = vmatprep.mubr.f32.mxu0 0.0
    %1529 = vmatmul.mubr.f32.gmra.mxu0 %v1454
    %v1530 = vpop.f32.mrf.mxu0
    %v1531 = vadd.f32 0.0, %v1530
    %v1532 = vpop.f32.mrf.mxu0
    %1533 = vmatprep.mubr.f32.mxu0 0.0
    %1534 = vmatmul.mubr.f32.gmra.mxu0 %v1457
    %v1535 = vpop.f32.mrf.mxu0
    %v1536 = vadd.f32 0.0, %v1535
    %v1537 = vpop.f32.mrf.mxu0
    %1538 = vmatprep.mubr.f32.mxu0 0.0
    %1539 = vmatmul.mubr.f32.gmra.mxu0 %v1460
    %v1540 = vpop.f32.mrf.mxu0
    %v1541 = vadd.f32 0.0, %v1540
    %v1542 = vpop.f32.mrf.mxu0
    %1543 = vdwg.mxu0
    %1547 = vrot.lane.b32.xlu0 %v1531, 16
    %v1548 = vpop.permute.xlu0 %1547
    %1549 = vrot.lane.b32.xlu0 %v1536, 16
    %v1550 = vpop.permute.xlu0 %1549
    %1551 = vrot.lane.b32.xlu0 %v1541, 16
    %v1552 = vpop.permute.xlu0 %1551
    %v1556 = vsel %vm280, %v1295, %v1548
    %v1557 = vsel %vm280, %v1300, %v1550
    %v1558 = vsel %vm280, %v1305, %v1552
    %v1560 = vlaneseq
    %v1561 = vshrl.u32 %v1560, 7
    %v1562 = vsub.s32 0, %v1561
    %v1563 = vrot.slane %v1067, %v1562
    %v1566 = vsel %vm973, %v1556, 0
    %v1569 = vsel %vm973, %v1557, 0
    %v1572 = vsel %vm973, %v1558, 0
    %1574 = vmatprep.subr.mxu0 0.0
    %1575 = vmatpush1.msra.mxu0 0.0
    %1576 = vmatprep.subr.mxu0 0.0
    %1577 = vmatpush1.msra.mxu0 0.0
    %1578 = vmatprep.subr.mxu0 0.0
    %1579 = vmatpush1.msra.mxu0 0.0
    %1580 = vmatprep.subr.mxu0 0.0
    %1581 = vmatpush1.msra.mxu0 0.0
    %1582 = vmatprep.subr.mxu0 0.0
    %1583 = vmatpush1.msra.mxu0 0.0
    %1584 = vmatprep.subr.mxu0 0.0
    %1585 = vmatpush1.msra.mxu0 0.0
    %1586 = vmatprep.subr.mxu0 0.0
    %1587 = vmatpush1.msra.mxu0 0.0
    %1588 = vmatprep.subr.mxu0 0.0
    %1589 = vmatpush1.msra.mxu0 0.0
    %1590 = vmatprep.subr.mxu0 0.0
    %1591 = vmatpush1.msra.mxu0 0.0
    %1592 = vmatprep.subr.mxu0 0.0
    %1593 = vmatpush1.msra.mxu0 0.0
    %1594 = vmatprep.subr.mxu0 0.0
    %1595 = vmatpush1.msra.mxu0 0.0
    %1596 = vmatprep.subr.mxu0 0.0
    %1597 = vmatpush1.msra.mxu0 0.0
    %1598 = vmatprep.subr.mxu0 0.0
    %1599 = vmatpush1.msra.mxu0 %v1066
    %1600 = vmatprep.subr.mxu0 0.0
    %1601 = vmatpush1.msra.mxu0 %v1065
    %1602 = vmatprep.subr.mxu0 0.0
    %1603 = vmatpush1.msra.mxu0 %v1064
    %1604 = vmatprep.subr.mxu0 0.0
    %1605 = vmatpush1.msra.mxu0 %v1063
    %1606 = vmatprep.subr.mxu0 0.0
    %1607 = vmatpush2.msra.mxu0 0.0
    %1608 = vmatprep.subr.mxu0 0.0
    %1609 = vmatpush2.msra.mxu0 0.0
    %1610 = vmatprep.subr.mxu0 0.0
    %1611 = vmatpush2.msra.mxu0 0.0
    %1612 = vmatprep.subr.mxu0 0.0
    %1613 = vmatpush2.msra.mxu0 0.0
    %1614 = vmatprep.subr.mxu0 0.0
    %1615 = vmatpush2.msra.mxu0 0.0
    %1616 = vmatprep.subr.mxu0 0.0
    %1617 = vmatpush2.msra.mxu0 0.0
    %1618 = vmatprep.subr.mxu0 0.0
    %1619 = vmatpush2.msra.mxu0 0.0
    %1620 = vmatprep.subr.mxu0 0.0
    %1621 = vmatpush2.msra.mxu0 0.0
    %1622 = vmatprep.subr.mxu0 0.0
    %1623 = vmatpush2.msra.mxu0 0.0
    %1624 = vmatprep.subr.mxu0 0.0
    %1625 = vmatpush2.msra.mxu0 0.0
    %1626 = vmatprep.subr.mxu0 0.0
    %1627 = vmatpush2.msra.mxu0 0.0
    %1628 = vmatprep.subr.mxu0 0.0
    %1629 = vmatpush2.msra.mxu0 0.0
    %1630 = vmatprep.subr.mxu0 0.0
    %1631 = vmatpush2.msra.mxu0 0.0
    %1632 = vmatprep.subr.mxu0 0.0
    %1633 = vmatpush2.msra.mxu0 0.0
    %1634 = vmatprep.subr.mxu0 0.0
    %1635 = vmatpush2.msra.mxu0 0.0
    %1636 = vmatprep.subr.mxu0 0.0
    %1637 = vmatpush2.msra.mxu0 0.0
    %1638 = vmatprep.mubr.f32.mxu0 0.0
    %1639 = vmatmul.mubr.f32.gmra.mxu0 %v1566
    %v1640 = vpop.f32.mrf.mxu0
    %v1641 = vadd.f32 %v1563, %v1640
    %v1642 = vpop.f32.mrf.mxu0
    %1643 = vmatprep.mubr.f32.mxu0 0.0
    %1644 = vmatmul.mubr.f32.gmra.mxu0 %v1569
    %v1645 = vpop.f32.mrf.mxu0
    %v1646 = vadd.f32 %v1563, %v1645
    %v1647 = vpop.f32.mrf.mxu0
    %1648 = vmatprep.mubr.f32.mxu0 0.0
    %1649 = vmatmul.mubr.f32.gmra.mxu0 %v1572
    %v1650 = vpop.f32.mrf.mxu0
    %v1651 = vadd.f32 %v1563, %v1650
    %v1652 = vpop.f32.mrf.mxu0
    %1653 = vdwg.mxu0
    %v1654 = vadd.f32 %v839, %v1641
    %v1655 = vadd.f32 %v844, %v1646
    %v1656 = vadd.f32 %v849, %v1651
    %v1657 = vsel %vm973, %v1654, 0.0
    %1658 = vadd.xlane.f32.xlu0 %v1657
    %v1659 = vpop.xlane.xlu0 %1658
    %v1660 = vsel %vm973, %v1655, 0.0
    %1661 = vadd.xlane.f32.xlu0 %v1660
    %v1662 = vpop.xlane.xlu0 %1661
    %vm1663 = vcmask 257024
    %v1664 = vsel %vm1663, %v1656, 0.0
    %1665 = vadd.xlane.f32.xlu0 %v1664
    %v1666 = vpop.xlane.xlu0 %1665
    %v1667 = vrcp.pop 32.0
    %v1668 = vmul.f32 %v1659, %v1667
    %v1669 = vmul.f32 %v1662, %v1667
    %v1670 = vmul.f32 %v1666, %v1667
    %v1671 = vsub.f32 %v1654, %v1668
    %v1672 = vsub.f32 %v1655, %v1669
    %v1673 = vsub.f32 %v1656, %v1670
    %v1674 = vmul.f32 %v1671, %v1671
    %v1675 = vmul.f32 %v1672, %v1672
    %v1676 = vmul.f32 %v1673, %v1673
    %v1677 = vsel %vm973, %v1674, 0.0
    %1678 = vadd.xlane.f32.xlu0 %v1677
    %v1679 = vpop.xlane.xlu0 %1678
    %v1680 = vsel %vm973, %v1675, 0.0
    %1681 = vadd.xlane.f32.xlu0 %v1680
    %v1682 = vpop.xlane.xlu0 %1681
    %v1683 = vsel %vm1663, %v1676, 0.0
    %1684 = vadd.xlane.f32.xlu0 %v1683
    %v1685 = vpop.xlane.xlu0 %1684
    %v1686 = vmul.f32 %v1679, %v1667
    %v1687 = vmul.f32 %v1682, %v1667
    %v1688 = vmul.f32 %v1685, %v1667
    %v1689 = vadd.f32 %v1686, 1e-05
    %v1690 = vadd.f32 %v1687, 1e-05
    %v1691 = vadd.f32 %v1688, 1e-05
    %v1692 = vrsqrt.pop %v1689
    %v1693 = vrsqrt.pop %v1690
    %v1694 = vrsqrt.pop %v1691
    %v1695 = vmul.f32 %v1671, %v1692
    %v1696 = vmul.f32 %v1672, %v1693
    %v1697 = vmul.f32 %v1673, %v1694
    %v1698 = vld [vmem:[%s4 + $0x4] sm:$0x1]
    %v1700 = vlaneseq
    %v1701 = vshrl.u32 %v1700, 7
    %v1702 = vsub.s32 0, %v1701
    %v1703 = vrot.slane %v1698, %v1702
    %v1705 = vmul.f32 %v1695, %v1703
    %v1706 = vmul.f32 %v1696, %v1703
    %v1707 = vmul.f32 %v1697, %v1703
    %v1708 = vld [vmem:[%s4 + $0x5] sm:$0x1]
    %v1710 = vlaneseq
    %v1711 = vshrl.u32 %v1710, 7
    %v1712 = vsub.s32 0, %v1711
    %v1713 = vrot.slane %v1708, %v1712
    %v1715 = vadd.f32 %v1705, %v1713
    %v1716 = vadd.f32 %v1706, %v1713
    %v1717 = vadd.f32 %v1707, %v1713
    %v1718 = vld [vmem:[#allocation2 + $0x10] sm:$0xff]
    %v1719 = vld [vmem:[#allocation2 + $0x60] sm:$0xff]
    %v1720 = vld [vmem:[#allocation2 + $0xb0] sm:$0xff]
    %v1721 = vld [vmem:[#allocation2 + $0x100] sm:$0xff]
    %v1722 = vld [vmem:[%s4 + $0x2] sm:$0x1]
    %v1724 = vlaneseq
    %v1725 = vshrl.u32 %v1724, 7
    %v1726 = vsub.s32 0, %v1725
    %v1727 = vrot.slane %v1722, %v1726
    %v1730 = vsel %vm973, %v1715, 0
    %v1733 = vsel %vm973, %v1716, 0
    %v1736 = vsel %vm973, %v1717, 0
    %1738 = vmatprep.subr.mxu0 0.0
    %1739 = vmatpush1.msra.mxu0 0.0
    %1740 = vmatprep.subr.mxu0 0.0
    %1741 = vmatpush1.msra.mxu0 0.0
    %1742 = vmatprep.subr.mxu0 0.0
    %1743 = vmatpush1.msra.mxu0 0.0
    %1744 = vmatprep.subr.mxu0 0.0
    %1745 = vmatpush1.msra.mxu0 0.0
    %1746 = vmatprep.subr.mxu0 0.0
    %1747 = vmatpush1.msra.mxu0 0.0
    %1748 = vmatprep.subr.mxu0 0.0
    %1749 = vmatpush1.msra.mxu0 0.0
    %1750 = vmatprep.subr.mxu0 0.0
    %1751 = vmatpush1.msra.mxu0 0.0
    %1752 = vmatprep.subr.mxu0 0.0
    %1753 = vmatpush1.msra.mxu0 0.0
    %1754 = vmatprep.subr.mxu0 0.0
    %1755 = vmatpush1.msra.mxu0 0.0
    %1756 = vmatprep.subr.mxu0 0.0
    %1757 = vmatpush1.msra.mxu0 0.0
    %1758 = vmatprep.subr.mxu0 0.0
    %1759 = vmatpush1.msra.mxu0 0.0
    %1760 = vmatprep.subr.mxu0 0.0
    %1761 = vmatpush1.msra.mxu0 0.0
    %1762 = vmatprep.subr.mxu0 0.0
    %1763 = vmatpush1.msra.mxu0 %v1721
    %1764 = vmatprep.subr.mxu0 0.0
    %1765 = vmatpush1.msra.mxu0 %v1720
    %1766 = vmatprep.subr.mxu0 0.0
    %1767 = vmatpush1.msra.mxu0 %v1719
    %1768 = vmatprep.subr.mxu0 0.0
    %1769 = vmatpush1.msra.mxu0 %v1718
    %1770 = vmatprep.subr.mxu0 0.0
    %1771 = vmatpush2.msra.mxu0 0.0
    %1772 = vmatprep.subr.mxu0 0.0
    %1773 = vmatpush2.msra.mxu0 0.0
    %1774 = vmatprep.subr.mxu0 0.0
    %1775 = vmatpush2.msra.mxu0 0.0
    %1776 = vmatprep.subr.mxu0 0.0
    %1777 = vmatpush2.msra.mxu0 0.0
    %1778 = vmatprep.subr.mxu0 0.0
    %1779 = vmatpush2.msra.mxu0 0.0
    %1780 = vmatprep.subr.mxu0 0.0
    %1781 = vmatpush2.msra.mxu0 0.0
    %1782 = vmatprep.subr.mxu0 0.0
    %1783 = vmatpush2.msra.mxu0 0.0
    %1784 = vmatprep.subr.mxu0 0.0
    %1785 = vmatpush2.msra.mxu0 0.0
    %1786 = vmatprep.subr.mxu0 0.0
    %1787 = vmatpush2.msra.mxu0 0.0
    %1788 = vmatprep.subr.mxu0 0.0
    %1789 = vmatpush2.msra.mxu0 0.0
    %1790 = vmatprep.subr.mxu0 0.0
    %1791 = vmatpush2.msra.mxu0 0.0
    %1792 = vmatprep.subr.mxu0 0.0
    %1793 = vmatpush2.msra.mxu0 0.0
    %1794 = vmatprep.subr.mxu0 0.0
    %1795 = vmatpush2.msra.mxu0 0.0
    %1796 = vmatprep.subr.mxu0 0.0
    %1797 = vmatpush2.msra.mxu0 0.0
    %1798 = vmatprep.subr.mxu0 0.0
    %1799 = vmatpush2.msra.mxu0 0.0
    %1800 = vmatprep.subr.mxu0 0.0
    %1801 = vmatpush2.msra.mxu0 0.0
    %1802 = vmatprep.mubr.f32.mxu0 0.0
    %1803 = vmatmul.mubr.f32.gmra.mxu0 %v1730
    %v1804 = vpop.f32.mrf.mxu0
    %v1805 = vadd.f32 %v1727, %v1804
    %v1806 = vpop.f32.mrf.mxu0
    %1807 = vmatprep.mubr.f32.mxu0 0.0
    %1808 = vmatmul.mubr.f32.gmra.mxu0 %v1733
    %v1809 = vpop.f32.mrf.mxu0
    %v1810 = vadd.f32 %v1727, %v1809
    %v1811 = vpop.f32.mrf.mxu0
    %1812 = vmatprep.mubr.f32.mxu0 0.0
    %1813 = vmatmul.mubr.f32.gmra.mxu0 %v1736
    %v1814 = vpop.f32.mrf.mxu0
    %v1815 = vadd.f32 %v1727, %v1814
    %v1816 = vpop.f32.mrf.mxu0
    %1817 = vdwg.mxu0
    %v1818 = vmax.f32 %v1805, 0.0
    %v1819 = vmax.f32 %v1810, 0.0
    %v1820 = vmax.f32 %v1815, 0.0
    %v1821 = vld [vmem:[#allocation4 + $0x10] sm:$0xff]
    %v1822 = vld [vmem:[#allocation4 + $0x30] sm:$0xff]
    %v1823 = vld [vmem:[#allocation4 + $0x50] sm:$0xff]
    %v1824 = vld [vmem:[#allocation4 + $0x70] sm:$0xff]
    %v1825 = vld [vmem:[#allocation4 + $0x90] sm:$0xff]
    %v1826 = vld [vmem:[#allocation4 + $0xb0] sm:$0xff]
    %v1827 = vld [vmem:[#allocation4 + $0xd0] sm:$0xff]
    %v1828 = vld [vmem:[#allocation4 + $0xf0] sm:$0xff]
    %v1829 = vld [vmem:[%s4 + $0x3] sm:$0x1]
    %v1831 = vlaneseq
    %v1832 = vshrl.u32 %v1831, 7
    %v1833 = vsub.s32 0, %v1832
    %v1834 = vrot.slane %v1829, %v1833
    %v1837 = vsel %vm78, %v1818, 0
    %v1840 = vsel %vm78, %v1819, 0
    %v1843 = vsel %vm78, %v1820, 0
    %1845 = vmatprep.subr.mxu0 0.0
    %1846 = vmatpush1.msra.mxu0 0.0
    %1847 = vmatprep.subr.mxu0 0.0
    %1848 = vmatpush1.msra.mxu0 0.0
    %1849 = vmatprep.subr.mxu0 0.0
    %1850 = vmatpush1.msra.mxu0 0.0
    %1851 = vmatprep.subr.mxu0 0.0
    %1852 = vmatpush1.msra.mxu0 0.0
    %1853 = vmatprep.subr.mxu0 0.0
    %1854 = vmatpush1.msra.mxu0 0.0
    %1855 = vmatprep.subr.mxu0 0.0
    %1856 = vmatpush1.msra.mxu0 0.0
    %1857 = vmatprep.subr.mxu0 0.0
    %1858 = vmatpush1.msra.mxu0 0.0
    %1859 = vmatprep.subr.mxu0 0.0
    %1860 = vmatpush1.msra.mxu0 0.0
    %1861 = vmatprep.subr.mxu0 0.0
    %1862 = vmatpush1.msra.mxu0 %v1828
    %1863 = vmatprep.subr.mxu0 0.0
    %1864 = vmatpush1.msra.mxu0 %v1827
    %1865 = vmatprep.subr.mxu0 0.0
    %1866 = vmatpush1.msra.mxu0 %v1826
    %1867 = vmatprep.subr.mxu0 0.0
    %1868 = vmatpush1.msra.mxu0 %v1825
    %1869 = vmatprep.subr.mxu0 0.0
    %1870 = vmatpush1.msra.mxu0 %v1824
    %1871 = vmatprep.subr.mxu0 0.0
    %1872 = vmatpush1.msra.mxu0 %v1823
    %1873 = vmatprep.subr.mxu0 0.0
    %1874 = vmatpush1.msra.mxu0 %v1822
    %1875 = vmatprep.subr.mxu0 0.0
    %1876 = vmatpush1.msra.mxu0 %v1821
    %1877 = vmatprep.subr.mxu0 0.0
    %1878 = vmatpush2.msra.mxu0 0.0
    %1879 = vmatprep.subr.mxu0 0.0
    %1880 = vmatpush2.msra.mxu0 0.0
    %1881 = vmatprep.subr.mxu0 0.0
    %1882 = vmatpush2.msra.mxu0 0.0
    %1883 = vmatprep.subr.mxu0 0.0
    %1884 = vmatpush2.msra.mxu0 0.0
    %1885 = vmatprep.subr.mxu0 0.0
    %1886 = vmatpush2.msra.mxu0 0.0
    %1887 = vmatprep.subr.mxu0 0.0
    %1888 = vmatpush2.msra.mxu0 0.0
    %1889 = vmatprep.subr.mxu0 0.0
    %1890 = vmatpush2.msra.mxu0 0.0
    %1891 = vmatprep.subr.mxu0 0.0
    %1892 = vmatpush2.msra.mxu0 0.0
    %1893 = vmatprep.subr.mxu0 0.0
    %1894 = vmatpush2.msra.mxu0 0.0
    %1895 = vmatprep.subr.mxu0 0.0
    %1896 = vmatpush2.msra.mxu0 0.0
    %1897 = vmatprep.subr.mxu0 0.0
    %1898 = vmatpush2.msra.mxu0 0.0
    %1899 = vmatprep.subr.mxu0 0.0
    %1900 = vmatpush2.msra.mxu0 0.0
    %1901 = vmatprep.subr.mxu0 0.0
    %1902 = vmatpush2.msra.mxu0 0.0
    %1903 = vmatprep.subr.mxu0 0.0
    %1904 = vmatpush2.msra.mxu0 0.0
    %1905 = vmatprep.subr.mxu0 0.0
    %1906 = vmatpush2.msra.mxu0 0.0
    %1907 = vmatprep.subr.mxu0 0.0
    %1908 = vmatpush2.msra.mxu0 0.0
    %1909 = vmatprep.mubr.f32.mxu0 0.0
    %1910 = vmatmul.mubr.f32.gmra.mxu0 %v1837
    %v1911 = vpop.f32.mrf.mxu0
    %v1912 = vadd.f32 %v1834, %v1911
    %v1913 = vpop.f32.mrf.mxu0
    %1914 = vmatprep.mubr.f32.mxu0 0.0
    %1915 = vmatmul.mubr.f32.gmra.mxu0 %v1840
    %v1916 = vpop.f32.mrf.mxu0
    %v1917 = vadd.f32 %v1834, %v1916
    %v1918 = vpop.f32.mrf.mxu0
    %1919 = vmatprep.mubr.f32.mxu0 0.0
    %1920 = vmatmul.mubr.f32.gmra.mxu0 %v1843
    %v1921 = vpop.f32.mrf.mxu0
    %v1922 = vadd.f32 %v1834, %v1921
    %v1923 = vpop.f32.mrf.mxu0
    %1924 = vdwg.mxu0
    %v1925 = vadd.f32 %v1715, %v1912
    %v1926 = vadd.f32 %v1716, %v1917
    %v1927 = vadd.f32 %v1717, %v1922
    %v1928 = vsel %vm973, %v1925, 0.0
    %1929 = vadd.xlane.f32.xlu0 %v1928
    %v1930 = vpop.xlane.xlu0 %1929
    %v1931 = vsel %vm973, %v1926, 0.0
    %1932 = vadd.xlane.f32.xlu0 %v1931
    %v1933 = vpop.xlane.xlu0 %1932
    %v1934 = vsel %vm1663, %v1927, 0.0
    %1935 = vadd.xlane.f32.xlu0 %v1934
    %v1936 = vpop.xlane.xlu0 %1935
    %v1937 = vmul.f32 %v1930, %v1667
    %v1938 = vmul.f32 %v1933, %v1667
    %v1939 = vmul.f32 %v1936, %v1667
    %v1940 = vsub.f32 %v1925, %v1937
    %v1941 = vsub.f32 %v1926, %v1938
    %v1942 = vsub.f32 %v1927, %v1939
    %v1943 = vmul.f32 %v1940, %v1940
    %v1944 = vmul.f32 %v1941, %v1941
    %v1945 = vmul.f32 %v1942, %v1942
    %v1946 = vsel %vm973, %v1943, 0.0
    %1947 = vadd.xlane.f32.xlu0 %v1946
    %v1948 = vpop.xlane.xlu0 %1947
    %v1949 = vsel %vm973, %v1944, 0.0
    %1950 = vadd.xlane.f32.xlu0 %v1949
    %v1951 = vpop.xlane.xlu0 %1950
    %v1952 = vsel %vm1663, %v1945, 0.0
    %1953 = vadd.xlane.f32.xlu0 %v1952
    %v1954 = vpop.xlane.xlu0 %1953
    %v1955 = vmul.f32 %v1948, %v1667
    %v1956 = vmul.f32 %v1951, %v1667
    %v1957 = vmul.f32 %v1954, %v1667
    %v1958 = vadd.f32 %v1955, 1e-05
    %v1959 = vadd.f32 %v1956, 1e-05
    %v1960 = vadd.f32 %v1957, 1e-05
    %v1961 = vrsqrt.pop %v1958
    %v1962 = vrsqrt.pop %v1959
    %v1963 = vrsqrt.pop %v1960
    %v1964 = vmul.f32 %v1940, %v1961
    %v1965 = vmul.f32 %v1941, %v1962
    %v1966 = vmul.f32 %v1942, %v1963
    %v1967 = vld [vmem:[%s4 + $0x6] sm:$0x1]
    %v1969 = vlaneseq
    %v1970 = vshrl.u32 %v1969, 7
    %v1971 = vsub.s32 0, %v1970
    %v1972 = vrot.slane %v1967, %v1971
    %v1974 = vmul.f32 %v1964, %v1972
    %v1975 = vmul.f32 %v1965, %v1972
    %v1976 = vmul.f32 %v1966, %v1972
    %v1977 = vld [vmem:[%s4 + $0x7] sm:$0x1]
    %v1979 = vlaneseq
    %v1980 = vshrl.u32 %v1979, 7
    %v1981 = vsub.s32 0, %v1980
    %v1982 = vrot.slane %v1977, %v1981
    %v1984 = vadd.f32 %v1974, %v1982
    %v1985 = vadd.f32 %v1975, %v1982
    %v1986 = vadd.f32 %v1976, %v1982
    %v1987 = vsel %vm973, %v1984, 0.0
    %1988 = vadd.xlane.f32.xlu0 %v1987
    %v1989 = vpop.xlane.xlu0 %1988
    %v1990 = vsel %vm973, %v1985, 0.0
    %1991 = vadd.xlane.f32.xlu0 %v1990
    %v1992 = vpop.xlane.xlu0 %1991
    %v1993 = vsel %vm1663, %v1986, 0.0
    %1994 = vadd.xlane.f32.xlu0 %v1993
    %v1995 = vpop.xlane.xlu0 %1994
    %v1996 = vmul.f32 %v1989, %v1667
    %v1997 = vmul.f32 %v1992, %v1667
    %v1998 = vmul.f32 %v1995, %v1667
    %v1999 = vsub.f32 %v1984, %v1996
    %v2000 = vsub.f32 %v1985, %v1997
    %v2001 = vsub.f32 %v1986, %v1998
    %v2002 = vmul.f32 %v1999, %v1999
    %v2003 = vmul.f32 %v2000, %v2000
    %v2004 = vmul.f32 %v2001, %v2001
    %v2005 = vsel %vm973, %v2002, 0.0
    %2006 = vadd.xlane.f32.xlu0 %v2005
    %v2007 = vpop.xlane.xlu0 %2006
    %v2008 = vsel %vm973, %v2003, 0.0
    %2009 = vadd.xlane.f32.xlu0 %v2008
    %v2010 = vpop.xlane.xlu0 %2009
    %v2011 = vsel %vm1663, %v2004, 0.0
    %2012 = vadd.xlane.f32.xlu0 %v2011
    %v2013 = vpop.xlane.xlu0 %2012
    %v2014 = vmul.f32 %v2007, %v1667
    %v2015 = vmul.f32 %v2010, %v1667
    %v2016 = vmul.f32 %v2013, %v1667
    %v2017 = vadd.f32 %v2014, 1e-05
    %v2018 = vadd.f32 %v2015, 1e-05
    %v2019 = vadd.f32 %v2016, 1e-05
    %v2020 = vrsqrt.pop %v2017
    %v2021 = vrsqrt.pop %v2018
    %v2022 = vrsqrt.pop %v2019
    %v2023 = vmul.f32 %v1999, %v2020
    %v2024 = vmul.f32 %v2000, %v2021
    %v2025 = vmul.f32 %v2001, %v2022
    %v2026 = vld [vmem:[%s4 + $0x8] sm:$0x1]
    %v2028 = vlaneseq
    %v2029 = vshrl.u32 %v2028, 7
    %v2030 = vsub.s32 0, %v2029
    %v2031 = vrot.slane %v2026, %v2030
    %v2033 = vmul.f32 %v2023, %v2031
    %v2034 = vmul.f32 %v2024, %v2031
    %v2035 = vmul.f32 %v2025, %v2031
    %v2036 = vld [vmem:[%s4 + $0x9] sm:$0x1]
    %v2038 = vlaneseq
    %v2039 = vshrl.u32 %v2038, 7
    %v2040 = vsub.s32 0, %v2039
    %v2041 = vrot.slane %v2036, %v2040
    %v2043 = vadd.f32 %v2033, %v2041
    %v2044 = vadd.f32 %v2034, %v2041
    %v2045 = vadd.f32 %v2035, %v2041
    %v2046 = vld [vmem:[#allocation2 + $0x18] sm:$0xff]
    %v2047 = vld [vmem:[#allocation2 + $0x68] sm:$0xff]
    %v2048 = vld [vmem:[#allocation2 + $0xb8] sm:$0xff]
    %v2049 = vld [vmem:[#allocation2 + $0x108] sm:$0xff]
    %v2050 = vld [vmem:[%s4 + $0xa] sm:$0x1]
    %v2052 = vlaneseq
    %v2053 = vshrl.u32 %v2052, 7
    %v2054 = vsub.s32 0, %v2053
    %v2055 = vrot.slane %v2050, %v2054
    %v2058 = vsel %vm973, %v947, 0
    %v2061 = vsel %vm973, %v952, 0
    %2063 = vmatprep.subr.mxu0 0.0
    %2064 = vmatpush1.msra.mxu0 0.0
    %2065 = vmatprep.subr.mxu0 0.0
    %2066 = vmatpush1.msra.mxu0 0.0
    %2067 = vmatprep.subr.mxu0 0.0
    %2068 = vmatpush1.msra.mxu0 0.0
    %2069 = vmatprep.subr.mxu0 0.0
    %2070 = vmatpush1.msra.mxu0 0.0
    %2071 = vmatprep.subr.mxu0 0.0
    %2072 = vmatpush1.msra.mxu0 0.0
    %2073 = vmatprep.subr.mxu0 0.0
    %2074 = vmatpush1.msra.mxu0 0.0
    %2075 = vmatprep.subr.mxu0 0.0
    %2076 = vmatpush1.msra.mxu0 0.0
    %2077 = vmatprep.subr.mxu0 0.0
    %2078 = vmatpush1.msra.mxu0 0.0
    %2079 = vmatprep.subr.mxu0 0.0
    %2080 = vmatpush1.msra.mxu0 0.0
    %2081 = vmatprep.subr.mxu0 0.0
    %2082 = vmatpush1.msra.mxu0 0.0
    %2083 = vmatprep.subr.mxu0 0.0
    %2084 = vmatpush1.msra.mxu0 0.0
    %2085 = vmatprep.subr.mxu0 0.0
    %2086 = vmatpush1.msra.mxu0 0.0
    %2087 = vmatprep.subr.mxu0 0.0
    %2088 = vmatpush1.msra.mxu0 %v2049
    %2089 = vmatprep.subr.mxu0 0.0
    %2090 = vmatpush1.msra.mxu0 %v2048
    %2091 = vmatprep.subr.mxu0 0.0
    %2092 = vmatpush1.msra.mxu0 %v2047
    %2093 = vmatprep.subr.mxu0 0.0
    %2094 = vmatpush1.msra.mxu0 %v2046
    %2095 = vmatprep.subr.mxu0 0.0
    %2096 = vmatpush2.msra.mxu0 0.0
    %2097 = vmatprep.subr.mxu0 0.0
    %2098 = vmatpush2.msra.mxu0 0.0
    %2099 = vmatprep.subr.mxu0 0.0
    %2100 = vmatpush2.msra.mxu0 0.0
    %2101 = vmatprep.subr.mxu0 0.0
    %2102 = vmatpush2.msra.mxu0 0.0
    %2103 = vmatprep.subr.mxu0 0.0
    %2104 = vmatpush2.msra.mxu0 0.0
    %2105 = vmatprep.subr.mxu0 0.0
    %2106 = vmatpush2.msra.mxu0 0.0
    %2107 = vmatprep.subr.mxu0 0.0
    %2108 = vmatpush2.msra.mxu0 0.0
    %2109 = vmatprep.subr.mxu0 0.0
    %2110 = vmatpush2.msra.mxu0 0.0
    %2111 = vmatprep.subr.mxu0 0.0
    %2112 = vmatpush2.msra.mxu0 0.0
    %2113 = vmatprep.subr.mxu0 0.0
    %2114 = vmatpush2.msra.mxu0 0.0
    %2115 = vmatprep.subr.mxu0 0.0
    %2116 = vmatpush2.msra.mxu0 0.0
    %2117 = vmatprep.subr.mxu0 0.0
    %2118 = vmatpush2.msra.mxu0 0.0
    %2119 = vmatprep.subr.mxu0 0.0
    %2120 = vmatpush2.msra.mxu0 0.0
    %2121 = vmatprep.subr.mxu0 0.0
    %2122 = vmatpush2.msra.mxu0 0.0
    %2123 = vmatprep.subr.mxu0 0.0
    %2124 = vmatpush2.msra.mxu0 0.0
    %2125 = vmatprep.subr.mxu0 0.0
    %2126 = vmatpush2.msra.mxu0 0.0
    %2127 = vmatprep.mubr.f32.mxu0 0.0
    %2128 = vmatmul.mubr.f32.gmra.mxu0 %v2058
    %v2129 = vpop.f32.mrf.mxu0
    %v2130 = vadd.f32 %v2055, %v2129
    %v2131 = vpop.f32.mrf.mxu0
    %2132 = vmatprep.mubr.f32.mxu0 0.0
    %2133 = vmatmul.mubr.f32.gmra.mxu0 %v2061
    %v2134 = vpop.f32.mrf.mxu0
    %v2135 = vadd.f32 %v2055, %v2134
    %v2136 = vpop.f32.mrf.mxu0
    %2137 = vdwg.mxu0
    %v2138 = vld [vmem:[#allocation2 + $0x20] sm:$0xff]
    %v2139 = vld [vmem:[#allocation2 + $0x70] sm:$0xff]
    %v2140 = vld [vmem:[#allocation2 + $0xc0] sm:$0xff]
    %v2141 = vld [vmem:[#allocation2 + $0x110] sm:$0xff]
    %v2142 = vld [vmem:[%s4 + $0xb] sm:$0x1]
    %v2143 = vmul.f32 %v2130, 0.25
    %v2144 = vmul.f32 %v2135, 0.25
    %2147 = vrot.lane.b32.xlu0 %v2130, 96
    %v2148 = vpop.permute.xlu0 %2147
    %2149 = vrot.lane.b32.xlu0 %v2135, 96
    %v2150 = vpop.permute.xlu0 %2149
    %v2152 = vsel %vm280, %v2143, 0
    %v2155 = vsel %vm280, %v2144, 0
    %v2157 = vsel %vm280, %v2148, 0
    %v2159 = vsel %vm280, %v2150, 0
    %2161 = vmatprep.subr.mxu0 0.0
    %2162 = vmatpush1.xpose.msra.mxu0 0.0
    %2163 = vmatprep.subr.mxu0 0.0
    %2164 = vmatpush1.xpose.msra.mxu0 0.0
    %2165 = vmatprep.subr.mxu0 0.0
    %2166 = vmatpush1.xpose.msra.mxu0 0.0
    %2167 = vmatprep.subr.mxu0 0.0
    %2168 = vmatpush1.xpose.msra.mxu0 0.0
    %2169 = vmatprep.subr.mxu0 0.0
    %2170 = vmatpush1.xpose.msra.mxu0 0.0
    %2171 = vmatprep.subr.mxu0 0.0
    %2172 = vmatpush1.xpose.msra.mxu0 0.0
    %2173 = vmatprep.subr.mxu0 0.0
    %2174 = vmatpush1.xpose.msra.mxu0 0.0
    %2175 = vmatprep.subr.mxu0 0.0
    %2176 = vmatpush1.xpose.msra.mxu0 0.0
    %2177 = vmatprep.subr.mxu0 0.0
    %2178 = vmatpush1.xpose.msra.mxu0 0.0
    %2179 = vmatprep.subr.mxu0 0.0
    %2180 = vmatpush1.xpose.msra.mxu0 0.0
    %2181 = vmatprep.subr.mxu0 0.0
    %2182 = vmatpush1.xpose.msra.mxu0 0.0
    %2183 = vmatprep.subr.mxu0 0.0
    %2184 = vmatpush1.xpose.msra.mxu0 0.0
    %2185 = vmatprep.subr.mxu0 0.0
    %2186 = vmatpush1.xpose.msra.mxu0 0.0
    %2187 = vmatprep.subr.mxu0 0.0
    %2188 = vmatpush1.xpose.msra.mxu0 0.0
    %2189 = vmatprep.subr.mxu0 0.0
    %2190 = vmatpush1.xpose.msra.mxu0 %v2159
    %2191 = vmatprep.subr.mxu0 0.0
    %2192 = vmatpush1.xpose.msra.mxu0 %v2157
    %2193 = vmatprep.subr.mxu0 0.0
    %2194 = vmatpush2.xpose.msra.mxu0 0.0
    %2195 = vmatprep.subr.mxu0 0.0
    %2196 = vmatpush2.xpose.msra.mxu0 0.0
    %2197 = vmatprep.subr.mxu0 0.0
    %2198 = vmatpush2.xpose.msra.mxu0 0.0
    %2199 = vmatprep.subr.mxu0 0.0
    %2200 = vmatpush2.xpose.msra.mxu0 0.0
    %2201 = vmatprep.subr.mxu0 0.0
    %2202 = vmatpush2.xpose.msra.mxu0 0.0
    %2203 = vmatprep.subr.mxu0 0.0
    %2204 = vmatpush2.xpose.msra.mxu0 0.0
    %2205 = vmatprep.subr.mxu0 0.0
    %2206 = vmatpush2.xpose.msra.mxu0 0.0
    %2207 = vmatprep.subr.mxu0 0.0
    %2208 = vmatpush2.xpose.msra.mxu0 0.0
    %2209 = vmatprep.subr.mxu0 0.0
    %2210 = vmatpush2.xpose.msra.mxu0 0.0
    %2211 = vmatprep.subr.mxu0 0.0
    %2212 = vmatpush2.xpose.msra.mxu0 0.0
    %2213 = vmatprep.subr.mxu0 0.0
    %2214 = vmatpush2.xpose.msra.mxu0 0.0
    %2215 = vmatprep.subr.mxu0 0.0
    %2216 = vmatpush2.xpose.msra.mxu0 0.0
    %2217 = vmatprep.subr.mxu0 0.0
    %2218 = vmatpush2.xpose.msra.mxu0 0.0
    %2219 = vmatprep.subr.mxu0 0.0
    %2220 = vmatpush2.xpose.msra.mxu0 0.0
    %2221 = vmatprep.subr.mxu0 0.0
    %2222 = vmatpush2.xpose.msra.mxu0 0.0
    %2223 = vmatprep.subr.mxu0 0.0
    %2224 = vmatpush2.xpose.msra.mxu0 0.0
    %2225 = vmatprep.mubr.f32.mxu0 0.0
    %2226 = vmatmul.mubr.f32.gmra.mxu0 %v2152
    %v2227 = vpop.f32.mrf.mxu0
    %v2228 = vadd.f32 %v958, %v2227
    %v2229 = vpop.f32.mrf.mxu0
    %2230 = vmatprep.mubr.f32.mxu0 0.0
    %2231 = vmatmul.mubr.f32.gmra.mxu0 %v2155
    %v2232 = vpop.f32.mrf.mxu0
    %v2233 = vadd.f32 %v959, %v2232
    %v2234 = vpop.f32.mrf.mxu0
    %2235 = vdwg.mxu0
    %vm2236 = vcmask 80896
    %v2237 = vsel %vm2236, %v2228, -inf
    %2238 = vmax.xlane.f32.xlu0 %v2237
    %v2239 = vpop.xlane.xlu0 %2238
    %vm2240 = vcmask 74752
    %v2241 = vsel %vm2240, %v2233, -inf
    %2242 = vmax.xlane.f32.xlu0 %v2241
    %v2243 = vpop.xlane.xlu0 %2242
    %v2244 = vsub.f32 %v2228, %v2239
    %v2245 = vsub.f32 %v2233, %v2243
    %v2246 = vmul.f32 %v2244, 1.442695
    %v2247 = vpow.pop %v2246
    %v2248 = vmul.f32 %v2245, 1.442695
    %v2249 = vpow.pop %v2248
    %v2250 = vsel %vm2236, %v2247, 0.0
    %2251 = vadd.xlane.f32.xlu0 %v2250
    %v2252 = vpop.xlane.xlu0 %2251
    %v2253 = vsel %vm2240, %v2249, 0.0
    %2254 = vadd.xlane.f32.xlu0 %v2253
    %v2255 = vpop.xlane.xlu0 %2254
    %v2256 = vrcp.pop %v2252
    %v2257 = vrcp.pop %v2255
    %v2258 = vmul.f32 %v2247, %v2256
    %v2259 = vmul.f32 %v2249, %v2257
    %2260 = vrot.lane.b32.xlu0 %v2130, 64
    %v2261 = vpop.permute.xlu0 %2260
    %2262 = vrot.lane.b32.xlu0 %v2135, 64
    %v2263 = vpop.permute.xlu0 %2262
    %v2266 = vsel %vm2236, %v2258, 0
    %v2269 = vsel %vm2236, %v2259, 0
    %v2271 = vsel %vm190, %v2263, 0
    %2273 = vmatprep.subr.mxu0 0.0
    %2274 = vmatpush1.msra.mxu0 0.0
    %2275 = vmatprep.subr.mxu0 0.0
    %2276 = vmatpush1.msra.mxu0 0.0
    %2277 = vmatprep.subr.mxu0 0.0
    %2278 = vmatpush1.msra.mxu0 0.0
    %2279 = vmatprep.subr.mxu0 0.0
    %2280 = vmatpush1.msra.mxu0 0.0
    %2281 = vmatprep.subr.mxu0 0.0
    %2282 = vmatpush1.msra.mxu0 0.0
    %2283 = vmatprep.subr.mxu0 0.0
    %2284 = vmatpush1.msra.mxu0 0.0
    %2285 = vmatprep.subr.mxu0 0.0
    %2286 = vmatpush1.msra.mxu0 0.0
    %2287 = vmatprep.subr.mxu0 0.0
    %2288 = vmatpush1.msra.mxu0 0.0
    %2289 = vmatprep.subr.mxu0 0.0
    %2290 = vmatpush1.msra.mxu0 0.0
    %2291 = vmatprep.subr.mxu0 0.0
    %2292 = vmatpush1.msra.mxu0 0.0
    %2293 = vmatprep.subr.mxu0 0.0
    %2294 = vmatpush1.msra.mxu0 0.0
    %2295 = vmatprep.subr.mxu0 0.0
    %2296 = vmatpush1.msra.mxu0 0.0
    %2297 = vmatprep.subr.mxu0 0.0
    %2298 = vmatpush1.msra.mxu0 0.0
    %2299 = vmatprep.subr.mxu0 0.0
    %2300 = vmatpush1.msra.mxu0 0.0
    %2301 = vmatprep.subr.mxu0 0.0
    %2302 = vmatpush1.msra.mxu0 %v2271
    %2303 = vmatprep.subr.mxu0 0.0
    %2304 = vmatpush1.msra.mxu0 %v2261
    %2305 = vmatprep.subr.mxu0 0.0
    %2306 = vmatpush2.msra.mxu0 0.0
    %2307 = vmatprep.subr.mxu0 0.0
    %2308 = vmatpush2.msra.mxu0 0.0
    %2309 = vmatprep.subr.mxu0 0.0
    %2310 = vmatpush2.msra.mxu0 0.0
    %2311 = vmatprep.subr.mxu0 0.0
    %2312 = vmatpush2.msra.mxu0 0.0
    %2313 = vmatprep.subr.mxu0 0.0
    %2314 = vmatpush2.msra.mxu0 0.0
    %2315 = vmatprep.subr.mxu0 0.0
    %2316 = vmatpush2.msra.mxu0 0.0
    %2317 = vmatprep.subr.mxu0 0.0
    %2318 = vmatpush2.msra.mxu0 0.0
    %2319 = vmatprep.subr.mxu0 0.0
    %2320 = vmatpush2.msra.mxu0 0.0
    %2321 = vmatprep.subr.mxu0 0.0
    %2322 = vmatpush2.msra.mxu0 0.0
    %2323 = vmatprep.subr.mxu0 0.0
    %2324 = vmatpush2.msra.mxu0 0.0
    %2325 = vmatprep.subr.mxu0 0.0
    %2326 = vmatpush2.msra.mxu0 0.0
    %2327 = vmatprep.subr.mxu0 0.0
    %2328 = vmatpush2.msra.mxu0 0.0
    %2329 = vmatprep.subr.mxu0 0.0
    %2330 = vmatpush2.msra.mxu0 0.0
    %2331 = vmatprep.subr.mxu0 0.0
    %2332 = vmatpush2.msra.mxu0 0.0
    %2333 = vmatprep.subr.mxu0 0.0
    %2334 = vmatpush2.msra.mxu0 0.0
    %2335 = vmatprep.subr.mxu0 0.0
    %2336 = vmatpush2.msra.mxu0 0.0
    %2337 = vmatprep.mubr.f32.mxu0 0.0
    %2338 = vmatmul.mubr.f32.gmra.mxu0 %v2266
    %v2339 = vpop.f32.mrf.mxu0
    %v2340 = vadd.f32 0.0, %v2339
    %v2341 = vpop.f32.mrf.mxu0
    %2342 = vmatprep.mubr.f32.mxu0 0.0
    %2343 = vmatmul.mubr.f32.gmra.mxu0 %v2269
    %v2344 = vpop.f32.mrf.mxu0
    %v2345 = vadd.f32 0.0, %v2344
    %v2346 = vpop.f32.mrf.mxu0
    %2347 = vdwg.mxu0
    %2348 = vrot.lane.b32.xlu0 %v2143, 112
    %v2349 = vpop.permute.xlu0 %2348
    %2350 = vrot.lane.b32.xlu0 %v2144, 112
    %v2351 = vpop.permute.xlu0 %2350
    %2352 = vrot.lane.b32.xlu0 %v2130, 80
    %v2353 = vpop.permute.xlu0 %2352
    %2354 = vrot.lane.b32.xlu0 %v2135, 80
    %v2355 = vpop.permute.xlu0 %2354
    %v2356 = vsel %vm280, %v2349, 0
    %v2358 = vsel %vm280, %v2351, 0
    %v2360 = vsel %vm280, %v2353, 0
    %v2362 = vsel %vm280, %v2355, 0
    %2364 = vmatprep.subr.mxu0 0.0
    %2365 = vmatpush1.xpose.msra.mxu0 0.0
    %2366 = vmatprep.subr.mxu0 0.0
    %2367 = vmatpush1.xpose.msra.mxu0 0.0
    %2368 = vmatprep.subr.mxu0 0.0
    %2369 = vmatpush1.xpose.msra.mxu0 0.0
    %2370 = vmatprep.subr.mxu0 0.0
    %2371 = vmatpush1.xpose.msra.mxu0 0.0
    %2372 = vmatprep.subr.mxu0 0.0
    %2373 = vmatpush1.xpose.msra.mxu0 0.0
    %2374 = vmatprep.subr.mxu0 0.0
    %2375 = vmatpush1.xpose.msra.mxu0 0.0
    %2376 = vmatprep.subr.mxu0 0.0
    %2377 = vmatpush1.xpose.msra.mxu0 0.0
    %2378 = vmatprep.subr.mxu0 0.0
    %2379 = vmatpush1.xpose.msra.mxu0 0.0
    %2380 = vmatprep.subr.mxu0 0.0
    %2381 = vmatpush1.xpose.msra.mxu0 0.0
    %2382 = vmatprep.subr.mxu0 0.0
    %2383 = vmatpush1.xpose.msra.mxu0 0.0
    %2384 = vmatprep.subr.mxu0 0.0
    %2385 = vmatpush1.xpose.msra.mxu0 0.0
    %2386 = vmatprep.subr.mxu0 0.0
    %2387 = vmatpush1.xpose.msra.mxu0 0.0
    %2388 = vmatprep.subr.mxu0 0.0
    %2389 = vmatpush1.xpose.msra.mxu0 0.0
    %2390 = vmatprep.subr.mxu0 0.0
    %2391 = vmatpush1.xpose.msra.mxu0 0.0
    %2392 = vmatprep.subr.mxu0 0.0
    %2393 = vmatpush1.xpose.msra.mxu0 %v2362
    %2394 = vmatprep.subr.mxu0 0.0
    %2395 = vmatpush1.xpose.msra.mxu0 %v2360
    %2396 = vmatprep.subr.mxu0 0.0
    %2397 = vmatpush2.xpose.msra.mxu0 0.0
    %2398 = vmatprep.subr.mxu0 0.0
    %2399 = vmatpush2.xpose.msra.mxu0 0.0
    %2400 = vmatprep.subr.mxu0 0.0
    %2401 = vmatpush2.xpose.msra.mxu0 0.0
    %2402 = vmatprep.subr.mxu0 0.0
    %2403 = vmatpush2.xpose.msra.mxu0 0.0
    %2404 = vmatprep.subr.mxu0 0.0
    %2405 = vmatpush2.xpose.msra.mxu0 0.0
    %2406 = vmatprep.subr.mxu0 0.0
    %2407 = vmatpush2.xpose.msra.mxu0 0.0
    %2408 = vmatprep.subr.mxu0 0.0
    %2409 = vmatpush2.xpose.msra.mxu0 0.0
    %2410 = vmatprep.subr.mxu0 0.0
    %2411 = vmatpush2.xpose.msra.mxu0 0.0
    %2412 = vmatprep.subr.mxu0 0.0
    %2413 = vmatpush2.xpose.msra.mxu0 0.0
    %2414 = vmatprep.subr.mxu0 0.0
    %2415 = vmatpush2.xpose.msra.mxu0 0.0
    %2416 = vmatprep.subr.mxu0 0.0
    %2417 = vmatpush2.xpose.msra.mxu0 0.0
    %2418 = vmatprep.subr.mxu0 0.0
    %2419 = vmatpush2.xpose.msra.mxu0 0.0
    %2420 = vmatprep.subr.mxu0 0.0
    %2421 = vmatpush2.xpose.msra.mxu0 0.0
    %2422 = vmatprep.subr.mxu0 0.0
    %2423 = vmatpush2.xpose.msra.mxu0 0.0
    %2424 = vmatprep.subr.mxu0 0.0
    %2425 = vmatpush2.xpose.msra.mxu0 0.0
    %2426 = vmatprep.subr.mxu0 0.0
    %2427 = vmatpush2.xpose.msra.mxu0 0.0
    %2428 = vmatprep.mubr.f32.mxu0 0.0
    %2429 = vmatmul.mubr.f32.gmra.mxu0 %v2356
    %v2430 = vpop.f32.mrf.mxu0
    %v2431 = vadd.f32 %v958, %v2430
    %v2432 = vpop.f32.mrf.mxu0
    %2433 = vmatprep.mubr.f32.mxu0 0.0
    %2434 = vmatmul.mubr.f32.gmra.mxu0 %v2358
    %v2435 = vpop.f32.mrf.mxu0
    %v2436 = vadd.f32 %v959, %v2435
    %v2437 = vpop.f32.mrf.mxu0
    %2438 = vdwg.mxu0
    %v2439 = vsel %vm2236, %v2431, -inf
    %2440 = vmax.xlane.f32.xlu0 %v2439
    %v2441 = vpop.xlane.xlu0 %2440
    %v2442 = vsel %vm2240, %v2436, -inf
    %2443 = vmax.xlane.f32.xlu0 %v2442
    %v2444 = vpop.xlane.xlu0 %2443
    %v2445 = vsub.f32 %v2431, %v2441
    %v2446 = vsub.f32 %v2436, %v2444
    %v2447 = vmul.f32 %v2445, 1.442695
    %v2448 = vpow.pop %v2447
    %v2449 = vmul.f32 %v2446, 1.442695
    %v2450 = vpow.pop %v2449
    %v2451 = vsel %vm2236, %v2448, 0.0
    %2452 = vadd.xlane.f32.xlu0 %v2451
    %v2453 = vpop.xlane.xlu0 %2452
    %v2454 = vsel %vm2240, %v2450, 0.0
    %2455 = vadd.xlane.f32.xlu0 %v2454
    %v2456 = vpop.xlane.xlu0 %2455
    %v2457 = vrcp.pop %v2453
    %v2458 = vrcp.pop %v2456
    %v2459 = vmul.f32 %v2448, %v2457
    %v2460 = vmul.f32 %v2450, %v2458
    %2461 = vrot.lane.b32.xlu0 %v2130, 48
    %v2462 = vpop.permute.xlu0 %2461
    %2463 = vrot.lane.b32.xlu0 %v2135, 48
    %v2464 = vpop.permute.xlu0 %2463
    %v2467 = vsel %vm2236, %v2459, 0
    %v2470 = vsel %vm2236, %v2460, 0
    %v2472 = vsel %vm190, %v2464, 0
    %2474 = vmatprep.subr.mxu0 0.0
    %2475 = vmatpush1.msra.mxu0 0.0
    %2476 = vmatprep.subr.mxu0 0.0
    %2477 = vmatpush1.msra.mxu0 0.0
    %2478 = vmatprep.subr.mxu0 0.0
    %2479 = vmatpush1.msra.mxu0 0.0
    %2480 = vmatprep.subr.mxu0 0.0
    %2481 = vmatpush1.msra.mxu0 0.0
    %2482 = vmatprep.subr.mxu0 0.0
    %2483 = vmatpush1.msra.mxu0 0.0
    %2484 = vmatprep.subr.mxu0 0.0
    %2485 = vmatpush1.msra.mxu0 0.0
    %2486 = vmatprep.subr.mxu0 0.0
    %2487 = vmatpush1.msra.mxu0 0.0
    %2488 = vmatprep.subr.mxu0 0.0
    %2489 = vmatpush1.msra.mxu0 0.0
    %2490 = vmatprep.subr.mxu0 0.0
    %2491 = vmatpush1.msra.mxu0 0.0
    %2492 = vmatprep.subr.mxu0 0.0
    %2493 = vmatpush1.msra.mxu0 0.0
    %2494 = vmatprep.subr.mxu0 0.0
    %2495 = vmatpush1.msra.mxu0 0.0
    %2496 = vmatprep.subr.mxu0 0.0
    %2497 = vmatpush1.msra.mxu0 0.0
    %2498 = vmatprep.subr.mxu0 0.0
    %2499 = vmatpush1.msra.mxu0 0.0
    %2500 = vmatprep.subr.mxu0 0.0
    %2501 = vmatpush1.msra.mxu0 0.0
    %2502 = vmatprep.subr.mxu0 0.0
    %2503 = vmatpush1.msra.mxu0 %v2472
    %2504 = vmatprep.subr.mxu0 0.0
    %2505 = vmatpush1.msra.mxu0 %v2462
    %2506 = vmatprep.subr.mxu0 0.0
    %2507 = vmatpush2.msra.mxu0 0.0
    %2508 = vmatprep.subr.mxu0 0.0
    %2509 = vmatpush2.msra.mxu0 0.0
    %2510 = vmatprep.subr.mxu0 0.0
    %2511 = vmatpush2.msra.mxu0 0.0
    %2512 = vmatprep.subr.mxu0 0.0
    %2513 = vmatpush2.msra.mxu0 0.0
    %2514 = vmatprep.subr.mxu0 0.0
    %2515 = vmatpush2.msra.mxu0 0.0
    %2516 = vmatprep.subr.mxu0 0.0
    %2517 = vmatpush2.msra.mxu0 0.0
    %2518 = vmatprep.subr.mxu0 0.0
    %2519 = vmatpush2.msra.mxu0 0.0
    %2520 = vmatprep.subr.mxu0 0.0
    %2521 = vmatpush2.msra.mxu0 0.0
    %2522 = vmatprep.subr.mxu0 0.0
    %2523 = vmatpush2.msra.mxu0 0.0
    %2524 = vmatprep.subr.mxu0 0.0
    %2525 = vmatpush2.msra.mxu0 0.0
    %2526 = vmatprep.subr.mxu0 0.0
    %2527 = vmatpush2.msra.mxu0 0.0
    %2528 = vmatprep.subr.mxu0 0.0
    %2529 = vmatpush2.msra.mxu0 0.0
    %2530 = vmatprep.subr.mxu0 0.0
    %2531 = vmatpush2.msra.mxu0 0.0
    %2532 = vmatprep.subr.mxu0 0.0
    %2533 = vmatpush2.msra.mxu0 0.0
    %2534 = vmatprep.subr.mxu0 0.0
    %2535 = vmatpush2.msra.mxu0 0.0
    %2536 = vmatprep.subr.mxu0 0.0
    %2537 = vmatpush2.msra.mxu0 0.0
    %2538 = vmatprep.mubr.f32.mxu0 0.0
    %2539 = vmatmul.mubr.f32.gmra.mxu0 %v2467
    %v2540 = vpop.f32.mrf.mxu0
    %v2541 = vadd.f32 0.0, %v2540
    %v2542 = vpop.f32.mrf.mxu0
    %2543 = vmatprep.mubr.f32.mxu0 0.0
    %2544 = vmatmul.mubr.f32.gmra.mxu0 %v2470
    %v2545 = vpop.f32.mrf.mxu0
    %v2546 = vadd.f32 0.0, %v2545
    %v2547 = vpop.f32.mrf.mxu0
    %2548 = vdwg.mxu0
    %2551 = vrot.lane.b32.xlu0 %v2541, 16
    %v2552 = vpop.permute.xlu0 %2551
    %2553 = vrot.lane.b32.xlu0 %v2546, 16
    %v2554 = vpop.permute.xlu0 %2553
    %v2557 = vsel %vm280, %v2340, %v2552
    %v2558 = vsel %vm280, %v2345, %v2554
    %v2560 = vlaneseq
    %v2561 = vshrl.u32 %v2560, 7
    %v2562 = vsub.s32 0, %v2561
    %v2563 = vrot.slane %v2142, %v2562
    %v2566 = vsel %vm973, %v2557, 0
    %v2569 = vsel %vm973, %v2558, 0
    %2571 = vmatprep.subr.mxu0 0.0
    %2572 = vmatpush1.msra.mxu0 0.0
    %2573 = vmatprep.subr.mxu0 0.0
    %2574 = vmatpush1.msra.mxu0 0.0
    %2575 = vmatprep.subr.mxu0 0.0
    %2576 = vmatpush1.msra.mxu0 0.0
    %2577 = vmatprep.subr.mxu0 0.0
    %2578 = vmatpush1.msra.mxu0 0.0
    %2579 = vmatprep.subr.mxu0 0.0
    %2580 = vmatpush1.msra.mxu0 0.0
    %2581 = vmatprep.subr.mxu0 0.0
    %2582 = vmatpush1.msra.mxu0 0.0
    %2583 = vmatprep.subr.mxu0 0.0
    %2584 = vmatpush1.msra.mxu0 0.0
    %2585 = vmatprep.subr.mxu0 0.0
    %2586 = vmatpush1.msra.mxu0 0.0
    %2587 = vmatprep.subr.mxu0 0.0
    %2588 = vmatpush1.msra.mxu0 0.0
    %2589 = vmatprep.subr.mxu0 0.0
    %2590 = vmatpush1.msra.mxu0 0.0
    %2591 = vmatprep.subr.mxu0 0.0
    %2592 = vmatpush1.msra.mxu0 0.0
    %2593 = vmatprep.subr.mxu0 0.0
    %2594 = vmatpush1.msra.mxu0 0.0
    %2595 = vmatprep.subr.mxu0 0.0
    %2596 = vmatpush1.msra.mxu0 %v2141
    %2597 = vmatprep.subr.mxu0 0.0
    %2598 = vmatpush1.msra.mxu0 %v2140
    %2599 = vmatprep.subr.mxu0 0.0
    %2600 = vmatpush1.msra.mxu0 %v2139
    %2601 = vmatprep.subr.mxu0 0.0
    %2602 = vmatpush1.msra.mxu0 %v2138
    %2603 = vmatprep.subr.mxu0 0.0
    %2604 = vmatpush2.msra.mxu0 0.0
    %2605 = vmatprep.subr.mxu0 0.0
    %2606 = vmatpush2.msra.mxu0 0.0
    %2607 = vmatprep.subr.mxu0 0.0
    %2608 = vmatpush2.msra.mxu0 0.0
    %2609 = vmatprep.subr.mxu0 0.0
    %2610 = vmatpush2.msra.mxu0 0.0
    %2611 = vmatprep.subr.mxu0 0.0
    %2612 = vmatpush2.msra.mxu0 0.0
    %2613 = vmatprep.subr.mxu0 0.0
    %2614 = vmatpush2.msra.mxu0 0.0
    %2615 = vmatprep.subr.mxu0 0.0
    %2616 = vmatpush2.msra.mxu0 0.0
    %2617 = vmatprep.subr.mxu0 0.0
    %2618 = vmatpush2.msra.mxu0 0.0
    %2619 = vmatprep.subr.mxu0 0.0
    %2620 = vmatpush2.msra.mxu0 0.0
    %2621 = vmatprep.subr.mxu0 0.0
    %2622 = vmatpush2.msra.mxu0 0.0
    %2623 = vmatprep.subr.mxu0 0.0
    %2624 = vmatpush2.msra.mxu0 0.0
    %2625 = vmatprep.subr.mxu0 0.0
    %2626 = vmatpush2.msra.mxu0 0.0
    %2627 = vmatprep.subr.mxu0 0.0
    %2628 = vmatpush2.msra.mxu0 0.0
    %2629 = vmatprep.subr.mxu0 0.0
    %2630 = vmatpush2.msra.mxu0 0.0
    %2631 = vmatprep.subr.mxu0 0.0
    %2632 = vmatpush2.msra.mxu0 0.0
    %2633 = vmatprep.subr.mxu0 0.0
    %2634 = vmatpush2.msra.mxu0 0.0
    %2635 = vmatprep.mubr.f32.mxu0 0.0
    %2636 = vmatmul.mubr.f32.gmra.mxu0 %v2566
    %v2637 = vpop.f32.mrf.mxu0
    %v2638 = vadd.f32 %v2563, %v2637
    %v2639 = vpop.f32.mrf.mxu0
    %2640 = vmatprep.mubr.f32.mxu0 0.0
    %2641 = vmatmul.mubr.f32.gmra.mxu0 %v2569
    %v2642 = vpop.f32.mrf.mxu0
    %v2643 = vadd.f32 %v2563, %v2642
    %v2644 = vpop.f32.mrf.mxu0
    %2645 = vdwg.mxu0
    %v2646 = vadd.f32 %v947, %v2638
    %v2647 = vadd.f32 %v952, %v2643
    %v2648 = vsel %vm973, %v2646, 0.0
    %2649 = vadd.xlane.f32.xlu0 %v2648
    %v2650 = vpop.xlane.xlu0 %2649
    %vm2651 = vcmask 254976
    %v2652 = vsel %vm2651, %v2647, 0.0
    %2653 = vadd.xlane.f32.xlu0 %v2652
    %v2654 = vpop.xlane.xlu0 %2653
    %v2655 = vmul.f32 %v2650, %v1667
    %v2656 = vmul.f32 %v2654, %v1667
    %v2657 = vsub.f32 %v2646, %v2655
    %v2658 = vsub.f32 %v2647, %v2656
    %v2659 = vmul.f32 %v2657, %v2657
    %v2660 = vmul.f32 %v2658, %v2658
    %v2661 = vsel %vm973, %v2659, 0.0
    %2662 = vadd.xlane.f32.xlu0 %v2661
    %v2663 = vpop.xlane.xlu0 %2662
    %v2664 = vsel %vm2651, %v2660, 0.0
    %2665 = vadd.xlane.f32.xlu0 %v2664
    %v2666 = vpop.xlane.xlu0 %2665
    %v2667 = vmul.f32 %v2663, %v1667
    %v2668 = vmul.f32 %v2666, %v1667
    %v2669 = vadd.f32 %v2667, 1e-05
    %v2670 = vadd.f32 %v2668, 1e-05
    %v2671 = vrsqrt.pop %v2669
    %v2672 = vrsqrt.pop %v2670
    %v2673 = vmul.f32 %v2657, %v2671
    %v2674 = vmul.f32 %v2658, %v2672
    %v2675 = vld [vmem:[%s4 + $0x11] sm:$0x1]
    %v2677 = vlaneseq
    %v2678 = vshrl.u32 %v2677, 7
    %v2679 = vsub.s32 0, %v2678
    %v2680 = vrot.slane %v2675, %v2679
    %v2682 = vmul.f32 %v2673, %v2680
    %v2683 = vmul.f32 %v2674, %v2680
    %v2684 = vld [vmem:[%s4 + $0x12] sm:$0x1]
    %v2686 = vlaneseq
    %v2687 = vshrl.u32 %v2686, 7
    %v2688 = vsub.s32 0, %v2687
    %v2689 = vrot.slane %v2684, %v2688
    %v2691 = vadd.f32 %v2682, %v2689
    %v2692 = vadd.f32 %v2683, %v2689
    %v2693 = vld [vmem:[#allocation2 + $0x28] sm:$0xff]
    %v2694 = vld [vmem:[#allocation2 + $0x78] sm:$0xff]
    %v2695 = vld [vmem:[#allocation2 + $0xc8] sm:$0xff]
    %v2696 = vld [vmem:[#allocation2 + $0x118] sm:$0xff]
    %v2697 = vld [vmem:[%s4 + $0xc] sm:$0x1]
    %v2699 = vlaneseq
    %v2700 = vshrl.u32 %v2699, 7
    %v2701 = vsub.s32 0, %v2700
    %v2702 = vrot.slane %v2697, %v2701
    %v2705 = vsel %vm973, %v2691, 0
    %v2708 = vsel %vm973, %v2692, 0
    %2710 = vmatprep.subr.mxu0 0.0
    %2711 = vmatpush1.msra.mxu0 0.0
    %2712 = vmatprep.subr.mxu0 0.0
    %2713 = vmatpush1.msra.mxu0 0.0
    %2714 = vmatprep.subr.mxu0 0.0
    %2715 = vmatpush1.msra.mxu0 0.0
    %2716 = vmatprep.subr.mxu0 0.0
    %2717 = vmatpush1.msra.mxu0 0.0
    %2718 = vmatprep.subr.mxu0 0.0
    %2719 = vmatpush1.msra.mxu0 0.0
    %2720 = vmatprep.subr.mxu0 0.0
    %2721 = vmatpush1.msra.mxu0 0.0
    %2722 = vmatprep.subr.mxu0 0.0
    %2723 = vmatpush1.msra.mxu0 0.0
    %2724 = vmatprep.subr.mxu0 0.0
    %2725 = vmatpush1.msra.mxu0 0.0
    %2726 = vmatprep.subr.mxu0 0.0
    %2727 = vmatpush1.msra.mxu0 0.0
    %2728 = vmatprep.subr.mxu0 0.0
    %2729 = vmatpush1.msra.mxu0 0.0
    %2730 = vmatprep.subr.mxu0 0.0
    %2731 = vmatpush1.msra.mxu0 0.0
    %2732 = vmatprep.subr.mxu0 0.0
    %2733 = vmatpush1.msra.mxu0 0.0
    %2734 = vmatprep.subr.mxu0 0.0
    %2735 = vmatpush1.msra.mxu0 %v2696
    %2736 = vmatprep.subr.mxu0 0.0
    %2737 = vmatpush1.msra.mxu0 %v2695
    %2738 = vmatprep.subr.mxu0 0.0
    %2739 = vmatpush1.msra.mxu0 %v2694
    %2740 = vmatprep.subr.mxu0 0.0
    %2741 = vmatpush1.msra.mxu0 %v2693
    %2742 = vmatprep.subr.mxu0 0.0
    %2743 = vmatpush2.msra.mxu0 0.0
    %2744 = vmatprep.subr.mxu0 0.0
    %2745 = vmatpush2.msra.mxu0 0.0
    %2746 = vmatprep.subr.mxu0 0.0
    %2747 = vmatpush2.msra.mxu0 0.0
    %2748 = vmatprep.subr.mxu0 0.0
    %2749 = vmatpush2.msra.mxu0 0.0
    %2750 = vmatprep.subr.mxu0 0.0
    %2751 = vmatpush2.msra.mxu0 0.0
    %2752 = vmatprep.subr.mxu0 0.0
    %2753 = vmatpush2.msra.mxu0 0.0
    %2754 = vmatprep.subr.mxu0 0.0
    %2755 = vmatpush2.msra.mxu0 0.0
    %2756 = vmatprep.subr.mxu0 0.0
    %2757 = vmatpush2.msra.mxu0 0.0
    %2758 = vmatprep.subr.mxu0 0.0
    %2759 = vmatpush2.msra.mxu0 0.0
    %2760 = vmatprep.subr.mxu0 0.0
    %2761 = vmatpush2.msra.mxu0 0.0
    %2762 = vmatprep.subr.mxu0 0.0
    %2763 = vmatpush2.msra.mxu0 0.0
    %2764 = vmatprep.subr.mxu0 0.0
    %2765 = vmatpush2.msra.mxu0 0.0
    %2766 = vmatprep.subr.mxu0 0.0
    %2767 = vmatpush2.msra.mxu0 0.0
    %2768 = vmatprep.subr.mxu0 0.0
    %2769 = vmatpush2.msra.mxu0 0.0
    %2770 = vmatprep.subr.mxu0 0.0
    %2771 = vmatpush2.msra.mxu0 0.0
    %2772 = vmatprep.subr.mxu0 0.0
    %2773 = vmatpush2.msra.mxu0 0.0
    %2774 = vmatprep.mubr.f32.mxu0 0.0
    %2775 = vmatmul.mubr.f32.gmra.mxu0 %v2705
    %v2776 = vpop.f32.mrf.mxu0
    %v2777 = vadd.f32 %v2702, %v2776
    %v2778 = vpop.f32.mrf.mxu0
    %2779 = vmatprep.mubr.f32.mxu0 0.0
    %2780 = vmatmul.mubr.f32.gmra.mxu0 %v2708
    %v2781 = vpop.f32.mrf.mxu0
    %v2782 = vadd.f32 %v2702, %v2781
    %v2783 = vpop.f32.mrf.mxu0
    %2784 = vdwg.mxu0
    %v2785 = vld [vmem:[#allocation2 + $0x30] sm:$0xff]
    %v2786 = vld [vmem:[#allocation2 + $0x80] sm:$0xff]
    %v2787 = vld [vmem:[#allocation2 + $0xd0] sm:$0xff]
    %v2788 = vld [vmem:[#allocation2 + $0x120] sm:$0xff]
    %v2789 = vld [vmem:[%s4 + $0xd] sm:$0x1]
    %v2791 = vlaneseq
    %v2792 = vshrl.u32 %v2791, 7
    %v2793 = vsub.s32 0, %v2792
    %v2794 = vrot.slane %v2789, %v2793
    %v2797 = vsel %vm973, %v2043, 0
    %v2800 = vsel %vm973, %v2044, 0
    %v2803 = vsel %vm973, %v2045, 0
    %2805 = vmatprep.subr.mxu0 0.0
    %2806 = vmatpush1.msra.mxu0 0.0
    %2807 = vmatprep.subr.mxu0 0.0
    %2808 = vmatpush1.msra.mxu0 0.0
    %2809 = vmatprep.subr.mxu0 0.0
    %2810 = vmatpush1.msra.mxu0 0.0
    %2811 = vmatprep.subr.mxu0 0.0
    %2812 = vmatpush1.msra.mxu0 0.0
    %2813 = vmatprep.subr.mxu0 0.0
    %2814 = vmatpush1.msra.mxu0 0.0
    %2815 = vmatprep.subr.mxu0 0.0
    %2816 = vmatpush1.msra.mxu0 0.0
    %2817 = vmatprep.subr.mxu0 0.0
    %2818 = vmatpush1.msra.mxu0 0.0
    %2819 = vmatprep.subr.mxu0 0.0
    %2820 = vmatpush1.msra.mxu0 0.0
    %2821 = vmatprep.subr.mxu0 0.0
    %2822 = vmatpush1.msra.mxu0 0.0
    %2823 = vmatprep.subr.mxu0 0.0
    %2824 = vmatpush1.msra.mxu0 0.0
    %2825 = vmatprep.subr.mxu0 0.0
    %2826 = vmatpush1.msra.mxu0 0.0
    %2827 = vmatprep.subr.mxu0 0.0
    %2828 = vmatpush1.msra.mxu0 0.0
    %2829 = vmatprep.subr.mxu0 0.0
    %2830 = vmatpush1.msra.mxu0 %v2788
    %2831 = vmatprep.subr.mxu0 0.0
    %2832 = vmatpush1.msra.mxu0 %v2787
    %2833 = vmatprep.subr.mxu0 0.0
    %2834 = vmatpush1.msra.mxu0 %v2786
    %2835 = vmatprep.subr.mxu0 0.0
    %2836 = vmatpush1.msra.mxu0 %v2785
    %2837 = vmatprep.subr.mxu0 0.0
    %2838 = vmatpush2.msra.mxu0 0.0
    %2839 = vmatprep.subr.mxu0 0.0
    %2840 = vmatpush2.msra.mxu0 0.0
    %2841 = vmatprep.subr.mxu0 0.0
    %2842 = vmatpush2.msra.mxu0 0.0
    %2843 = vmatprep.subr.mxu0 0.0
    %2844 = vmatpush2.msra.mxu0 0.0
    %2845 = vmatprep.subr.mxu0 0.0
    %2846 = vmatpush2.msra.mxu0 0.0
    %2847 = vmatprep.subr.mxu0 0.0
    %2848 = vmatpush2.msra.mxu0 0.0
    %2849 = vmatprep.subr.mxu0 0.0
    %2850 = vmatpush2.msra.mxu0 0.0
    %2851 = vmatprep.subr.mxu0 0.0
    %2852 = vmatpush2.msra.mxu0 0.0
    %2853 = vmatprep.subr.mxu0 0.0
    %2854 = vmatpush2.msra.mxu0 0.0
    %2855 = vmatprep.subr.mxu0 0.0
    %2856 = vmatpush2.msra.mxu0 0.0
    %2857 = vmatprep.subr.mxu0 0.0
    %2858 = vmatpush2.msra.mxu0 0.0
    %2859 = vmatprep.subr.mxu0 0.0
    %2860 = vmatpush2.msra.mxu0 0.0
    %2861 = vmatprep.subr.mxu0 0.0
    %2862 = vmatpush2.msra.mxu0 0.0
    %2863 = vmatprep.subr.mxu0 0.0
    %2864 = vmatpush2.msra.mxu0 0.0
    %2865 = vmatprep.subr.mxu0 0.0
    %2866 = vmatpush2.msra.mxu0 0.0
    %2867 = vmatprep.subr.mxu0 0.0
    %2868 = vmatpush2.msra.mxu0 0.0
    %2869 = vmatprep.mubr.f32.mxu0 0.0
    %2870 = vmatmul.mubr.f32.gmra.mxu0 %v2797
    %v2871 = vpop.f32.mrf.mxu0
    %v2872 = vadd.f32 %v2794, %v2871
    %v2873 = vpop.f32.mrf.mxu0
    %2874 = vmatprep.mubr.f32.mxu0 0.0
    %2875 = vmatmul.mubr.f32.gmra.mxu0 %v2800
    %v2876 = vpop.f32.mrf.mxu0
    %v2877 = vadd.f32 %v2794, %v2876
    %v2878 = vpop.f32.mrf.mxu0
    %2879 = vmatprep.mubr.f32.mxu0 0.0
    %2880 = vmatmul.mubr.f32.gmra.mxu0 %v2803
    %v2881 = vpop.f32.mrf.mxu0
    %v2882 = vadd.f32 %v2794, %v2881
    %v2883 = vpop.f32.mrf.mxu0
    %2884 = vdwg.mxu0
    %v2885 = vld [vmem:[#allocation2 + $0x38] sm:$0xff]
    %v2886 = vld [vmem:[#allocation2 + $0x88] sm:$0xff]
    %v2887 = vld [vmem:[#allocation2 + $0xd8] sm:$0xff]
    %v2888 = vld [vmem:[#allocation2 + $0x128] sm:$0xff]
    %v2889 = vld [vmem:[%s4 + $0xe] sm:$0x1]
    %v2890 = vmul.f32 %v2777, 0.25
    %v2891 = vmul.f32 %v2782, 0.25
    %v2893 = vsel %vm280, %v2890, 0
    %v2896 = vsel %vm280, %v2891, 0
    %v2899 = vsel %vm280, %v2872, 0
    %v2902 = vsel %vm280, %v2877, 0
    %v2905 = vsel %vm280, %v2882, 0
    %2907 = vmatprep.subr.mxu0 0.0
    %2908 = vmatpush1.xpose.msra.mxu0 0.0
    %2909 = vmatprep.subr.mxu0 0.0
    %2910 = vmatpush1.xpose.msra.mxu0 0.0
    %2911 = vmatprep.subr.mxu0 0.0
    %2912 = vmatpush1.xpose.msra.mxu0 0.0
    %2913 = vmatprep.subr.mxu0 0.0
    %2914 = vmatpush1.xpose.msra.mxu0 0.0
    %2915 = vmatprep.subr.mxu0 0.0
    %2916 = vmatpush1.xpose.msra.mxu0 0.0
    %2917 = vmatprep.subr.mxu0 0.0
    %2918 = vmatpush1.xpose.msra.mxu0 0.0
    %2919 = vmatprep.subr.mxu0 0.0
    %2920 = vmatpush1.xpose.msra.mxu0 0.0
    %2921 = vmatprep.subr.mxu0 0.0
    %2922 = vmatpush1.xpose.msra.mxu0 0.0
    %2923 = vmatprep.subr.mxu0 0.0
    %2924 = vmatpush1.xpose.msra.mxu0 0.0
    %2925 = vmatprep.subr.mxu0 0.0
    %2926 = vmatpush1.xpose.msra.mxu0 0.0
    %2927 = vmatprep.subr.mxu0 0.0
    %2928 = vmatpush1.xpose.msra.mxu0 0.0
    %2929 = vmatprep.subr.mxu0 0.0
    %2930 = vmatpush1.xpose.msra.mxu0 0.0
    %2931 = vmatprep.subr.mxu0 0.0
    %2932 = vmatpush1.xpose.msra.mxu0 0.0
    %2933 = vmatprep.subr.mxu0 0.0
    %2934 = vmatpush1.xpose.msra.mxu0 %v2905
    %2935 = vmatprep.subr.mxu0 0.0
    %2936 = vmatpush1.xpose.msra.mxu0 %v2902
    %2937 = vmatprep.subr.mxu0 0.0
    %2938 = vmatpush1.xpose.msra.mxu0 %v2899
    %2939 = vmatprep.subr.mxu0 0.0
    %2940 = vmatpush2.xpose.msra.mxu0 0.0
    %2941 = vmatprep.subr.mxu0 0.0
    %2942 = vmatpush2.xpose.msra.mxu0 0.0
    %2943 = vmatprep.subr.mxu0 0.0
    %2944 = vmatpush2.xpose.msra.mxu0 0.0
    %2945 = vmatprep.subr.mxu0 0.0
    %2946 = vmatpush2.xpose.msra.mxu0 0.0
    %2947 = vmatprep.subr.mxu0 0.0
    %2948 = vmatpush2.xpose.msra.mxu0 0.0
    %2949 = vmatprep.subr.mxu0 0.0
    %2950 = vmatpush2.xpose.msra.mxu0 0.0
    %2951 = vmatprep.subr.mxu0 0.0
    %2952 = vmatpush2.xpose.msra.mxu0 0.0
    %2953 = vmatprep.subr.mxu0 0.0
    %2954 = vmatpush2.xpose.msra.mxu0 0.0
    %2955 = vmatprep.subr.mxu0 0.0
    %2956 = vmatpush2.xpose.msra.mxu0 0.0
    %2957 = vmatprep.subr.mxu0 0.0
    %2958 = vmatpush2.xpose.msra.mxu0 0.0
    %2959 = vmatprep.subr.mxu0 0.0
    %2960 = vmatpush2.xpose.msra.mxu0 0.0
    %2961 = vmatprep.subr.mxu0 0.0
    %2962 = vmatpush2.xpose.msra.mxu0 0.0
    %2963 = vmatprep.subr.mxu0 0.0
    %2964 = vmatpush2.xpose.msra.mxu0 0.0
    %2965 = vmatprep.subr.mxu0 0.0
    %2966 = vmatpush2.xpose.msra.mxu0 0.0
    %2967 = vmatprep.subr.mxu0 0.0
    %2968 = vmatpush2.xpose.msra.mxu0 0.0
    %2969 = vmatprep.subr.mxu0 0.0
    %2970 = vmatpush2.xpose.msra.mxu0 0.0
    %2971 = vmatprep.mubr.f32.mxu0 0.0
    %2972 = vmatmul.mubr.f32.gmra.mxu0 %v2893
    %v2973 = vpop.f32.mrf.mxu0
    %v2974 = vadd.f32 %v960, %v2973
    %v2975 = vpop.f32.mrf.mxu0
    %2976 = vmatprep.mubr.f32.mxu0 0.0
    %2977 = vmatmul.mubr.f32.gmra.mxu0 %v2896
    %v2978 = vpop.f32.mrf.mxu0
    %v2979 = vadd.f32 %v961, %v2978
    %v2980 = vpop.f32.mrf.mxu0
    %2981 = vdwg.mxu0
    %v2982 = vsel %vm463, %v2974, -inf
    %2983 = vmax.xlane.f32.xlu0 %v2982
    %v2984 = vpop.xlane.xlu0 %2983
    %vm2985 = vcmask 156672
    %v2986 = vsel %vm2985, %v2979, -inf
    %2987 = vmax.xlane.f32.xlu0 %v2986
    %v2988 = vpop.xlane.xlu0 %2987
    %v2989 = vsub.f32 %v2974, %v2984
    %v2990 = vsub.f32 %v2979, %v2988
    %v2991 = vmul.f32 %v2989, 1.442695
    %v2992 = vpow.pop %v2991
    %v2993 = vmul.f32 %v2990, 1.442695
    %v2994 = vpow.pop %v2993
    %v2995 = vsel %vm463, %v2992, 0.0
    %2996 = vadd.xlane.f32.xlu0 %v2995
    %v2997 = vpop.xlane.xlu0 %2996
    %v2998 = vsel %vm2985, %v2994, 0.0
    %2999 = vadd.xlane.f32.xlu0 %v2998
    %v3000 = vpop.xlane.xlu0 %2999
    %v3001 = vrcp.pop %v2997
    %v3002 = vrcp.pop %v3000
    %v3003 = vmul.f32 %v2992, %v3001
    %v3004 = vmul.f32 %v2994, %v3002
    %3005 = vrot.lane.b32.xlu0 %v2872, 96
    %v3006 = vpop.permute.xlu0 %3005
    %3007 = vrot.lane.b32.xlu0 %v2877, 96
    %v3008 = vpop.permute.xlu0 %3007
    %3009 = vrot.lane.b32.xlu0 %v2882, 96
    %v3010 = vpop.permute.xlu0 %3009
    %v3014 = vsel %vm463, %v3003, 0
    %v3017 = vsel %vm463, %v3004, 0
    %v3019 = vsel %vm473, %v3010, 0
    %3021 = vmatprep.subr.mxu0 0.0
    %3022 = vmatpush1.msra.mxu0 0.0
    %3023 = vmatprep.subr.mxu0 0.0
    %3024 = vmatpush1.msra.mxu0 0.0
    %3025 = vmatprep.subr.mxu0 0.0
    %3026 = vmatpush1.msra.mxu0 0.0
    %3027 = vmatprep.subr.mxu0 0.0
    %3028 = vmatpush1.msra.mxu0 0.0
    %3029 = vmatprep.subr.mxu0 0.0
    %3030 = vmatpush1.msra.mxu0 0.0
    %3031 = vmatprep.subr.mxu0 0.0
    %3032 = vmatpush1.msra.mxu0 0.0
    %3033 = vmatprep.subr.mxu0 0.0
    %3034 = vmatpush1.msra.mxu0 0.0
    %3035 = vmatprep.subr.mxu0 0.0
    %3036 = vmatpush1.msra.mxu0 0.0
    %3037 = vmatprep.subr.mxu0 0.0
    %3038 = vmatpush1.msra.mxu0 0.0
    %3039 = vmatprep.subr.mxu0 0.0
    %3040 = vmatpush1.msra.mxu0 0.0
    %3041 = vmatprep.subr.mxu0 0.0
    %3042 = vmatpush1.msra.mxu0 0.0
    %3043 = vmatprep.subr.mxu0 0.0
    %3044 = vmatpush1.msra.mxu0 0.0
    %3045 = vmatprep.subr.mxu0 0.0
    %3046 = vmatpush1.msra.mxu0 0.0
    %3047 = vmatprep.subr.mxu0 0.0
    %3048 = vmatpush1.msra.mxu0 %v3019
    %3049 = vmatprep.subr.mxu0 0.0
    %3050 = vmatpush1.msra.mxu0 %v3008
    %3051 = vmatprep.subr.mxu0 0.0
    %3052 = vmatpush1.msra.mxu0 %v3006
    %3053 = vmatprep.subr.mxu0 0.0
    %3054 = vmatpush2.msra.mxu0 0.0
    %3055 = vmatprep.subr.mxu0 0.0
    %3056 = vmatpush2.msra.mxu0 0.0
    %3057 = vmatprep.subr.mxu0 0.0
    %3058 = vmatpush2.msra.mxu0 0.0
    %3059 = vmatprep.subr.mxu0 0.0
    %3060 = vmatpush2.msra.mxu0 0.0
    %3061 = vmatprep.subr.mxu0 0.0
    %3062 = vmatpush2.msra.mxu0 0.0
    %3063 = vmatprep.subr.mxu0 0.0
    %3064 = vmatpush2.msra.mxu0 0.0
    %3065 = vmatprep.subr.mxu0 0.0
    %3066 = vmatpush2.msra.mxu0 0.0
    %3067 = vmatprep.subr.mxu0 0.0
    %3068 = vmatpush2.msra.mxu0 0.0
    %3069 = vmatprep.subr.mxu0 0.0
    %3070 = vmatpush2.msra.mxu0 0.0
    %3071 = vmatprep.subr.mxu0 0.0
    %3072 = vmatpush2.msra.mxu0 0.0
    %3073 = vmatprep.subr.mxu0 0.0
    %3074 = vmatpush2.msra.mxu0 0.0
    %3075 = vmatprep.subr.mxu0 0.0
    %3076 = vmatpush2.msra.mxu0 0.0
    %3077 = vmatprep.subr.mxu0 0.0
    %3078 = vmatpush2.msra.mxu0 0.0
    %3079 = vmatprep.subr.mxu0 0.0
    %3080 = vmatpush2.msra.mxu0 0.0
    %3081 = vmatprep.subr.mxu0 0.0
    %3082 = vmatpush2.msra.mxu0 0.0
    %3083 = vmatprep.subr.mxu0 0.0
    %3084 = vmatpush2.msra.mxu0 0.0
    %3085 = vmatprep.mubr.f32.mxu0 0.0
    %3086 = vmatmul.mubr.f32.gmra.mxu0 %v3014
    %v3087 = vpop.f32.mrf.mxu0
    %v3088 = vadd.f32 0.0, %v3087
    %v3089 = vpop.f32.mrf.mxu0
    %3090 = vmatprep.mubr.f32.mxu0 0.0
    %3091 = vmatmul.mubr.f32.gmra.mxu0 %v3017
    %v3092 = vpop.f32.mrf.mxu0
    %v3093 = vadd.f32 0.0, %v3092
    %v3094 = vpop.f32.mrf.mxu0
    %3095 = vdwg.mxu0
    %3096 = vrot.lane.b32.xlu0 %v2890, 112
    %v3097 = vpop.permute.xlu0 %3096
    %3098 = vrot.lane.b32.xlu0 %v2891, 112
    %v3099 = vpop.permute.xlu0 %3098
    %3100 = vrot.lane.b32.xlu0 %v2872, 112
    %v3101 = vpop.permute.xlu0 %3100
    %3102 = vrot.lane.b32.xlu0 %v2877, 112
    %v3103 = vpop.permute.xlu0 %3102
    %3104 = vrot.lane.b32.xlu0 %v2882, 112
    %v3105 = vpop.permute.xlu0 %3104
    %v3106 = vsel %vm280, %v3097, 0
    %v3108 = vsel %vm280, %v3099, 0
    %v3110 = vsel %vm280, %v3101, 0
    %v3112 = vsel %vm280, %v3103, 0
    %v3114 = vsel %vm280, %v3105, 0
    %3116 = vmatprep.subr.mxu0 0.0
    %3117 = vmatpush1.xpose.msra.mxu0 0.0
    %3118 = vmatprep.subr.mxu0 0.0
    %3119 = vmatpush1.xpose.msra.mxu0 0.0
    %3120 = vmatprep.subr.mxu0 0.0
    %3121 = vmatpush1.xpose.msra.mxu0 0.0
    %3122 = vmatprep.subr.mxu0 0.0
    %3123 = vmatpush1.xpose.msra.mxu0 0.0
    %3124 = vmatprep.subr.mxu0 0.0
    %3125 = vmatpush1.xpose.msra.mxu0 0.0
    %3126 = vmatprep.subr.mxu0 0.0
    %3127 = vmatpush1.xpose.msra.mxu0 0.0
    %3128 = vmatprep.subr.mxu0 0.0
    %3129 = vmatpush1.xpose.msra.mxu0 0.0
    %3130 = vmatprep.subr.mxu0 0.0
    %3131 = vmatpush1.xpose.msra.mxu0 0.0
    %3132 = vmatprep.subr.mxu0 0.0
    %3133 = vmatpush1.xpose.msra.mxu0 0.0
    %3134 = vmatprep.subr.mxu0 0.0
    %3135 = vmatpush1.xpose.msra.mxu0 0.0
    %3136 = vmatprep.subr.mxu0 0.0
    %3137 = vmatpush1.xpose.msra.mxu0 0.0
    %3138 = vmatprep.subr.mxu0 0.0
    %3139 = vmatpush1.xpose.msra.mxu0 0.0
    %3140 = vmatprep.subr.mxu0 0.0
    %3141 = vmatpush1.xpose.msra.mxu0 0.0
    %3142 = vmatprep.subr.mxu0 0.0
    %3143 = vmatpush1.xpose.msra.mxu0 %v3114
    %3144 = vmatprep.subr.mxu0 0.0
    %3145 = vmatpush1.xpose.msra.mxu0 %v3112
    %3146 = vmatprep.subr.mxu0 0.0
    %3147 = vmatpush1.xpose.msra.mxu0 %v3110
    %3148 = vmatprep.subr.mxu0 0.0
    %3149 = vmatpush2.xpose.msra.mxu0 0.0
    %3150 = vmatprep.subr.mxu0 0.0
    %3151 = vmatpush2.xpose.msra.mxu0 0.0
    %3152 = vmatprep.subr.mxu0 0.0
    %3153 = vmatpush2.xpose.msra.mxu0 0.0
    %3154 = vmatprep.subr.mxu0 0.0
    %3155 = vmatpush2.xpose.msra.mxu0 0.0
    %3156 = vmatprep.subr.mxu0 0.0
    %3157 = vmatpush2.xpose.msra.mxu0 0.0
    %3158 = vmatprep.subr.mxu0 0.0
    %3159 = vmatpush2.xpose.msra.mxu0 0.0
    %3160 = vmatprep.subr.mxu0 0.0
    %3161 = vmatpush2.xpose.msra.mxu0 0.0
    %3162 = vmatprep.subr.mxu0 0.0
    %3163 = vmatpush2.xpose.msra.mxu0 0.0
    %3164 = vmatprep.subr.mxu0 0.0
    %3165 = vmatpush2.xpose.msra.mxu0 0.0
    %3166 = vmatprep.subr.mxu0 0.0
    %3167 = vmatpush2.xpose.msra.mxu0 0.0
    %3168 = vmatprep.subr.mxu0 0.0
    %3169 = vmatpush2.xpose.msra.mxu0 0.0
    %3170 = vmatprep.subr.mxu0 0.0
    %3171 = vmatpush2.xpose.msra.mxu0 0.0
    %3172 = vmatprep.subr.mxu0 0.0
    %3173 = vmatpush2.xpose.msra.mxu0 0.0
    %3174 = vmatprep.subr.mxu0 0.0
    %3175 = vmatpush2.xpose.msra.mxu0 0.0
    %3176 = vmatprep.subr.mxu0 0.0
    %3177 = vmatpush2.xpose.msra.mxu0 0.0
    %3178 = vmatprep.subr.mxu0 0.0
    %3179 = vmatpush2.xpose.msra.mxu0 0.0
    %3180 = vmatprep.mubr.f32.mxu0 0.0
    %3181 = vmatmul.mubr.f32.gmra.mxu0 %v3106
    %v3182 = vpop.f32.mrf.mxu0
    %v3183 = vadd.f32 %v960, %v3182
    %v3184 = vpop.f32.mrf.mxu0
    %3185 = vmatprep.mubr.f32.mxu0 0.0
    %3186 = vmatmul.mubr.f32.gmra.mxu0 %v3108
    %v3187 = vpop.f32.mrf.mxu0
    %v3188 = vadd.f32 %v961, %v3187
    %v3189 = vpop.f32.mrf.mxu0
    %3190 = vdwg.mxu0
    %v3191 = vsel %vm463, %v3183, -inf
    %3192 = vmax.xlane.f32.xlu0 %v3191
    %v3193 = vpop.xlane.xlu0 %3192
    %v3194 = vsel %vm2985, %v3188, -inf
    %3195 = vmax.xlane.f32.xlu0 %v3194
    %v3196 = vpop.xlane.xlu0 %3195
    %v3197 = vsub.f32 %v3183, %v3193
    %v3198 = vsub.f32 %v3188, %v3196
    %v3199 = vmul.f32 %v3197, 1.442695
    %v3200 = vpow.pop %v3199
    %v3201 = vmul.f32 %v3198, 1.442695
    %v3202 = vpow.pop %v3201
    %v3203 = vsel %vm463, %v3200, 0.0
    %3204 = vadd.xlane.f32.xlu0 %v3203
    %v3205 = vpop.xlane.xlu0 %3204
    %v3206 = vsel %vm2985, %v3202, 0.0
    %3207 = vadd.xlane.f32.xlu0 %v3206
    %v3208 = vpop.xlane.xlu0 %3207
    %v3209 = vrcp.pop %v3205
    %v3210 = vrcp.pop %v3208
    %v3211 = vmul.f32 %v3200, %v3209
    %v3212 = vmul.f32 %v3202, %v3210
    %3213 = vrot.lane.b32.xlu0 %v2872, 80
    %v3214 = vpop.permute.xlu0 %3213
    %3215 = vrot.lane.b32.xlu0 %v2877, 80
    %v3216 = vpop.permute.xlu0 %3215
    %3217 = vrot.lane.b32.xlu0 %v2882, 80
    %v3218 = vpop.permute.xlu0 %3217
    %v3222 = vsel %vm463, %v3211, 0
    %v3225 = vsel %vm463, %v3212, 0
    %v3227 = vsel %vm473, %v3218, 0
    %3229 = vmatprep.subr.mxu0 0.0
    %3230 = vmatpush1.msra.mxu0 0.0
    %3231 = vmatprep.subr.mxu0 0.0
    %3232 = vmatpush1.msra.mxu0 0.0
    %3233 = vmatprep.subr.mxu0 0.0
    %3234 = vmatpush1.msra.mxu0 0.0
    %3235 = vmatprep.subr.mxu0 0.0
    %3236 = vmatpush1.msra.mxu0 0.0
    %3237 = vmatprep.subr.mxu0 0.0
    %3238 = vmatpush1.msra.mxu0 0.0
    %3239 = vmatprep.subr.mxu0 0.0
    %3240 = vmatpush1.msra.mxu0 0.0
    %3241 = vmatprep.subr.mxu0 0.0
    %3242 = vmatpush1.msra.mxu0 0.0
    %3243 = vmatprep.subr.mxu0 0.0
    %3244 = vmatpush1.msra.mxu0 0.0
    %3245 = vmatprep.subr.mxu0 0.0
    %3246 = vmatpush1.msra.mxu0 0.0
    %3247 = vmatprep.subr.mxu0 0.0
    %3248 = vmatpush1.msra.mxu0 0.0
    %3249 = vmatprep.subr.mxu0 0.0
    %3250 = vmatpush1.msra.mxu0 0.0
    %3251 = vmatprep.subr.mxu0 0.0
    %3252 = vmatpush1.msra.mxu0 0.0
    %3253 = vmatprep.subr.mxu0 0.0
    %3254 = vmatpush1.msra.mxu0 0.0
    %3255 = vmatprep.subr.mxu0 0.0
    %3256 = vmatpush1.msra.mxu0 %v3227
    %3257 = vmatprep.subr.mxu0 0.0
    %3258 = vmatpush1.msra.mxu0 %v3216
    %3259 = vmatprep.subr.mxu0 0.0
    %3260 = vmatpush1.msra.mxu0 %v3214
    %3261 = vmatprep.subr.mxu0 0.0
    %3262 = vmatpush2.msra.mxu0 0.0
    %3263 = vmatprep.subr.mxu0 0.0
    %3264 = vmatpush2.msra.mxu0 0.0
    %3265 = vmatprep.subr.mxu0 0.0
    %3266 = vmatpush2.msra.mxu0 0.0
    %3267 = vmatprep.subr.mxu0 0.0
    %3268 = vmatpush2.msra.mxu0 0.0
    %3269 = vmatprep.subr.mxu0 0.0
    %3270 = vmatpush2.msra.mxu0 0.0
    %3271 = vmatprep.subr.mxu0 0.0
    %3272 = vmatpush2.msra.mxu0 0.0
    %3273 = vmatprep.subr.mxu0 0.0
    %3274 = vmatpush2.msra.mxu0 0.0
    %3275 = vmatprep.subr.mxu0 0.0
    %3276 = vmatpush2.msra.mxu0 0.0
    %3277 = vmatprep.subr.mxu0 0.0
    %3278 = vmatpush2.msra.mxu0 0.0
    %3279 = vmatprep.subr.mxu0 0.0
    %3280 = vmatpush2.msra.mxu0 0.0
    %3281 = vmatprep.subr.mxu0 0.0
    %3282 = vmatpush2.msra.mxu0 0.0
    %3283 = vmatprep.subr.mxu0 0.0
    %3284 = vmatpush2.msra.mxu0 0.0
    %3285 = vmatprep.subr.mxu0 0.0
    %3286 = vmatpush2.msra.mxu0 0.0
    %3287 = vmatprep.subr.mxu0 0.0
    %3288 = vmatpush2.msra.mxu0 0.0
    %3289 = vmatprep.subr.mxu0 0.0
    %3290 = vmatpush2.msra.mxu0 0.0
    %3291 = vmatprep.subr.mxu0 0.0
    %3292 = vmatpush2.msra.mxu0 0.0
    %3293 = vmatprep.mubr.f32.mxu0 0.0
    %3294 = vmatmul.mubr.f32.gmra.mxu0 %v3222
    %v3295 = vpop.f32.mrf.mxu0
    %v3296 = vadd.f32 0.0, %v3295
    %v3297 = vpop.f32.mrf.mxu0
    %3298 = vmatprep.mubr.f32.mxu0 0.0
    %3299 = vmatmul.mubr.f32.gmra.mxu0 %v3225
    %v3300 = vpop.f32.mrf.mxu0
    %v3301 = vadd.f32 0.0, %v3300
    %v3302 = vpop.f32.mrf.mxu0
    %3303 = vdwg.mxu0
    %3306 = vrot.lane.b32.xlu0 %v3296, 16
    %v3307 = vpop.permute.xlu0 %3306
    %3308 = vrot.lane.b32.xlu0 %v3301, 16
    %v3309 = vpop.permute.xlu0 %3308
    %v3312 = vsel %vm280, %v3088, %v3307
    %v3313 = vsel %vm280, %v3093, %v3309
    %v3315 = vlaneseq
    %v3316 = vshrl.u32 %v3315, 7
    %v3317 = vsub.s32 0, %v3316
    %v3318 = vrot.slane %v2889, %v3317
    %v3321 = vsel %vm973, %v3312, 0
    %v3324 = vsel %vm973, %v3313, 0
    %3326 = vmatprep.subr.mxu0 0.0
    %3327 = vmatpush1.msra.mxu0 0.0
    %3328 = vmatprep.subr.mxu0 0.0
    %3329 = vmatpush1.msra.mxu0 0.0
    %3330 = vmatprep.subr.mxu0 0.0
    %3331 = vmatpush1.msra.mxu0 0.0
    %3332 = vmatprep.subr.mxu0 0.0
    %3333 = vmatpush1.msra.mxu0 0.0
    %3334 = vmatprep.subr.mxu0 0.0
    %3335 = vmatpush1.msra.mxu0 0.0
    %3336 = vmatprep.subr.mxu0 0.0
    %3337 = vmatpush1.msra.mxu0 0.0
    %3338 = vmatprep.subr.mxu0 0.0
    %3339 = vmatpush1.msra.mxu0 0.0
    %3340 = vmatprep.subr.mxu0 0.0
    %3341 = vmatpush1.msra.mxu0 0.0
    %3342 = vmatprep.subr.mxu0 0.0
    %3343 = vmatpush1.msra.mxu0 0.0
    %3344 = vmatprep.subr.mxu0 0.0
    %3345 = vmatpush1.msra.mxu0 0.0
    %3346 = vmatprep.subr.mxu0 0.0
    %3347 = vmatpush1.msra.mxu0 0.0
    %3348 = vmatprep.subr.mxu0 0.0
    %3349 = vmatpush1.msra.mxu0 0.0
    %3350 = vmatprep.subr.mxu0 0.0
    %3351 = vmatpush1.msra.mxu0 %v2888
    %3352 = vmatprep.subr.mxu0 0.0
    %3353 = vmatpush1.msra.mxu0 %v2887
    %3354 = vmatprep.subr.mxu0 0.0
    %3355 = vmatpush1.msra.mxu0 %v2886
    %3356 = vmatprep.subr.mxu0 0.0
    %3357 = vmatpush1.msra.mxu0 %v2885
    %3358 = vmatprep.subr.mxu0 0.0
    %3359 = vmatpush2.msra.mxu0 0.0
    %3360 = vmatprep.subr.mxu0 0.0
    %3361 = vmatpush2.msra.mxu0 0.0
    %3362 = vmatprep.subr.mxu0 0.0
    %3363 = vmatpush2.msra.mxu0 0.0
    %3364 = vmatprep.subr.mxu0 0.0
    %3365 = vmatpush2.msra.mxu0 0.0
    %3366 = vmatprep.subr.mxu0 0.0
    %3367 = vmatpush2.msra.mxu0 0.0
    %3368 = vmatprep.subr.mxu0 0.0
    %3369 = vmatpush2.msra.mxu0 0.0
    %3370 = vmatprep.subr.mxu0 0.0
    %3371 = vmatpush2.msra.mxu0 0.0
    %3372 = vmatprep.subr.mxu0 0.0
    %3373 = vmatpush2.msra.mxu0 0.0
    %3374 = vmatprep.subr.mxu0 0.0
    %3375 = vmatpush2.msra.mxu0 0.0
    %3376 = vmatprep.subr.mxu0 0.0
    %3377 = vmatpush2.msra.mxu0 0.0
    %3378 = vmatprep.subr.mxu0 0.0
    %3379 = vmatpush2.msra.mxu0 0.0
    %3380 = vmatprep.subr.mxu0 0.0
    %3381 = vmatpush2.msra.mxu0 0.0
    %3382 = vmatprep.subr.mxu0 0.0
    %3383 = vmatpush2.msra.mxu0 0.0
    %3384 = vmatprep.subr.mxu0 0.0
    %3385 = vmatpush2.msra.mxu0 0.0
    %3386 = vmatprep.subr.mxu0 0.0
    %3387 = vmatpush2.msra.mxu0 0.0
    %3388 = vmatprep.subr.mxu0 0.0
    %3389 = vmatpush2.msra.mxu0 0.0
    %3390 = vmatprep.mubr.f32.mxu0 0.0
    %3391 = vmatmul.mubr.f32.gmra.mxu0 %v3321
    %v3392 = vpop.f32.mrf.mxu0
    %v3393 = vadd.f32 %v3318, %v3392
    %v3394 = vpop.f32.mrf.mxu0
    %3395 = vmatprep.mubr.f32.mxu0 0.0
    %3396 = vmatmul.mubr.f32.gmra.mxu0 %v3324
    %v3397 = vpop.f32.mrf.mxu0
    %v3398 = vadd.f32 %v3318, %v3397
    %v3399 = vpop.f32.mrf.mxu0
    %3400 = vdwg.mxu0
    %v3401 = vadd.f32 %v2691, %v3393
    %v3402 = vadd.f32 %v2692, %v3398
    %v3403 = vsel %vm973, %v3401, 0.0
    %3404 = vadd.xlane.f32.xlu0 %v3403
    %v3405 = vpop.xlane.xlu0 %3404
    %v3406 = vsel %vm2651, %v3402, 0.0
    %3407 = vadd.xlane.f32.xlu0 %v3406
    %v3408 = vpop.xlane.xlu0 %3407
    %v3409 = vmul.f32 %v3405, %v1667
    %v3410 = vmul.f32 %v3408, %v1667
    %v3411 = vsub.f32 %v3401, %v3409
    %v3412 = vsub.f32 %v3402, %v3410
    %v3413 = vmul.f32 %v3411, %v3411
    %v3414 = vmul.f32 %v3412, %v3412
    %v3415 = vsel %vm973, %v3413, 0.0
    %3416 = vadd.xlane.f32.xlu0 %v3415
    %v3417 = vpop.xlane.xlu0 %3416
    %v3418 = vsel %vm2651, %v3414, 0.0
    %3419 = vadd.xlane.f32.xlu0 %v3418
    %v3420 = vpop.xlane.xlu0 %3419
    %v3421 = vmul.f32 %v3417, %v1667
    %v3422 = vmul.f32 %v3420, %v1667
    %v3423 = vadd.f32 %v3421, 1e-05
    %v3424 = vadd.f32 %v3422, 1e-05
    %v3425 = vrsqrt.pop %v3423
    %v3426 = vrsqrt.pop %v3424
    %v3427 = vmul.f32 %v3411, %v3425
    %v3428 = vmul.f32 %v3412, %v3426
    %v3429 = vld [vmem:[%s4 + $0x13] sm:$0x1]
    %v3431 = vlaneseq
    %v3432 = vshrl.u32 %v3431, 7
    %v3433 = vsub.s32 0, %v3432
    %v3434 = vrot.slane %v3429, %v3433
    %v3436 = vmul.f32 %v3427, %v3434
    %v3437 = vmul.f32 %v3428, %v3434
    %v3438 = vld [vmem:[%s4 + $0x14] sm:$0x1]
    %v3440 = vlaneseq
    %v3441 = vshrl.u32 %v3440, 7
    %v3442 = vsub.s32 0, %v3441
    %v3443 = vrot.slane %v3438, %v3442
    %v3445 = vadd.f32 %v3436, %v3443
    %v3446 = vadd.f32 %v3437, %v3443
    %v3447 = vld [vmem:[#allocation2 + $0x40] sm:$0xff]
    %v3448 = vld [vmem:[#allocation2 + $0x90] sm:$0xff]
    %v3449 = vld [vmem:[#allocation2 + $0xe0] sm:$0xff]
    %v3450 = vld [vmem:[#allocation2 + $0x130] sm:$0xff]
    %v3451 = vld [vmem:[%s4 + $0xf] sm:$0x1]
    %v3453 = vlaneseq
    %v3454 = vshrl.u32 %v3453, 7
    %v3455 = vsub.s32 0, %v3454
    %v3456 = vrot.slane %v3451, %v3455
    %v3459 = vsel %vm973, %v3445, 0
    %v3462 = vsel %vm973, %v3446, 0
    %3464 = vmatprep.subr.mxu0 0.0
    %3465 = vmatpush1.msra.mxu0 0.0
    %3466 = vmatprep.subr.mxu0 0.0
    %3467 = vmatpush1.msra.mxu0 0.0
    %3468 = vmatprep.subr.mxu0 0.0
    %3469 = vmatpush1.msra.mxu0 0.0
    %3470 = vmatprep.subr.mxu0 0.0
    %3471 = vmatpush1.msra.mxu0 0.0
    %3472 = vmatprep.subr.mxu0 0.0
    %3473 = vmatpush1.msra.mxu0 0.0
    %3474 = vmatprep.subr.mxu0 0.0
    %3475 = vmatpush1.msra.mxu0 0.0
    %3476 = vmatprep.subr.mxu0 0.0
    %3477 = vmatpush1.msra.mxu0 0.0
    %3478 = vmatprep.subr.mxu0 0.0
    %3479 = vmatpush1.msra.mxu0 0.0
    %3480 = vmatprep.subr.mxu0 0.0
    %3481 = vmatpush1.msra.mxu0 0.0
    %3482 = vmatprep.subr.mxu0 0.0
    %3483 = vmatpush1.msra.mxu0 0.0
    %3484 = vmatprep.subr.mxu0 0.0
    %3485 = vmatpush1.msra.mxu0 0.0
    %3486 = vmatprep.subr.mxu0 0.0
    %3487 = vmatpush1.msra.mxu0 0.0
    %3488 = vmatprep.subr.mxu0 0.0
    %3489 = vmatpush1.msra.mxu0 %v3450
    %3490 = vmatprep.subr.mxu0 0.0
    %3491 = vmatpush1.msra.mxu0 %v3449
    %3492 = vmatprep.subr.mxu0 0.0
    %3493 = vmatpush1.msra.mxu0 %v3448
    %3494 = vmatprep.subr.mxu0 0.0
    %3495 = vmatpush1.msra.mxu0 %v3447
    %3496 = vmatprep.subr.mxu0 0.0
    %3497 = vmatpush2.msra.mxu0 0.0
    %3498 = vmatprep.subr.mxu0 0.0
    %3499 = vmatpush2.msra.mxu0 0.0
    %3500 = vmatprep.subr.mxu0 0.0
    %3501 = vmatpush2.msra.mxu0 0.0
    %3502 = vmatprep.subr.mxu0 0.0
    %3503 = vmatpush2.msra.mxu0 0.0
    %3504 = vmatprep.subr.mxu0 0.0
    %3505 = vmatpush2.msra.mxu0 0.0
    %3506 = vmatprep.subr.mxu0 0.0
    %3507 = vmatpush2.msra.mxu0 0.0
    %3508 = vmatprep.subr.mxu0 0.0
    %3509 = vmatpush2.msra.mxu0 0.0
    %3510 = vmatprep.subr.mxu0 0.0
    %3511 = vmatpush2.msra.mxu0 0.0
    %3512 = vmatprep.subr.mxu0 0.0
    %3513 = vmatpush2.msra.mxu0 0.0
    %3514 = vmatprep.subr.mxu0 0.0
    %3515 = vmatpush2.msra.mxu0 0.0
    %3516 = vmatprep.subr.mxu0 0.0
    %3517 = vmatpush2.msra.mxu0 0.0
    %3518 = vmatprep.subr.mxu0 0.0
    %3519 = vmatpush2.msra.mxu0 0.0
    %3520 = vmatprep.subr.mxu0 0.0
    %3521 = vmatpush2.msra.mxu0 0.0
    %3522 = vmatprep.subr.mxu0 0.0
    %3523 = vmatpush2.msra.mxu0 0.0
    %3524 = vmatprep.subr.mxu0 0.0
    %3525 = vmatpush2.msra.mxu0 0.0
    %3526 = vmatprep.subr.mxu0 0.0
    %3527 = vmatpush2.msra.mxu0 0.0
    %3528 = vmatprep.mubr.f32.mxu0 0.0
    %3529 = vmatmul.mubr.f32.gmra.mxu0 %v3459
    %v3530 = vpop.f32.mrf.mxu0
    %v3531 = vadd.f32 %v3456, %v3530
    %v3532 = vpop.f32.mrf.mxu0
    %3533 = vmatprep.mubr.f32.mxu0 0.0
    %3534 = vmatmul.mubr.f32.gmra.mxu0 %v3462
    %v3535 = vpop.f32.mrf.mxu0
    %v3536 = vadd.f32 %v3456, %v3535
    %v3537 = vpop.f32.mrf.mxu0
    %3538 = vdwg.mxu0
    %v3539 = vmax.f32 %v3531, 0.0
    %v3540 = vmax.f32 %v3536, 0.0
    %v3541 = vld [vmem:[#allocation4 + $0x18] sm:$0xff]
    %v3542 = vld [vmem:[#allocation4 + $0x38] sm:$0xff]
    %v3543 = vld [vmem:[#allocation4 + $0x58] sm:$0xff]
    %v3544 = vld [vmem:[#allocation4 + $0x78] sm:$0xff]
    %v3545 = vld [vmem:[#allocation4 + $0x98] sm:$0xff]
    %v3546 = vld [vmem:[#allocation4 + $0xb8] sm:$0xff]
    %v3547 = vld [vmem:[#allocation4 + $0xd8] sm:$0xff]
    %v3548 = vld [vmem:[#allocation4 + $0xf8] sm:$0xff]
    %v3549 = vld [vmem:[%s4 + $0x10] sm:$0x1]
    %v3551 = vlaneseq
    %v3552 = vshrl.u32 %v3551, 7
    %v3553 = vsub.s32 0, %v3552
    %v3554 = vrot.slane %v3549, %v3553
    %v3557 = vsel %vm78, %v3539, 0
    %v3560 = vsel %vm78, %v3540, 0
    %3562 = vmatprep.subr.mxu0 0.0
    %3563 = vmatpush1.msra.mxu0 0.0
    %3564 = vmatprep.subr.mxu0 0.0
    %3565 = vmatpush1.msra.mxu0 0.0
    %3566 = vmatprep.subr.mxu0 0.0
    %3567 = vmatpush1.msra.mxu0 0.0
    %3568 = vmatprep.subr.mxu0 0.0
    %3569 = vmatpush1.msra.mxu0 0.0
    %3570 = vmatprep.subr.mxu0 0.0
    %3571 = vmatpush1.msra.mxu0 0.0
    %3572 = vmatprep.subr.mxu0 0.0
    %3573 = vmatpush1.msra.mxu0 0.0
    %3574 = vmatprep.subr.mxu0 0.0
    %3575 = vmatpush1.msra.mxu0 0.0
    %3576 = vmatprep.subr.mxu0 0.0
    %3577 = vmatpush1.msra.mxu0 0.0
    %3578 = vmatprep.subr.mxu0 0.0
    %3579 = vmatpush1.msra.mxu0 %v3548
    %3580 = vmatprep.subr.mxu0 0.0
    %3581 = vmatpush1.msra.mxu0 %v3547
    %3582 = vmatprep.subr.mxu0 0.0
    %3583 = vmatpush1.msra.mxu0 %v3546
    %3584 = vmatprep.subr.mxu0 0.0
    %3585 = vmatpush1.msra.mxu0 %v3545
    %3586 = vmatprep.subr.mxu0 0.0
    %3587 = vmatpush1.msra.mxu0 %v3544
    %3588 = vmatprep.subr.mxu0 0.0
    %3589 = vmatpush1.msra.mxu0 %v3543
    %3590 = vmatprep.subr.mxu0 0.0
    %3591 = vmatpush1.msra.mxu0 %v3542
    %3592 = vmatprep.subr.mxu0 0.0
    %3593 = vmatpush1.msra.mxu0 %v3541
    %3594 = vmatprep.subr.mxu0 0.0
    %3595 = vmatpush2.msra.mxu0 0.0
    %3596 = vmatprep.subr.mxu0 0.0
    %3597 = vmatpush2.msra.mxu0 0.0
    %3598 = vmatprep.subr.mxu0 0.0
    %3599 = vmatpush2.msra.mxu0 0.0
    %3600 = vmatprep.subr.mxu0 0.0
    %3601 = vmatpush2.msra.mxu0 0.0
    %3602 = vmatprep.subr.mxu0 0.0
    %3603 = vmatpush2.msra.mxu0 0.0
    %3604 = vmatprep.subr.mxu0 0.0
    %3605 = vmatpush2.msra.mxu0 0.0
    %3606 = vmatprep.subr.mxu0 0.0
    %3607 = vmatpush2.msra.mxu0 0.0
    %3608 = vmatprep.subr.mxu0 0.0
    %3609 = vmatpush2.msra.mxu0 0.0
    %3610 = vmatprep.subr.mxu0 0.0
    %3611 = vmatpush2.msra.mxu0 0.0
    %3612 = vmatprep.subr.mxu0 0.0
    %3613 = vmatpush2.msra.mxu0 0.0
    %3614 = vmatprep.subr.mxu0 0.0
    %3615 = vmatpush2.msra.mxu0 0.0
    %3616 = vmatprep.subr.mxu0 0.0
    %3617 = vmatpush2.msra.mxu0 0.0
    %3618 = vmatprep.subr.mxu0 0.0
    %3619 = vmatpush2.msra.mxu0 0.0
    %3620 = vmatprep.subr.mxu0 0.0
    %3621 = vmatpush2.msra.mxu0 0.0
    %3622 = vmatprep.subr.mxu0 0.0
    %3623 = vmatpush2.msra.mxu0 0.0
    %3624 = vmatprep.subr.mxu0 0.0
    %3625 = vmatpush2.msra.mxu0 0.0
    %3626 = vmatprep.mubr.f32.mxu0 0.0
    %3627 = vmatmul.mubr.f32.gmra.mxu0 %v3557
    %v3628 = vpop.f32.mrf.mxu0
    %v3629 = vadd.f32 %v3554, %v3628
    %v3630 = vpop.f32.mrf.mxu0
    %3631 = vmatprep.mubr.f32.mxu0 0.0
    %3632 = vmatmul.mubr.f32.gmra.mxu0 %v3560
    %v3633 = vpop.f32.mrf.mxu0
    %v3634 = vadd.f32 %v3554, %v3633
    %v3635 = vpop.f32.mrf.mxu0
    %3636 = vdwg.mxu0
    %v3637 = vadd.f32 %v3445, %v3629
    %v3638 = vadd.f32 %v3446, %v3634
    %v3639 = vsel %vm973, %v3637, 0.0
    %3640 = vadd.xlane.f32.xlu0 %v3639
    %v3641 = vpop.xlane.xlu0 %3640
    %v3642 = vsel %vm2651, %v3638, 0.0
    %3643 = vadd.xlane.f32.xlu0 %v3642
    %v3644 = vpop.xlane.xlu0 %3643
    %v3645 = vmul.f32 %v3641, %v1667
    %v3646 = vmul.f32 %v3644, %v1667
    %v3647 = vsub.f32 %v3637, %v3645
    %v3648 = vsub.f32 %v3638, %v3646
    %v3649 = vmul.f32 %v3647, %v3647
    %v3650 = vmul.f32 %v3648, %v3648
    %v3651 = vsel %vm973, %v3649, 0.0
    %3652 = vadd.xlane.f32.xlu0 %v3651
    %v3653 = vpop.xlane.xlu0 %3652
    %v3654 = vsel %vm2651, %v3650, 0.0
    %3655 = vadd.xlane.f32.xlu0 %v3654
    %v3656 = vpop.xlane.xlu0 %3655
    %v3657 = vmul.f32 %v3653, %v1667
    %v3658 = vmul.f32 %v3656, %v1667
    %v3659 = vadd.f32 %v3657, 1e-05
    %v3660 = vadd.f32 %v3658, 1e-05
    %v3661 = vrsqrt.pop %v3659
    %v3662 = vrsqrt.pop %v3660
    %v3663 = vmul.f32 %v3647, %v3661
    %v3664 = vmul.f32 %v3648, %v3662
    %v3665 = vld [vmem:[%s4 + $0x15] sm:$0x1]
    %v3667 = vlaneseq
    %v3668 = vshrl.u32 %v3667, 7
    %v3669 = vsub.s32 0, %v3668
    %v3670 = vrot.slane %v3665, %v3669
    %v3672 = vmul.f32 %v3663, %v3670
    %v3673 = vmul.f32 %v3664, %v3670
    %v3674 = vld [vmem:[%s4 + $0x16] sm:$0x1]
    %v3676 = vlaneseq
    %v3677 = vshrl.u32 %v3676, 7
    %v3678 = vsub.s32 0, %v3677
    %v3679 = vrot.slane %v3674, %v3678
    %v3681 = vadd.f32 %v3672, %v3679
    %v3682 = vadd.f32 %v3673, %v3679
    %v3683 = vsel %vm973, %v3681, 0.0
    %3684 = vadd.xlane.f32.xlu0 %v3683
    %v3685 = vpop.xlane.xlu0 %3684
    %v3686 = vsel %vm2651, %v3682, 0.0
    %3687 = vadd.xlane.f32.xlu0 %v3686
    %v3688 = vpop.xlane.xlu0 %3687
    %v3689 = vmul.f32 %v3685, %v1667
    %v3690 = vmul.f32 %v3688, %v1667
    %v3691 = vsub.f32 %v3681, %v3689
    %v3692 = vsub.f32 %v3682, %v3690
    %v3693 = vmul.f32 %v3691, %v3691
    %v3694 = vmul.f32 %v3692, %v3692
    %v3695 = vsel %vm973, %v3693, 0.0
    %3696 = vadd.xlane.f32.xlu0 %v3695
    %v3697 = vpop.xlane.xlu0 %3696
    %v3698 = vsel %vm2651, %v3694, 0.0
    %3699 = vadd.xlane.f32.xlu0 %v3698
    %v3700 = vpop.xlane.xlu0 %3699
    %v3701 = vmul.f32 %v3697, %v1667
    %v3702 = vmul.f32 %v3700, %v1667
    %v3703 = vadd.f32 %v3701, 1e-05
    %v3704 = vadd.f32 %v3702, 1e-05
    %v3705 = vrsqrt.pop %v3703
    %v3706 = vrsqrt.pop %v3704
    %v3707 = vmul.f32 %v3691, %v3705
    %v3708 = vmul.f32 %v3692, %v3706
    %v3709 = vld [vmem:[%s4 + $0x17] sm:$0x1]
    %v3711 = vlaneseq
    %v3712 = vshrl.u32 %v3711, 7
    %v3713 = vsub.s32 0, %v3712
    %v3714 = vrot.slane %v3709, %v3713
    %v3716 = vmul.f32 %v3707, %v3714
    %v3717 = vmul.f32 %v3708, %v3714
    %v3718 = vld [vmem:[%s4 + $0x18] sm:$0x1]
    %v3720 = vlaneseq
    %v3721 = vshrl.u32 %v3720, 7
    %v3722 = vsub.s32 0, %v3721
    %v3723 = vrot.slane %v3718, %v3722
    %v3725 = vadd.f32 %v3716, %v3723
    %v3726 = vadd.f32 %v3717, %v3723
    %v3727 = vld [vmem:[#allocation2 + $0x48] sm:$0xff]
    %v3728 = vld [vmem:[#allocation2 + $0x98] sm:$0xff]
    %v3729 = vld [vmem:[#allocation2 + $0xe8] sm:$0xff]
    %v3730 = vld [vmem:[#allocation2 + $0x138] sm:$0xff]
    %v3731 = vld [vmem:[%s4 + $0x19] sm:$0x1]
    %v3733 = vlaneseq
    %v3734 = vshrl.u32 %v3733, 7
    %v3735 = vsub.s32 0, %v3734
    %v3736 = vrot.slane %v3731, %v3735
    %v3739 = vsel %vm973, %v3725, 0
    %v3742 = vsel %vm973, %v3726, 0
    %3744 = vmatprep.subr.mxu0 0.0
    %3745 = vmatpush1.msra.mxu0 0.0
    %3746 = vmatprep.subr.mxu0 0.0
    %3747 = vmatpush1.msra.mxu0 0.0
    %3748 = vmatprep.subr.mxu0 0.0
    %3749 = vmatpush1.msra.mxu0 0.0
    %3750 = vmatprep.subr.mxu0 0.0
    %3751 = vmatpush1.msra.mxu0 0.0
    %3752 = vmatprep.subr.mxu0 0.0
    %3753 = vmatpush1.msra.mxu0 0.0
    %3754 = vmatprep.subr.mxu0 0.0
    %3755 = vmatpush1.msra.mxu0 0.0
    %3756 = vmatprep.subr.mxu0 0.0
    %3757 = vmatpush1.msra.mxu0 0.0
    %3758 = vmatprep.subr.mxu0 0.0
    %3759 = vmatpush1.msra.mxu0 0.0
    %3760 = vmatprep.subr.mxu0 0.0
    %3761 = vmatpush1.msra.mxu0 0.0
    %3762 = vmatprep.subr.mxu0 0.0
    %3763 = vmatpush1.msra.mxu0 0.0
    %3764 = vmatprep.subr.mxu0 0.0
    %3765 = vmatpush1.msra.mxu0 0.0
    %3766 = vmatprep.subr.mxu0 0.0
    %3767 = vmatpush1.msra.mxu0 0.0
    %3768 = vmatprep.subr.mxu0 0.0
    %3769 = vmatpush1.msra.mxu0 %v3730
    %3770 = vmatprep.subr.mxu0 0.0
    %3771 = vmatpush1.msra.mxu0 %v3729
    %3772 = vmatprep.subr.mxu0 0.0
    %3773 = vmatpush1.msra.mxu0 %v3728
    %3774 = vmatprep.subr.mxu0 0.0
    %3775 = vmatpush1.msra.mxu0 %v3727
    %3776 = vmatprep.subr.mxu0 0.0
    %3777 = vmatpush2.msra.mxu0 0.0
    %3778 = vmatprep.subr.mxu0 0.0
    %3779 = vmatpush2.msra.mxu0 0.0
    %3780 = vmatprep.subr.mxu0 0.0
    %3781 = vmatpush2.msra.mxu0 0.0
    %3782 = vmatprep.subr.mxu0 0.0
    %3783 = vmatpush2.msra.mxu0 0.0
    %3784 = vmatprep.subr.mxu0 0.0
    %3785 = vmatpush2.msra.mxu0 0.0
    %3786 = vmatprep.subr.mxu0 0.0
    %3787 = vmatpush2.msra.mxu0 0.0
    %3788 = vmatprep.subr.mxu0 0.0
    %3789 = vmatpush2.msra.mxu0 0.0
    %3790 = vmatprep.subr.mxu0 0.0
    %3791 = vmatpush2.msra.mxu0 0.0
    %3792 = vmatprep.subr.mxu0 0.0
    %3793 = vmatpush2.msra.mxu0 0.0
    %3794 = vmatprep.subr.mxu0 0.0
    %3795 = vmatpush2.msra.mxu0 0.0
    %3796 = vmatprep.subr.mxu0 0.0
    %3797 = vmatpush2.msra.mxu0 0.0
    %3798 = vmatprep.subr.mxu0 0.0
    %3799 = vmatpush2.msra.mxu0 0.0
    %3800 = vmatprep.subr.mxu0 0.0
    %3801 = vmatpush2.msra.mxu0 0.0
    %3802 = vmatprep.subr.mxu0 0.0
    %3803 = vmatpush2.msra.mxu0 0.0
    %3804 = vmatprep.subr.mxu0 0.0
    %3805 = vmatpush2.msra.mxu0 0.0
    %3806 = vmatprep.subr.mxu0 0.0
    %3807 = vmatpush2.msra.mxu0 0.0
    %3808 = vmatprep.mubr.f32.mxu0 0.0
    %3809 = vmatmul.mubr.f32.gmra.mxu0 %v3739
    %v3810 = vpop.f32.mrf.mxu0
    %v3811 = vadd.f32 %v3736, %v3810
    %v3812 = vpop.f32.mrf.mxu0
    %3813 = vmatprep.mubr.f32.mxu0 0.0
    %3814 = vmatmul.mubr.f32.gmra.mxu0 %v3742
    %v3815 = vpop.f32.mrf.mxu0
    %v3816 = vadd.f32 %v3736, %v3815
    %v3817 = vpop.f32.mrf.mxu0
    %3818 = vdwg.mxu0
    %vm3819 = vcmask 39936
    %3820 = vst.msk [vmem:[%s8] sm:$0xff] %vm3819, %v3811
    %vm3821 = vcmask 33792
    %3822 = vst.msk [vmem:[%s8 + $0x8] sm:$0x3] %vm3821, %v3816
    // Predicated region
    $region38: #{combined_model_forward.1} parent=1 // pred_check
      _
    $region39: #{combined_model_forward.1} parent=1 // pred_check_branch
      %3824 = sbr.rel (0) target = $region41
    $region40: #{combined_model_forward.1} parent=1 // pred_region
      _
    $region41: #{combined_model_forward.1} parent=1 // pred_fallthru
      _
    // Predicated region
    $region42: #{combined_model_forward.1} parent=1 // pred_check
      _
    $region43: #{combined_model_forward.1} parent=1 // pred_check_branch
      %3826 = sbr.rel (0) target = $region45
    $region44: #{combined_model_forward.1} parent=1 // pred_region
      _
    $region45: #{combined_model_forward.1} parent=1 // pred_fallthru
      _
    // Predicated region
    $region46: #{combined_model_forward.1} parent=1 // pred_check
      _
    $region47: #{combined_model_forward.1} parent=1 // pred_check_branch
      %3828 = sbr.rel (0) target = $region49
    $region48: #{combined_model_forward.1} parent=1 // pred_region
      _
    $region49: #{combined_model_forward.1} parent=1 // pred_fallthru
      _
    // Predicated region
    $region50: #{combined_model_forward.1} parent=1 // pred_check
      _
    $region51: #{combined_model_forward.1} parent=1 // pred_check_branch
      %3830 = sbr.rel (0) target = $region53
    $region52: #{combined_model_forward.1} parent=1 // pred_region
      _
    $region53: #{combined_model_forward.1} parent=1 // pred_fallthru
      _
    // Predicated region
    $region54: #{combined_model_forward.1} parent=1 // pred_check
      _
    $region55: #{combined_model_forward.1} parent=1 // pred_check_branch
      %3832 = sbr.rel (0) target = $region57
    $region56: #{combined_model_forward.1} parent=1 // pred_region
      _
    $region57: #{combined_model_forward.1} parent=1 // pred_fallthru
      _
    // Predicated region
    $region58: #{combined_model_forward.1} parent=1 // pred_check
      _
    $region59: #{combined_model_forward.1} parent=1 // pred_check_branch
      %3834 = sbr.rel (0) target = $region61
    $region60: #{combined_model_forward.1} parent=1 // pred_region
      _
    $region61: #{combined_model_forward.1} parent=1 // pred_fallthru
      _
    %3835 = vsyncpa [#allocation3], 1
    %3836 = vsyncpa [#allocation5], 1

</llo_original>
